<compile_context>
chip_gen: v6e
topology: v6e:2x2x1
jax: 0.10.0
libtpu: 0.0.40
codegen_flags: <defaults>
</compile_context>

<pallas_src>
import functools

import jax
import jax.numpy as jnp
from jax.experimental import pallas as pl
from jax.experimental.pallas import tpu as pltpu


# --------------------------------------------------------------------------------------
# Fused Pallas kernel: entire NNConvNet forward in one invocation
# --------------------------------------------------------------------------------------
def _fused_nnconvnet_kernel(*refs):
    """Positional refs (inputs then outputs):

      [0:7]         x, edge_attr, src_idx[E,1], tgt_idx[1,E], batch_idx[1,N],
                    deg[N,1], cnt[G,1]
      [7:7+8L]      per layer: enn_w1(bf16), enn_b1, w2_flat(bf16), b2_mat,
                               root_w(bf16), bias, bn_scale, bn_shift
      [7+8L:11+8L]  mlp_w1(bf16), mlp_b1, mlp_w2(bf16), mlp_b2
      [-2:]         logits_out, pooled_out
    """
    num_layers = (len(refs) - 13) // 8
    x_ref, ea_ref, src_ref, tgt_ref, batch_ref, deg_ref, cnt_ref = refs[:7]
    (mlp_w1_ref, mlp_b1_ref, mlp_w2_ref,
     mlp_b2_ref) = refs[7 + 8 * num_layers:11 + 8 * num_layers]
    logits_ref, pooled_ref = refs[-2:]

    f32, bf16 = jnp.float32, jnp.bfloat16
    N = x_ref.shape[0]
    E = ea_ref.shape[0]
    G = cnt_ref.shape[0]

    # Exact 0/1 gather / scatter-sum / pool-sum operators, built in VMEM from int32
    # index vectors (no HBM materialization, exact numerics vs. bf16-rounded 1/deg).
    src_oh = jnp.where(
        src_ref[...] == jax.lax.broadcasted_iota(jnp.int32, (E, N), 1),
        1.0, 0.0).astype(bf16)                                         # [E, N]
    tgt_sum = jnp.where(
        jax.lax.broadcasted_iota(jnp.int32, (N, E), 0) == tgt_ref[...],
        1.0, 0.0).astype(bf16)                                         # [N, E]
    pool_sum = jnp.where(
        jax.lax.broadcasted_iota(jnp.int32, (G, N), 0) == batch_ref[...],
        1.0, 0.0).astype(bf16)                                         # [G, N]

    # mean = sum * 1/deg ; reciprocal goes to the EUP slot (effectively free).
    inv_deg = pl.reciprocal(deg_ref[...], approx=True)                 # [N, 1]
    inv_cnt = pl.reciprocal(cnt_ref[...], approx=True)                 # [G, 1]

    ea_b = ea_ref[...].astype(bf16)          # [E, edge_dim] MXU operand
    h = x_ref[...].astype(f32)               # [N, cin] node features (f32 VPU math)

    for l in range(num_layers):              # num_layers static -> Python unroll
        (w1_ref, b1_ref, w2f_ref, b2_ref,
         root_ref, bias_ref, scale_ref, shift_ref) = refs[7 + 8 * l:7 + 8 * (l + 1)]
        cin = root_ref.shape[0]
        K = w1_ref.shape[1]                  # hidden_dim_edge_nn

        # edge network: Linear -> ReLU   (bf16 matmul, f32 accumulate + f32 epilogue)
        hid_e = jnp.dot(ea_b, w1_ref[...], preferred_element_type=f32) + b1_ref[...]
        hid_e = jnp.maximum(hid_e, 0.0)                                # [E, K]

        # gather source-node features via one-hot matmul: xj = h[src]  -> [E, cin]
        h_b = h.astype(bf16)
        xj = jnp.dot(src_oh, h_b, preferred_element_type=f32)

        # bilinear message (one matmul, contraction cin*K):
        #   msg[e,o] = sum_{c,k} xj[e,c] * hid_e[e,k] * W2f[c*K+k, o] + sum_c xj[e,c]*B2[c,o]
        z = (xj[:, :, None] * hid_e[:, None, :]).reshape(E, cin * K)   # [E, cin*K] f32
        msg = jnp.dot(z.astype(bf16), w2f_ref[...], preferred_element_type=f32)
        msg = msg + jnp.dot(xj, b2_ref[...], preferred_element_type=f32)   # [E, cout]

        # fused: scatter-sum + mean (EUP recip) + root + bias + BN(affine) + ReLU
        agg = jnp.dot(tgt_sum, msg.astype(bf16), preferred_element_type=f32) * inv_deg
        root = jnp.dot(h_b, root_ref[...], preferred_element_type=f32)
        y = agg + root + bias_ref[...]
        y = y * scale_ref[...] + shift_ref[...]
        h = jnp.maximum(y, 0.0)                                        # [N, cout] f32

    # global mean pool (sum one-hot matmul * 1/cnt), then MLP head (Dropout = identity)
    pooled = jnp.dot(pool_sum, h.astype(bf16), preferred_element_type=f32) * inv_cnt
    pooled_ref[...] = pooled                                           # [G, cout]

    hid = jnp.dot(pooled.astype(bf16), mlp_w1_ref[...],
                  preferred_element_type=f32) + mlp_b1_ref[...]
    hid = jnp.maximum(hid, 0.0)
    logits = jnp.dot(hid.astype(bf16), mlp_w2_ref[...],
                     preferred_element_type=f32) + mlp_b2_ref[...]
    logits_ref[...] = logits


# --------------------------------------------------------------------------------------
# Parameter init (deterministic, synthetic; BN affine folded; MXU weights pre-cast bf16)
# --------------------------------------------------------------------------------------
def _init_lin(key, fan_in, fan_out):
    kw, kb = jax.random.split(key)
    w = jax.random.normal(kw, (fan_in, fan_out), jnp.float32) / jnp.sqrt(float(fan_in))
    b = 0.01 * jax.random.normal(kb, (1, fan_out), jnp.float32)
    return w, b


def init_params(key, node_in, edge_dim, out_gnn, hid_edge, mlp_hidden, out_final,
                num_layers, eps=1e-5):
    bf16 = jnp.bfloat16
    params = {"convs": []}
    cur = node_in
    for _ in range(num_layers):
        key, k1, k2, k3, k4 = jax.random.split(key, 5)
        enn_w1, enn_b1 = _init_lin(k1, edge_dim, hid_edge)
        enn_w2, enn_b2 = _init_lin(k2, hid_edge, cur * out_gnn)
        # W2_flat[c*hid + k, o] = enn_w2[k, c*out_gnn + o]
        # (flat index c*cout + o matches PyG NNConv's view(-1, cin, cout))
        w2_flat = (enn_w2.reshape(hid_edge, cur, out_gnn)
                   .transpose(1, 0, 2).reshape(cur * hid_edge, out_gnn))
        b2_mat = enn_b2.reshape(cur, out_gnn)
        root_w = jax.random.normal(k3, (cur, out_gnn), jnp.float32) / jnp.sqrt(float(cur))
        bias = 0.01 * jax.random.normal(k4, (1, out_gnn), jnp.float32)
        # eval-mode BatchNorm folded into one affine (scale, shift) at init time
        gamma = jnp.ones((1, out_gnn), jnp.float32)
        beta = jnp.zeros((1, out_gnn), jnp.float32)
        run_mean = jnp.zeros((1, out_gnn), jnp.float32)
        run_var = jnp.ones((1, out_gnn), jnp.float32)
        scale = gamma / jnp.sqrt(run_var + eps)
        shift = beta - run_mean * scale
        params["convs"].append(dict(
            enn_w1=enn_w1.astype(bf16), enn_b1=enn_b1,
            w2_flat=w2_flat.astype(bf16), b2_mat=b2_mat,
            root_w=root_w.astype(bf16), bias=bias, scale=scale, shift=shift))
        cur = out_gnn
    key, k5, k6 = jax.random.split(key, 3)
    mlp_w1, params["mlp_b1"] = _init_lin(k5, out_gnn, mlp_hidden)
    mlp_w2, params["mlp_b2"] = _init_lin(k6, mlp_hidden, out_final)
    params["mlp_w1"] = mlp_w1.astype(bf16)
    params["mlp_w2"] = mlp_w2.astype(bf16)
    return params


# --------------------------------------------------------------------------------------
# Forward pass wrapper: JAX glue only prepares O(E)/O(N) index & degree vectors,
# one pallas_call does all the compute.
# --------------------------------------------------------------------------------------
@functools.partial(jax.jit, static_argnames=("num_graphs",))
def nnconvnet_forward(params, x, edge_index, edge_attr, batch, num_graphs):
    N = x.shape[0]
    src = edge_index[0].astype(jnp.int32)      # message source j
    tgt = edge_index[1].astype(jnp.int32)      # aggregation target i
    batch_i = batch.astype(jnp.int32)

    # exact f32 degree / graph-size counts (clamped; isolated nodes -> agg = 0)
    deg = jnp.maximum(jnp.zeros((N,), jnp.float32).at[tgt].add(1.0), 1.0)[:, None]
    cnt = jnp.maximum(jnp.zeros((num_graphs,), jnp.float32).at[batch_i].add(1.0),
                      1.0)[:, None]

    args = [x.astype(jnp.float32), edge_attr.astype(jnp.float32),
            src[:, None], tgt[None, :], batch_i[None, :], deg, cnt]
    for lp in params["convs"]:
        args += [lp["enn_w1"], lp["enn_b1"], lp["w2_flat"], lp["b2_mat"],
                 lp["root_w"], lp["bias"], lp["scale"], lp["shift"]]
    args += [params["mlp_w1"], params["mlp_b1"], params["mlp_w2"], params["mlp_b2"]]

    out_gnn = params["convs"][-1]["root_w"].shape[1]
    out_final = params["mlp_w2"].shape[1]
    vmem = pltpu.MemorySpace.VMEM

    logits, pooled = pl.pallas_call(
        _fused_nnconvnet_kernel,
        in_specs=[pl.BlockSpec(memory_space=vmem) for _ in args],
        out_specs=(pl.BlockSpec(memory_space=vmem),
                   pl.BlockSpec(memory_space=vmem)),
        out_shape=(jax.ShapeDtypeStruct((num_graphs, out_final), jnp.float32),
                   jax.ShapeDtypeStruct((num_graphs, out_gnn), jnp.float32)),
        # Explicit scoped-VMEM budget: same value is safe on v5e/v6e (128 MiB phys)
        # and v7x (64 MiB phys).
        compiler_params=pltpu.CompilerParams(vmem_limit_bytes=32 * 1024 * 1024),
        # TODO(synk): at larger N/E, add an edge-tile grid ("arbitrary") plus a leading
        #             "parallel" node/graph axis via dimension_semantics so v7x's two
        #             TensorCores both get work, with blocked in_specs for pipelining.
    )(*args)
    return logits, pooled


# --------------------------------------------------------------------------------------
if __name__ == "__main__":
    # hyperparameters (small, consistent with the module's __init__)
    NODE_IN, EDGE_DIM, OUT_GNN = 4, 6, 8
    HID_EDGE, MLP_FACTOR, OUT_FINAL, NUM_LAYERS = 16, 2.0, 3, 2
    MLP_HIDDEN = int(OUT_GNN * MLP_FACTOR)

    N_NODES, N_EDGES, N_GRAPHS = 16, 32, 2

    key = jax.random.PRNGKey(0)
    key, kx, ks, kt, ke = jax.random.split(key, 5)

    x = jax.random.normal(kx, (N_NODES, NODE_IN), jnp.float32)
    src = jax.random.randint(ks, (N_EDGES,), 0, N_NODES, jnp.int32)
    tgt = jax.random.randint(kt, (N_EDGES,), 0, N_NODES, jnp.int32)
    edge_index = jnp.stack([src, tgt], axis=0)                    # [2, E]
    edge_attr = jax.random.normal(ke, (N_EDGES, EDGE_DIM), jnp.float32)
    batch = jnp.concatenate([jnp.zeros((N_NODES // 2,), jnp.int32),
                             jnp.ones((N_NODES - N_NODES // 2,), jnp.int32)])

    params = init_params(jax.random.PRNGKey(42), NODE_IN, EDGE_DIM, OUT_GNN,
                         HID_EDGE, MLP_HIDDEN, OUT_FINAL, NUM_LAYERS)

    logits, embeddings = nnconvnet_forward(params, x, edge_index, edge_attr,
                                           batch, num_graphs=N_GRAPHS)
    jax.block_until_ready((logits, embeddings))

    assert logits.shape == (N_GRAPHS, OUT_FINAL)
    assert embeddings.shape == (N_GRAPHS, OUT_GNN)
    assert bool(jnp.all(jnp.isfinite(logits)))
    assert bool(jnp.all(jnp.isfinite(embeddings)))
    print("KERNEL_OK")
</pallas_src>

<mosaic_0001>
module attributes {stable_mosaic.version = 11 : i64} {
  func.func private @main(%arg0: i32) attributes {dimension_semantics = [#tpu.dimension_semantics<core_parallel>], iteration_bounds = array<i64: 2>, tpu.core_type = #tpu.core_type<sc_scalar_subcore>, window_params = []} {
    return
  }
}

module attributes {stable_mosaic.version = 11 : i64} {
  func.func private @main(%arg0: i32) attributes {dimension_semantics = [#tpu.dimension_semantics<core_parallel>], iteration_bounds = array<i64: 2>, tpu.core_type = #tpu.core_type<sc_scalar_subcore>, window_params = []} {
    return
  }
}

module attributes {stable_mosaic.version = 11 : i64} {
  func.func @_fused_nnconvnet_kernel(%arg0: memref<16x4xf32, #tpu.memory_space<vmem>>, %arg1: memref<32x6xf32, #tpu.memory_space<vmem>>, %arg2: memref<32x1xi32, #tpu.memory_space<vmem>>, %arg3: memref<1x32xi32, #tpu.memory_space<vmem>>, %arg4: memref<1x16xi32, #tpu.memory_space<vmem>>, %arg5: memref<16x1xf32, #tpu.memory_space<vmem>>, %arg6: memref<2x1xf32, #tpu.memory_space<vmem>>, %arg7: memref<6x16xbf16, #tpu.memory_space<vmem>>, %arg8: memref<1x16xf32, #tpu.memory_space<vmem>>, %arg9: memref<64x8xbf16, #tpu.memory_space<vmem>>, %arg10: memref<4x8xf32, #tpu.memory_space<vmem>>, %arg11: memref<4x8xbf16, #tpu.memory_space<vmem>>, %arg12: memref<1x8xf32, #tpu.memory_space<vmem>>, %arg13: memref<1x8xf32, #tpu.memory_space<vmem>>, %arg14: memref<1x8xf32, #tpu.memory_space<vmem>>, %arg15: memref<6x16xbf16, #tpu.memory_space<vmem>>, %arg16: memref<1x16xf32, #tpu.memory_space<vmem>>, %arg17: memref<128x8xbf16, #tpu.memory_space<vmem>>, %arg18: memref<8x8xf32, #tpu.memory_space<vmem>>, %arg19: memref<8x8xbf16, #tpu.memory_space<vmem>>, %arg20: memref<1x8xf32, #tpu.memory_space<vmem>>, %arg21: memref<1x8xf32, #tpu.memory_space<vmem>>, %arg22: memref<1x8xf32, #tpu.memory_space<vmem>>, %arg23: memref<8x16xbf16, #tpu.memory_space<vmem>>, %arg24: memref<1x16xf32, #tpu.memory_space<vmem>>, %arg25: memref<16x3xbf16, #tpu.memory_space<vmem>>, %arg26: memref<1x3xf32, #tpu.memory_space<vmem>>, %arg27: memref<2x3xf32, #tpu.memory_space<vmem>>, %arg28: memref<2x8xf32, #tpu.memory_space<vmem>>) attributes {dimension_semantics = [], scalar_prefetch = 0 : i64, scratch_operands = 0 : i64, tpu.core_type = #tpu.core_type<tc>} {
    %c0 = arith.constant 0 : index
    %c0_0 = arith.constant 0 : index
    %0 = vector.load %arg2[%c0, %c0_0] : memref<32x1xi32, #tpu.memory_space<vmem>>, vector<32x1xi32>
    %1 = tpu.iota {dimensions = array<i32: 1>} : vector<32x16xi32>
    %2 = vector.broadcast %0 : vector<32x1xi32> to vector<32x16xi32>
    %3 = arith.cmpi eq, %2, %1 : vector<32x16xi32>
    %cst = arith.constant 1.000000e+00 : f32
    %cst_1 = arith.constant 0.000000e+00 : f32
    %4 = vector.broadcast %cst : f32 to vector<32x16xf32>
    %5 = vector.broadcast %cst_1 : f32 to vector<32x16xf32>
    %6 = arith.select %3, %4, %5 : vector<32x16xi1>, vector<32x16xf32>
    %7 = arith.truncf %6 : vector<32x16xf32> to vector<32x16xbf16>
    %8 = tpu.iota {dimensions = array<i32: 0>} : vector<16x32xi32>
    %c0_2 = arith.constant 0 : index
    %c0_3 = arith.constant 0 : index
    %9 = vector.load %arg3[%c0_2, %c0_3] : memref<1x32xi32, #tpu.memory_space<vmem>>, vector<1x32xi32>
    %10 = vector.broadcast %9 : vector<1x32xi32> to vector<16x32xi32>
    %11 = arith.cmpi eq, %8, %10 : vector<16x32xi32>
    %cst_4 = arith.constant 1.000000e+00 : f32
    %cst_5 = arith.constant 0.000000e+00 : f32
    %12 = vector.broadcast %cst_4 : f32 to vector<16x32xf32>
    %13 = vector.broadcast %cst_5 : f32 to vector<16x32xf32>
    %14 = arith.select %11, %12, %13 : vector<16x32xi1>, vector<16x32xf32>
    %15 = arith.truncf %14 : vector<16x32xf32> to vector<16x32xbf16>
    %16 = tpu.iota {dimensions = array<i32: 0>} : vector<2x16xi32>
    %c0_6 = arith.constant 0 : index
    %c0_7 = arith.constant 0 : index
    %17 = vector.load %arg4[%c0_6, %c0_7] : memref<1x16xi32, #tpu.memory_space<vmem>>, vector<1x16xi32>
    %18 = vector.broadcast %17 : vector<1x16xi32> to vector<2x16xi32>
    %19 = arith.cmpi eq, %16, %18 : vector<2x16xi32>
    %cst_8 = arith.constant 1.000000e+00 : f32
    %cst_9 = arith.constant 0.000000e+00 : f32
    %20 = vector.broadcast %cst_8 : f32 to vector<2x16xf32>
    %21 = vector.broadcast %cst_9 : f32 to vector<2x16xf32>
    %22 = arith.select %19, %20, %21 : vector<2x16xi1>, vector<2x16xf32>
    %23 = arith.truncf %22 : vector<2x16xf32> to vector<2x16xbf16>
    %c0_10 = arith.constant 0 : index
    %c0_11 = arith.constant 0 : index
    %24 = vector.load %arg5[%c0_10, %c0_11] : memref<16x1xf32, #tpu.memory_space<vmem>>, vector<16x1xf32>
    %25 = tpu.reciprocal %24 {approx = true} : vector<16x1xf32> -> vector<16x1xf32>
    %c0_12 = arith.constant 0 : index
    %c0_13 = arith.constant 0 : index
    %26 = vector.load %arg6[%c0_12, %c0_13] : memref<2x1xf32, #tpu.memory_space<vmem>>, vector<2x1xf32>
    %27 = tpu.reciprocal %26 {approx = true} : vector<2x1xf32> -> vector<2x1xf32>
    %c0_14 = arith.constant 0 : index
    %c0_15 = arith.constant 0 : index
    %28 = vector.load %arg1[%c0_14, %c0_15] : memref<32x6xf32, #tpu.memory_space<vmem>>, vector<32x6xf32>
    %29 = arith.truncf %28 : vector<32x6xf32> to vector<32x6xbf16>
    %c0_16 = arith.constant 0 : index
    %c0_17 = arith.constant 0 : index
    %30 = vector.load %arg0[%c0_16, %c0_17] : memref<16x4xf32, #tpu.memory_space<vmem>>, vector<16x4xf32>
    %c0_18 = arith.constant 0 : index
    %c0_19 = arith.constant 0 : index
    %31 = vector.load %arg7[%c0_18, %c0_19] : memref<6x16xbf16, #tpu.memory_space<vmem>>, vector<6x16xbf16>
    %cst_20 = arith.constant dense<0.000000e+00> : vector<32x16xf32>
    %32 = tpu.matmul %29, %31, %cst_20 {dimension_numbers = #tpu.dot_dimension_numbers<[1], [0], [0], [1], [0, 0, 1, 1], [], []>} : vector<32x6xbf16>, vector<6x16xbf16>, vector<32x16xf32> -> vector<32x16xf32>
    %c0_21 = arith.constant 0 : index
    %c0_22 = arith.constant 0 : index
    %33 = vector.load %arg8[%c0_21, %c0_22] : memref<1x16xf32, #tpu.memory_space<vmem>>, vector<1x16xf32>
    %34 = vector.broadcast %33 : vector<1x16xf32> to vector<32x16xf32>
    %35 = arith.addf %32, %34 : vector<32x16xf32>
    %cst_23 = arith.constant 0.000000e+00 : f32
    %36 = vector.broadcast %cst_23 : f32 to vector<32x16xf32>
    %37 = arith.maximumf %35, %36 : vector<32x16xf32>
    %38 = arith.truncf %30 : vector<16x4xf32> to vector<16x4xbf16>
    %cst_24 = arith.constant dense<0.000000e+00> : vector<32x4xf32>
    %39 = tpu.matmul %7, %38, %cst_24 {dimension_numbers = #tpu.dot_dimension_numbers<[1], [0], [0], [1], [0, 0, 1, 1], [], []>} : vector<32x16xbf16>, vector<16x4xbf16>, vector<32x4xf32> -> vector<32x4xf32>
    %40 = vector.shape_cast %39 : vector<32x4xf32> to vector<32x4x1xf32>
    %41 = vector.shape_cast %37 : vector<32x16xf32> to vector<32x1x16xf32>
    %42 = vector.broadcast %40 : vector<32x4x1xf32> to vector<32x4x16xf32>
    %43 = vector.broadcast %41 : vector<32x1x16xf32> to vector<32x4x16xf32>
    %44 = arith.mulf %42, %43 : vector<32x4x16xf32>
    %45 = vector.shape_cast %44 : vector<32x4x16xf32> to vector<32x64xf32>
    %46 = arith.truncf %45 : vector<32x64xf32> to vector<32x64xbf16>
    %c0_25 = arith.constant 0 : index
    %c0_26 = arith.constant 0 : index
    %47 = vector.load %arg9[%c0_25, %c0_26] : memref<64x8xbf16, #tpu.memory_space<vmem>>, vector<64x8xbf16>
    %cst_27 = arith.constant dense<0.000000e+00> : vector<32x8xf32>
    %48 = tpu.matmul %46, %47, %cst_27 {dimension_numbers = #tpu.dot_dimension_numbers<[1], [0], [0], [1], [0, 0, 1, 1], [], []>} : vector<32x64xbf16>, vector<64x8xbf16>, vector<32x8xf32> -> vector<32x8xf32>
    %c0_28 = arith.constant 0 : index
    %c0_29 = arith.constant 0 : index
    %49 = vector.load %arg10[%c0_28, %c0_29] : memref<4x8xf32, #tpu.memory_space<vmem>>, vector<4x8xf32>
    %cst_30 = arith.constant dense<0.000000e+00> : vector<32x8xf32>
    %50 = tpu.matmul %39, %49, %cst_30 {dimension_numbers = #tpu.dot_dimension_numbers<[1], [0], [0], [1], [0, 0, 1, 1], [], []>} : vector<32x4xf32>, vector<4x8xf32>, vector<32x8xf32> -> vector<32x8xf32>
    %51 = arith.addf %48, %50 : vector<32x8xf32>
    %52 = arith.truncf %51 : vector<32x8xf32> to vector<32x8xbf16>
    %cst_31 = arith.constant dense<0.000000e+00> : vector<16x8xf32>
    %53 = tpu.matmul %15, %52, %cst_31 {dimension_numbers = #tpu.dot_dimension_numbers<[1], [0], [0], [1], [0, 0, 1, 1], [], []>} : vector<16x32xbf16>, vector<32x8xbf16>, vector<16x8xf32> -> vector<16x8xf32>
    %54 = vector.broadcast %25 : vector<16x1xf32> to vector<16x8xf32>
    %55 = arith.mulf %53, %54 : vector<16x8xf32>
    %c0_32 = arith.constant 0 : index
    %c0_33 = arith.constant 0 : index
    %56 = vector.load %arg11[%c0_32, %c0_33] : memref<4x8xbf16, #tpu.memory_space<vmem>>, vector<4x8xbf16>
    %cst_34 = arith.constant dense<0.000000e+00> : vector<16x8xf32>
    %57 = tpu.matmul %38, %56, %cst_34 {dimension_numbers = #tpu.dot_dimension_numbers<[1], [0], [0], [1], [0, 0, 1, 1], [], []>} : vector<16x4xbf16>, vector<4x8xbf16>, vector<16x8xf32> -> vector<16x8xf32>
    %58 = arith.addf %55, %57 : vector<16x8xf32>
    %c0_35 = arith.constant 0 : index
    %c0_36 = arith.constant 0 : index
    %59 = vector.load %arg12[%c0_35, %c0_36] : memref<1x8xf32, #tpu.memory_space<vmem>>, vector<1x8xf32>
    %60 = vector.broadcast %59 : vector<1x8xf32> to vector<16x8xf32>
    %61 = arith.addf %58, %60 : vector<16x8xf32>
    %c0_37 = arith.constant 0 : index
    %c0_38 = arith.constant 0 : index
    %62 = vector.load %arg13[%c0_37, %c0_38] : memref<1x8xf32, #tpu.memory_space<vmem>>, vector<1x8xf32>
    %63 = vector.broadcast %62 : vector<1x8xf32> to vector<16x8xf32>
    %64 = arith.mulf %61, %63 : vector<16x8xf32>
    %c0_39 = arith.constant 0 : index
    %c0_40 = arith.constant 0 : index
    %65 = vector.load %arg14[%c0_39, %c0_40] : memref<1x8xf32, #tpu.memory_space<vmem>>, vector<1x8xf32>
    %66 = vector.broadcast %65 : vector<1x8xf32> to vector<16x8xf32>
    %67 = arith.addf %64, %66 : vector<16x8xf32>
    %cst_41 = arith.constant 0.000000e+00 : f32
    %68 = vector.broadcast %cst_41 : f32 to vector<16x8xf32>
    %69 = arith.maximumf %67, %68 : vector<16x8xf32>
    %c0_42 = arith.constant 0 : index
    %c0_43 = arith.constant 0 : index
    %70 = vector.load %arg15[%c0_42, %c0_43] : memref<6x16xbf16, #tpu.memory_space<vmem>>, vector<6x16xbf16>
    %cst_44 = arith.constant dense<0.000000e+00> : vector<32x16xf32>
    %71 = tpu.matmul %29, %70, %cst_44 {dimension_numbers = #tpu.dot_dimension_numbers<[1], [0], [0], [1], [0, 0, 1, 1], [], []>} : vector<32x6xbf16>, vector<6x16xbf16>, vector<32x16xf32> -> vector<32x16xf32>
    %c0_45 = arith.constant 0 : index
    %c0_46 = arith.constant 0 : index
    %72 = vector.load %arg16[%c0_45, %c0_46] : memref<1x16xf32, #tpu.memory_space<vmem>>, vector<1x16xf32>
    %73 = vector.broadcast %72 : vector<1x16xf32> to vector<32x16xf32>
    %74 = arith.addf %71, %73 : vector<32x16xf32>
    %cst_47 = arith.constant 0.000000e+00 : f32
    %75 = vector.broadcast %cst_47 : f32 to vector<32x16xf32>
    %76 = arith.maximumf %74, %75 : vector<32x16xf32>
    %77 = arith.truncf %69 : vector<16x8xf32> to vector<16x8xbf16>
    %cst_48 = arith.constant dense<0.000000e+00> : vector<32x8xf32>
    %78 = tpu.matmul %7, %77, %cst_48 {dimension_numbers = #tpu.dot_dimension_numbers<[1], [0], [0], [1], [0, 0, 1, 1], [], []>} : vector<32x16xbf16>, vector<16x8xbf16>, vector<32x8xf32> -> vector<32x8xf32>
    %79 = vector.shape_cast %78 : vector<32x8xf32> to vector<32x8x1xf32>
    %80 = vector.shape_cast %76 : vector<32x16xf32> to vector<32x1x16xf32>
    %81 = vector.broadcast %79 : vector<32x8x1xf32> to vector<32x8x16xf32>
    %82 = vector.broadcast %80 : vector<32x1x16xf32> to vector<32x8x16xf32>
    %83 = arith.mulf %81, %82 : vector<32x8x16xf32>
    %84 = vector.shape_cast %83 : vector<32x8x16xf32> to vector<32x128xf32>
    %85 = arith.truncf %84 : vector<32x128xf32> to vector<32x128xbf16>
    %c0_49 = arith.constant 0 : index
    %c0_50 = arith.constant 0 : index
    %86 = vector.load %arg17[%c0_49, %c0_50] : memref<128x8xbf16, #tpu.memory_space<vmem>>, vector<128x8xbf16>
    %cst_51 = arith.constant dense<0.000000e+00> : vector<32x8xf32>
    %87 = tpu.matmul %85, %86, %cst_51 {dimension_numbers = #tpu.dot_dimension_numbers<[1], [0], [0], [1], [0, 0, 1, 1], [], []>} : vector<32x128xbf16>, vector<128x8xbf16>, vector<32x8xf32> -> vector<32x8xf32>
    %c0_52 = arith.constant 0 : index
    %c0_53 = arith.constant 0 : index
    %88 = vector.load %arg18[%c0_52, %c0_53] : memref<8x8xf32, #tpu.memory_space<vmem>>, vector<8x8xf32>
    %cst_54 = arith.constant dense<0.000000e+00> : vector<32x8xf32>
    %89 = tpu.matmul %78, %88, %cst_54 {dimension_numbers = #tpu.dot_dimension_numbers<[1], [0], [0], [1], [0, 0, 1, 1], [], []>} : vector<32x8xf32>, vector<8x8xf32>, vector<32x8xf32> -> vector<32x8xf32>
    %90 = arith.addf %87, %89 : vector<32x8xf32>
    %91 = arith.truncf %90 : vector<32x8xf32> to vector<32x8xbf16>
    %cst_55 = arith.constant dense<0.000000e+00> : vector<16x8xf32>
    %92 = tpu.matmul %15, %91, %cst_55 {dimension_numbers = #tpu.dot_dimension_numbers<[1], [0], [0], [1], [0, 0, 1, 1], [], []>} : vector<16x32xbf16>, vector<32x8xbf16>, vector<16x8xf32> -> vector<16x8xf32>
    %93 = vector.broadcast %25 : vector<16x1xf32> to vector<16x8xf32>
    %94 = arith.mulf %92, %93 : vector<16x8xf32>
    %c0_56 = arith.constant 0 : index
    %c0_57 = arith.constant 0 : index
    %95 = vector.load %arg19[%c0_56, %c0_57] : memref<8x8xbf16, #tpu.memory_space<vmem>>, vector<8x8xbf16>
    %cst_58 = arith.constant dense<0.000000e+00> : vector<16x8xf32>
    %96 = tpu.matmul %77, %95, %cst_58 {dimension_numbers = #tpu.dot_dimension_numbers<[1], [0], [0], [1], [0, 0, 1, 1], [], []>} : vector<16x8xbf16>, vector<8x8xbf16>, vector<16x8xf32> -> vector<16x8xf32>
    %97 = arith.addf %94, %96 : vector<16x8xf32>
    %c0_59 = arith.constant 0 : index
    %c0_60 = arith.constant 0 : index
    %98 = vector.load %arg20[%c0_59, %c0_60] : memref<1x8xf32, #tpu.memory_space<vmem>>, vector<1x8xf32>
    %99 = vector.broadcast %98 : vector<1x8xf32> to vector<16x8xf32>
    %100 = arith.addf %97, %99 : vector<16x8xf32>
    %c0_61 = arith.constant 0 : index
    %c0_62 = arith.constant 0 : index
    %101 = vector.load %arg21[%c0_61, %c0_62] : memref<1x8xf32, #tpu.memory_space<vmem>>, vector<1x8xf32>
    %102 = vector.broadcast %101 : vector<1x8xf32> to vector<16x8xf32>
    %103 = arith.mulf %100, %102 : vector<16x8xf32>
    %c0_63 = arith.constant 0 : index
    %c0_64 = arith.constant 0 : index
    %104 = vector.load %arg22[%c0_63, %c0_64] : memref<1x8xf32, #tpu.memory_space<vmem>>, vector<1x8xf32>
    %105 = vector.broadcast %104 : vector<1x8xf32> to vector<16x8xf32>
    %106 = arith.addf %103, %105 : vector<16x8xf32>
    %cst_65 = arith.constant 0.000000e+00 : f32
    %107 = vector.broadcast %cst_65 : f32 to vector<16x8xf32>
    %108 = arith.maximumf %106, %107 : vector<16x8xf32>
    %109 = arith.truncf %108 : vector<16x8xf32> to vector<16x8xbf16>
    %cst_66 = arith.constant dense<0.000000e+00> : vector<2x8xf32>
    %110 = tpu.matmul %23, %109, %cst_66 {dimension_numbers = #tpu.dot_dimension_numbers<[1], [0], [0], [1], [0, 0, 1, 1], [], []>} : vector<2x16xbf16>, vector<16x8xbf16>, vector<2x8xf32> -> vector<2x8xf32>
    %111 = vector.broadcast %27 : vector<2x1xf32> to vector<2x8xf32>
    %112 = arith.mulf %110, %111 : vector<2x8xf32>
    %c0_67 = arith.constant 0 : index
    %c0_68 = arith.constant 0 : index
    %113 = vector.load %arg28[%c0_67, %c0_68] : memref<2x8xf32, #tpu.memory_space<vmem>>, vector<2x8xf32>
    tpu.vector_store %arg28[%c0_67, %c0_68], %112 {strides = array<i32>} : memref<2x8xf32, #tpu.memory_space<vmem>>, vector<2x8xf32>,
    %114 = arith.truncf %112 : vector<2x8xf32> to vector<2x8xbf16>
    %c0_69 = arith.constant 0 : index
    %c0_70 = arith.constant 0 : index
    %115 = vector.load %arg23[%c0_69, %c0_70] : memref<8x16xbf16, #tpu.memory_space<vmem>>, vector<8x16xbf16>
    %cst_71 = arith.constant dense<0.000000e+00> : vector<2x16xf32>
    %116 = tpu.matmul %114, %115, %cst_71 {dimension_numbers = #tpu.dot_dimension_numbers<[1], [0], [0], [1], [0, 0, 1, 1], [], []>} : vector<2x8xbf16>, vector<8x16xbf16>, vector<2x16xf32> -> vector<2x16xf32>
    %c0_72 = arith.constant 0 : index
    %c0_73 = arith.constant 0 : index
    %117 = vector.load %arg24[%c0_72, %c0_73] : memref<1x16xf32, #tpu.memory_space<vmem>>, vector<1x16xf32>
    %118 = vector.broadcast %117 : vector<1x16xf32> to vector<2x16xf32>
    %119 = arith.addf %116, %118 : vector<2x16xf32>
    %cst_74 = arith.constant 0.000000e+00 : f32
    %120 = vector.broadcast %cst_74 : f32 to vector<2x16xf32>
    %121 = arith.maximumf %119, %120 : vector<2x16xf32>
    %122 = arith.truncf %121 : vector<2x16xf32> to vector<2x16xbf16>
    %c0_75 = arith.constant 0 : index
    %c0_76 = arith.constant 0 : index
    %123 = vector.load %arg25[%c0_75, %c0_76] : memref<16x3xbf16, #tpu.memory_space<vmem>>, vector<16x3xbf16>
    %cst_77 = arith.constant dense<0.000000e+00> : vector<2x3xf32>
    %124 = tpu.matmul %122, %123, %cst_77 {dimension_numbers = #tpu.dot_dimension_numbers<[1], [0], [0], [1], [0, 0, 1, 1], [], []>} : vector<2x16xbf16>, vector<16x3xbf16>, vector<2x3xf32> -> vector<2x3xf32>
    %c0_78 = arith.constant 0 : index
    %c0_79 = arith.constant 0 : index
    %125 = vector.load %arg26[%c0_78, %c0_79] : memref<1x3xf32, #tpu.memory_space<vmem>>, vector<1x3xf32>
    %126 = vector.broadcast %125 : vector<1x3xf32> to vector<2x3xf32>
    %127 = arith.addf %124, %126 : vector<2x3xf32>
    %c0_80 = arith.constant 0 : index
    %c0_81 = arith.constant 0 : index
    %128 = vector.load %arg27[%c0_80, %c0_81] : memref<2x3xf32, #tpu.memory_space<vmem>>, vector<2x3xf32>
    tpu.vector_store %arg27[%c0_80, %c0_81], %127 {strides = array<i32>} : memref<2x3xf32, #tpu.memory_space<vmem>>, vector<2x3xf32>,
    return
  }
}

</mosaic_0001>

<llo_original>
// kernel: nnconvnet_forward.1
$region0: #{nnconvnet_forward.1}
  #allocation0 [shape = 'u32[]', space=smem, size = 0x4, offset = 0x4, fixed_abs, tag = 'smem constant byte address 0x4 - core index']
  #allocation1 [shape = 'u32[144,128]{1,0:T(1,128)}', space=vmem, size = 0x12000, scoped, tag = 'internal scratch']
  %s0 = inlined_call_operand.vmem [shape: f32[16,4], index: 0, kind: input, shape index: {}]
  %s1 = inlined_call_operand.vmem [shape: f32[32,6], index: 1, kind: input, shape index: {}]
  %s2 = inlined_call_operand.vmem [shape: s32[32,1], index: 2, kind: input, shape index: {}]
  %s3 = inlined_call_operand.vmem [shape: s32[1,32], index: 3, kind: input, shape index: {}]
  %s4 = inlined_call_operand.vmem [shape: s32[1,16], index: 4, kind: input, shape index: {}]
  %s5 = inlined_call_operand.vmem [shape: f32[16,1], index: 5, kind: input, shape index: {}]
  %s6 = inlined_call_operand.vmem [shape: f32[2,1], index: 6, kind: input, shape index: {}]
  %s7 = inlined_call_operand.vmem [shape: bf16[6,16], index: 7, kind: input, shape index: {}]
  %s8 = inlined_call_operand.vmem [shape: f32[1,16], index: 8, kind: input, shape index: {}]
  %s9 = inlined_call_operand.vmem [shape: bf16[64,8], index: 9, kind: input, shape index: {}]
  %s10 = inlined_call_operand.vmem [shape: f32[4,8], index: 10, kind: input, shape index: {}]
  %s11 = inlined_call_operand.vmem [shape: bf16[4,8], index: 11, kind: input, shape index: {}]
  %s12 = inlined_call_operand.vmem [shape: f32[1,8], index: 12, kind: input, shape index: {}]
  %s13 = inlined_call_operand.vmem [shape: f32[1,8], index: 13, kind: input, shape index: {}]
  %s14 = inlined_call_operand.vmem [shape: f32[1,8], index: 14, kind: input, shape index: {}]
  %s15 = inlined_call_operand.vmem [shape: bf16[6,16], index: 15, kind: input, shape index: {}]
  %s16 = inlined_call_operand.vmem [shape: f32[1,16], index: 16, kind: input, shape index: {}]
  %s17 = inlined_call_operand.vmem [shape: bf16[128,8], index: 17, kind: input, shape index: {}]
  %s18 = inlined_call_operand.vmem [shape: f32[8,8], index: 18, kind: input, shape index: {}]
  %s19 = inlined_call_operand.vmem [shape: bf16[8,8], index: 19, kind: input, shape index: {}]
  %s20 = inlined_call_operand.vmem [shape: f32[1,8], index: 20, kind: input, shape index: {}]
  %s21 = inlined_call_operand.vmem [shape: f32[1,8], index: 21, kind: input, shape index: {}]
  %s22 = inlined_call_operand.vmem [shape: f32[1,8], index: 22, kind: input, shape index: {}]
  %s23 = inlined_call_operand.vmem [shape: bf16[8,16], index: 23, kind: input, shape index: {}]
  %s24 = inlined_call_operand.vmem [shape: f32[1,16], index: 24, kind: input, shape index: {}]
  %s25 = inlined_call_operand.vmem [shape: bf16[16,3], index: 25, kind: input, shape index: {}]
  %s26 = inlined_call_operand.vmem [shape: f32[1,3], index: 26, kind: input, shape index: {}]
  %s27 = inlined_call_operand.hbm [shape: f32[2,3], index: 27, kind: output, shape index: {0}]
  %s28 = inlined_call_operand.hbm [shape: f32[2,8], index: 28, kind: output, shape index: {1}]
  %29 = xla_tuple %s27, %s28
  %s30 = sld [smem:[#allocation0]]
  $region126: #{nnconvnet_forward.1} parent=0
    _
  %s32 = ssub.s32 1, %s30
  %s33 = scalar_select 0, %s32, %s30
  $region1: #{nnconvnet_forward.1} parent=0
    #allocation2 [shape = 'u8[1024]{0}', space=vmem, size = 0x400, scoped, tag = 'output window, operand 0, single buffered']
    #allocation3 [shape = 's32[1]{0}', space=sflag, size = 0x4, scoped, tag = 'scoped memory for nnconvnet_forward.1']
    #allocation4 [shape = 'u8[1024]{0}', space=vmem, size = 0x400, scoped, tag = 'output window, operand 1, single buffered']
    #allocation5 [shape = 's32[1]{0}', space=sflag, size = 0x4, scoped, tag = 'scoped memory for nnconvnet_forward.1']
    %34 = vsyncpa [#allocation3], 0
    %35 = vsyncpa [#allocation5], 0
    // Predicated region
    $region2: #{nnconvnet_forward.1} parent=1 // pred_check
      _
    $region3: #{nnconvnet_forward.1} parent=1 // pred_check_branch
      %37 = sbr.rel (0) target = $region5
    $region4: #{nnconvnet_forward.1} parent=1 // pred_region
      _
    $region5: #{nnconvnet_forward.1} parent=1 // pred_fallthru
      _
    // Predicated region
    $region6: #{nnconvnet_forward.1} parent=1 // pred_check
      _
    $region7: #{nnconvnet_forward.1} parent=1 // pred_check_branch
      %39 = sbr.rel (0) target = $region9
    $region8: #{nnconvnet_forward.1} parent=1 // pred_region
      _
    $region9: #{nnconvnet_forward.1} parent=1 // pred_fallthru
      _
    // Predicated region
    $region10: #{nnconvnet_forward.1} parent=1 // pred_check
      _
    $region11: #{nnconvnet_forward.1} parent=1 // pred_check_branch
      %41 = sbr.rel (0) target = $region13
    $region12: #{nnconvnet_forward.1} parent=1 // pred_region
      _
    $region13: #{nnconvnet_forward.1} parent=1 // pred_fallthru
      _
    // Predicated region
    $region14: #{nnconvnet_forward.1} parent=1 // pred_check
      _
    $region15: #{nnconvnet_forward.1} parent=1 // pred_check_branch
      %43 = sbr.rel (0) target = $region17
    $region16: #{nnconvnet_forward.1} parent=1 // pred_region
      _
    $region17: #{nnconvnet_forward.1} parent=1 // pred_fallthru
      _
    // Predicated region
    $region18: #{nnconvnet_forward.1} parent=1 // pred_check
      _
    $region19: #{nnconvnet_forward.1} parent=1 // pred_check_branch
      %45 = sbr.rel (0) target = $region21
    $region20: #{nnconvnet_forward.1} parent=1 // pred_region
      _
    $region21: #{nnconvnet_forward.1} parent=1 // pred_fallthru
      _
    // Predicated region
    $region22: #{nnconvnet_forward.1} parent=1 // pred_check
      _
    $region23: #{nnconvnet_forward.1} parent=1 // pred_check_branch
      %47 = sbr.rel (0) target = $region25
    $region24: #{nnconvnet_forward.1} parent=1 // pred_region
      _
    $region25: #{nnconvnet_forward.1} parent=1 // pred_fallthru
      _
    // Predicated region
    $region26: #{nnconvnet_forward.1} parent=1 // pred_check
      _
    $region27: #{nnconvnet_forward.1} parent=1 // pred_check_branch
      %49 = sbr.rel (0) target = $region29
    $region28: #{nnconvnet_forward.1} parent=1 // pred_region
      _
    $region29: #{nnconvnet_forward.1} parent=1 // pred_fallthru
      _
    // Predicated region
    $region30: #{nnconvnet_forward.1} parent=1 // pred_check
      _
    $region31: #{nnconvnet_forward.1} parent=1 // pred_check_branch
      %51 = sbr.rel (0) target = $region33
    $region32: #{nnconvnet_forward.1} parent=1 // pred_region
      _
    $region33: #{nnconvnet_forward.1} parent=1 // pred_fallthru
      _
    // Predicated region
    $region34: #{nnconvnet_forward.1} parent=1 // pred_check
      _
    $region35: #{nnconvnet_forward.1} parent=1 // pred_check_branch
      %53 = sbr.rel (0) target = $region37
    $region36: #{nnconvnet_forward.1} parent=1 // pred_region
      _
    $region37: #{nnconvnet_forward.1} parent=1 // pred_fallthru
      _
    // Predicated region
    $region38: #{nnconvnet_forward.1} parent=1 // pred_check
      _
    $region39: #{nnconvnet_forward.1} parent=1 // pred_check_branch
      %55 = sbr.rel (0) target = $region41
    $region40: #{nnconvnet_forward.1} parent=1 // pred_region
      _
    $region41: #{nnconvnet_forward.1} parent=1 // pred_fallthru
      _
    // Predicated region
    $region42: #{nnconvnet_forward.1} parent=1 // pred_check
      _
    $region43: #{nnconvnet_forward.1} parent=1 // pred_check_branch
      %57 = sbr.rel (0) target = $region45
    $region44: #{nnconvnet_forward.1} parent=1 // pred_region
      _
    $region45: #{nnconvnet_forward.1} parent=1 // pred_fallthru
      _
    // Predicated region
    $region46: #{nnconvnet_forward.1} parent=1 // pred_check
      _
    $region47: #{nnconvnet_forward.1} parent=1 // pred_check_branch
      %59 = sbr.rel (0) target = $region49
    $region48: #{nnconvnet_forward.1} parent=1 // pred_region
      _
    $region49: #{nnconvnet_forward.1} parent=1 // pred_fallthru
      _
    // Predicated region
    $region50: #{nnconvnet_forward.1} parent=1 // pred_check
      _
    $region51: #{nnconvnet_forward.1} parent=1 // pred_check_branch
      %61 = sbr.rel (0) target = $region53
    $region52: #{nnconvnet_forward.1} parent=1 // pred_region
      _
    $region53: #{nnconvnet_forward.1} parent=1 // pred_fallthru
      _
    // Predicated region
    $region54: #{nnconvnet_forward.1} parent=1 // pred_check
      _
    $region55: #{nnconvnet_forward.1} parent=1 // pred_check_branch
      %63 = sbr.rel (0) target = $region57
    $region56: #{nnconvnet_forward.1} parent=1 // pred_region
      _
    $region57: #{nnconvnet_forward.1} parent=1 // pred_fallthru
      _
    // Predicated region
    $region58: #{nnconvnet_forward.1} parent=1 // pred_check
      _
    $region59: #{nnconvnet_forward.1} parent=1 // pred_check_branch
      %65 = sbr.rel (0) target = $region61
    $region60: #{nnconvnet_forward.1} parent=1 // pred_region
      _
    $region61: #{nnconvnet_forward.1} parent=1 // pred_fallthru
      _
    // Predicated region
    $region62: #{nnconvnet_forward.1} parent=1 // pred_check
      _
    $region63: #{nnconvnet_forward.1} parent=1 // pred_check_branch
      %67 = sbr.rel (0) target = $region65
    $region64: #{nnconvnet_forward.1} parent=1 // pred_region
      _
    $region65: #{nnconvnet_forward.1} parent=1 // pred_fallthru
      _
    // Predicated region
    $region66: #{nnconvnet_forward.1} parent=1 // pred_check
      _
    $region67: #{nnconvnet_forward.1} parent=1 // pred_check_branch
      %69 = sbr.rel (0) target = $region69
    $region68: #{nnconvnet_forward.1} parent=1 // pred_region
      _
    $region69: #{nnconvnet_forward.1} parent=1 // pred_fallthru
      _
    // Predicated region
    $region70: #{nnconvnet_forward.1} parent=1 // pred_check
      _
    $region71: #{nnconvnet_forward.1} parent=1 // pred_check_branch
      %71 = sbr.rel (0) target = $region73
    $region72: #{nnconvnet_forward.1} parent=1 // pred_region
      _
    $region73: #{nnconvnet_forward.1} parent=1 // pred_fallthru
      _
    // Predicated region
    $region74: #{nnconvnet_forward.1} parent=1 // pred_check
      _
    $region75: #{nnconvnet_forward.1} parent=1 // pred_check_branch
      %73 = sbr.rel (0) target = $region77
    $region76: #{nnconvnet_forward.1} parent=1 // pred_region
      _
    $region77: #{nnconvnet_forward.1} parent=1 // pred_fallthru
      _
    // Predicated region
    $region78: #{nnconvnet_forward.1} parent=1 // pred_check
      _
    $region79: #{nnconvnet_forward.1} parent=1 // pred_check_branch
      %75 = sbr.rel (0) target = $region81
    $region80: #{nnconvnet_forward.1} parent=1 // pred_region
      _
    $region81: #{nnconvnet_forward.1} parent=1 // pred_fallthru
      _
    // Predicated region
    $region82: #{nnconvnet_forward.1} parent=1 // pred_check
      _
    $region83: #{nnconvnet_forward.1} parent=1 // pred_check_branch
      %77 = sbr.rel (0) target = $region85
    $region84: #{nnconvnet_forward.1} parent=1 // pred_region
      _
    $region85: #{nnconvnet_forward.1} parent=1 // pred_fallthru
      _
    // Predicated region
    $region86: #{nnconvnet_forward.1} parent=1 // pred_check
      _
    $region87: #{nnconvnet_forward.1} parent=1 // pred_check_branch
      %79 = sbr.rel (0) target = $region89
    $region88: #{nnconvnet_forward.1} parent=1 // pred_region
      _
    $region89: #{nnconvnet_forward.1} parent=1 // pred_fallthru
      _
    // Predicated region
    $region90: #{nnconvnet_forward.1} parent=1 // pred_check
      _
    $region91: #{nnconvnet_forward.1} parent=1 // pred_check_branch
      %81 = sbr.rel (0) target = $region93
    $region92: #{nnconvnet_forward.1} parent=1 // pred_region
      _
    $region93: #{nnconvnet_forward.1} parent=1 // pred_fallthru
      _
    // Predicated region
    $region94: #{nnconvnet_forward.1} parent=1 // pred_check
      _
    $region95: #{nnconvnet_forward.1} parent=1 // pred_check_branch
      %83 = sbr.rel (0) target = $region97
    $region96: #{nnconvnet_forward.1} parent=1 // pred_region
      _
    $region97: #{nnconvnet_forward.1} parent=1 // pred_fallthru
      _
    // Predicated region
    $region98: #{nnconvnet_forward.1} parent=1 // pred_check
      _
    $region99: #{nnconvnet_forward.1} parent=1 // pred_check_branch
      %85 = sbr.rel (0) target = $region101
    $region100: #{nnconvnet_forward.1} parent=1 // pred_region
      _
    $region101: #{nnconvnet_forward.1} parent=1 // pred_fallthru
      _
    // Predicated region
    $region102: #{nnconvnet_forward.1} parent=1 // pred_check
      _
    $region103: #{nnconvnet_forward.1} parent=1 // pred_check_branch
      %87 = sbr.rel (0) target = $region105
    $region104: #{nnconvnet_forward.1} parent=1 // pred_region
      _
    $region105: #{nnconvnet_forward.1} parent=1 // pred_fallthru
      _
    // Predicated region
    $region106: #{nnconvnet_forward.1} parent=1 // pred_check
      _
    $region107: #{nnconvnet_forward.1} parent=1 // pred_check_branch
      %89 = sbr.rel (0) target = $region109
    $region108: #{nnconvnet_forward.1} parent=1 // pred_region
      _
    $region109: #{nnconvnet_forward.1} parent=1 // pred_fallthru
      _
    %v91 = vld [vmem:[%s2] sm:$0xff]
    %v92 = vld [vmem:[%s2 + $0x8] sm:$0xff]
    %v93 = vld [vmem:[%s2 + $0x10] sm:$0xff]
    %v94 = vld [vmem:[%s2 + $0x18] sm:$0xff]
    %v95 = vlaneseq
    %v96 = vand.u32 %v95, 127
    %97 = vset.pattern.permute.xlu0 0
    %98 = vperm.xlu0 %97, %v91
    %v99 = vpop.permute.xlu0 %98
    %100 = vset.pattern.permute.xlu0 0
    %101 = vperm.xlu0 %100, %v92
    %v102 = vpop.permute.xlu0 %101
    %103 = vset.pattern.permute.xlu0 0
    %104 = vperm.xlu0 %103, %v93
    %v105 = vpop.permute.xlu0 %104
    %106 = vset.pattern.permute.xlu0 0
    %107 = vperm.xlu0 %106, %v94
    %v108 = vpop.permute.xlu0 %107
    %vm109 = vcmp.eq.s32.totalorder %v99, %v96
    %vm110 = vcmp.eq.s32.totalorder %v102, %v96
    %vm111 = vcmp.eq.s32.totalorder %v105, %v96
    %vm112 = vcmp.eq.s32.totalorder %v108, %v96
    %v113 = vsel %vm109, 1.0, 0.0
    %v114 = vsel %vm110, 1.0, 0.0
    %v115 = vsel %vm111, 1.0, 0.0
    %v116 = vsel %vm112, 1.0, 0.0
    %v117 = vpack.c.bf16 %v114, %v113
    %v118 = vpack.c.bf16 %v116, %v115
    %v119 = vlaneseq
    %v120 = vshrl.u32 %v119, 7
    %v121 = vadd.s32 %v120, 8
    %v122 = vld [vmem:[%s3] sm:$0x1]
    %v123 = vlaneseq
    %v124 = vshrl.u32 %v123, 7
    %v125 = vsub.s32 0, %v124
    %v126 = vrot.slane %v122, %v125
    %vm127 = vcmp.eq.s32.totalorder %v120, %v126
    %vm128 = vcmp.eq.s32.totalorder %v121, %v126
    %v129 = vsel %vm127, 1.0, 0.0
    %v130 = vsel %vm128, 1.0, 0.0
    %v131 = vpack.c.bf16 %v130, %v129
    %v132 = vld [vmem:[%s4] sm:$0x1]
    %v133 = vlaneseq
    %v134 = vshrl.u32 %v133, 7
    %v135 = vsub.s32 0, %v134
    %v136 = vrot.slane %v132, %v135
    %vm137 = vcmp.eq.s32.totalorder %v120, %v136
    %v138 = vsel %vm137, 1.0, 0.0
    %v139 = vpack.c.bf16 %v138, %v138
    %v140 = vld [vmem:[%s5] sm:$0xff]
    %v141 = vld [vmem:[%s5 + $0x8] sm:$0xff]
    %v142 = vrcp.pop %v140
    %v143 = vrcp.pop %v141
    %v144 = vld [vmem:[%s6] sm:$0x3]
    %v145 = vrcp.pop %v144
    %v146 = vld [vmem:[%s1] sm:$0xff]
    %v147 = vld [vmem:[%s1 + $0x8] sm:$0xff]
    %v148 = vld [vmem:[%s1 + $0x10] sm:$0xff]
    %v149 = vld [vmem:[%s1 + $0x18] sm:$0xff]
    %v150 = vpack.c.bf16 %v147, %v146
    %v151 = vpack.c.bf16 %v149, %v148
    %v152 = vld [vmem:[%s0] sm:$0xff]
    %v153 = vld [vmem:[%s0 + $0x8] sm:$0xff]
    %v154 = vld [vmem:[%s7] sm:$0x7]
    %v155 = vld [vmem:[%s8] sm:$0x1]
    %v157 = vlaneseq
    %v158 = vshrl.u32 %v157, 7
    %v159 = vsub.s32 0, %v158
    %v160 = vrot.slane %v155, %v159
    %vm162 = vcmask 48128
    %v164 = vsel %vm162, %v150, 0
    %v167 = vsel %vm162, %v151, 0
    %vm169 = vcmask 1042432
    %v171 = vsel %vm169, %v154, 0
    %173 = vmatprep.subr.bf16.mxu0 0
    %174 = vmatpush1.bf16.msra.mxu0 0
    %175 = vmatprep.subr.bf16.mxu0 0
    %176 = vmatpush1.bf16.msra.mxu0 0
    %177 = vmatprep.subr.bf16.mxu0 0
    %178 = vmatpush1.bf16.msra.mxu0 0
    %179 = vmatprep.subr.bf16.mxu0 0
    %180 = vmatpush1.bf16.msra.mxu0 0
    %181 = vmatprep.subr.bf16.mxu0 0
    %182 = vmatpush1.bf16.msra.mxu0 0
    %183 = vmatprep.subr.bf16.mxu0 0
    %184 = vmatpush1.bf16.msra.mxu0 0
    %185 = vmatprep.subr.bf16.mxu0 0
    %186 = vmatpush1.bf16.msra.mxu0 0
    %187 = vmatprep.subr.bf16.mxu0 0
    %188 = vmatpush1.bf16.msra.mxu0 %v171
    %189 = vmatprep.subr.bf16.mxu0 0
    %190 = vmatpush2.bf16.msra.mxu0 0
    %191 = vmatprep.subr.bf16.mxu0 0
    %192 = vmatpush2.bf16.msra.mxu0 0
    %193 = vmatprep.subr.bf16.mxu0 0
    %194 = vmatpush2.bf16.msra.mxu0 0
    %195 = vmatprep.subr.bf16.mxu0 0
    %196 = vmatpush2.bf16.msra.mxu0 0
    %197 = vmatprep.subr.bf16.mxu0 0
    %198 = vmatpush2.bf16.msra.mxu0 0
    %199 = vmatprep.subr.bf16.mxu0 0
    %200 = vmatpush2.bf16.msra.mxu0 0
    %201 = vmatprep.subr.bf16.mxu0 0
    %202 = vmatpush2.bf16.msra.mxu0 0
    %203 = vmatprep.subr.bf16.mxu0 0
    %204 = vmatpush2.bf16.msra.mxu0 0
    %205 = vmatprep.mubr.bf16.mxu0 0
    %206 = vmatmul.mubr.bf16.gmra.mxu0 %v164
    %v207 = vpop.f32.mrf.mxu0
    %v208 = vadd.f32 %v160, %v207
    %v209 = vpop.f32.mrf.mxu0
    %v210 = vpop.f32.mrf.mxu0
    %v211 = vadd.f32 %v160, %v210
    %v212 = vpop.f32.mrf.mxu0
    %213 = vmatprep.mubr.bf16.mxu0 0
    %214 = vmatmul.mubr.bf16.gmra.mxu0 %v167
    %v215 = vpop.f32.mrf.mxu0
    %v216 = vadd.f32 %v160, %v215
    %v217 = vpop.f32.mrf.mxu0
    %v218 = vpop.f32.mrf.mxu0
    %v219 = vadd.f32 %v160, %v218
    %v220 = vpop.f32.mrf.mxu0
    %221 = vdwg.mxu0
    %v222 = vmax.f32 %v208, 0.0
    %v223 = vmax.f32 %v211, 0.0
    %v224 = vmax.f32 %v216, 0.0
    %v225 = vmax.f32 %v219, 0.0
    %v226 = vpack.c.bf16 %v153, %v152
    %vm227 = vcmask 130048
    %v229 = vsel %vm227, %v117, 0
    %v232 = vsel %vm227, %v118, 0
    %234 = vmatprep.subr.bf16.mxu0 0
    %235 = vmatpush1.bf16.msra.mxu0 0
    %236 = vmatprep.subr.bf16.mxu0 0
    %237 = vmatpush1.bf16.msra.mxu0 0
    %238 = vmatprep.subr.bf16.mxu0 0
    %239 = vmatpush1.bf16.msra.mxu0 0
    %240 = vmatprep.subr.bf16.mxu0 0
    %241 = vmatpush1.bf16.msra.mxu0 0
    %242 = vmatprep.subr.bf16.mxu0 0
    %243 = vmatpush1.bf16.msra.mxu0 0
    %244 = vmatprep.subr.bf16.mxu0 0
    %245 = vmatpush1.bf16.msra.mxu0 0
    %246 = vmatprep.subr.bf16.mxu0 0
    %247 = vmatpush1.bf16.msra.mxu0 0
    %248 = vmatprep.subr.bf16.mxu0 0
    %249 = vmatpush1.bf16.msra.mxu0 %v226
    %250 = vmatprep.subr.bf16.mxu0 0
    %251 = vmatpush2.bf16.msra.mxu0 0
    %252 = vmatprep.subr.bf16.mxu0 0
    %253 = vmatpush2.bf16.msra.mxu0 0
    %254 = vmatprep.subr.bf16.mxu0 0
    %255 = vmatpush2.bf16.msra.mxu0 0
    %256 = vmatprep.subr.bf16.mxu0 0
    %257 = vmatpush2.bf16.msra.mxu0 0
    %258 = vmatprep.subr.bf16.mxu0 0
    %259 = vmatpush2.bf16.msra.mxu0 0
    %260 = vmatprep.subr.bf16.mxu0 0
    %261 = vmatpush2.bf16.msra.mxu0 0
    %262 = vmatprep.subr.bf16.mxu0 0
    %263 = vmatpush2.bf16.msra.mxu0 0
    %264 = vmatprep.subr.bf16.mxu0 0
    %265 = vmatpush2.bf16.msra.mxu0 0
    %266 = vmatprep.mubr.bf16.mxu0 0
    %267 = vmatmul.mubr.bf16.gmra.mxu0 %v229
    %v268 = vpop.f32.mrf.mxu0
    %v269 = vadd.f32 0.0, %v268
    %v270 = vpop.f32.mrf.mxu0
    %v271 = vpop.f32.mrf.mxu0
    %v272 = vadd.f32 0.0, %v271
    %v273 = vpop.f32.mrf.mxu0
    %274 = vmatprep.mubr.bf16.mxu0 0
    %275 = vmatmul.mubr.bf16.gmra.mxu0 %v232
    %v276 = vpop.f32.mrf.mxu0
    %v277 = vadd.f32 0.0, %v276
    %v278 = vpop.f32.mrf.mxu0
    %v279 = vpop.f32.mrf.mxu0
    %v280 = vadd.f32 0.0, %v279
    %v281 = vpop.f32.mrf.mxu0
    %282 = vdwg.mxu0
    %v283 = vlaneseq
    %v284 = vshrl.u32 %v283, 7
    %v285 = vsub.s32 0, %v284
    %v286 = vrot.slane %v269, %v285
    %288 = vbcast.lane.b32.xlu0 %v286, 256
    %v289 = vpop.permute.xlu0 %288
    %v290 = vlaneseq
    %v291 = vshrl.u32 %v290, 7
    %v292 = vsub.s32 1, %v291
    %v293 = vrot.slane %v269, %v292
    %295 = vbcast.lane.b32.xlu0 %v293, 256
    %v296 = vpop.permute.xlu0 %295
    %v297 = vlaneseq
    %v298 = vshrl.u32 %v297, 7
    %v299 = vsub.s32 2, %v298
    %v300 = vrot.slane %v269, %v299
    %302 = vbcast.lane.b32.xlu0 %v300, 256
    %v303 = vpop.permute.xlu0 %302
    %v304 = vlaneseq
    %v305 = vshrl.u32 %v304, 7
    %v306 = vsub.s32 3, %v305
    %v307 = vrot.slane %v269, %v306
    %309 = vbcast.lane.b32.xlu0 %v307, 256
    %v310 = vpop.permute.xlu0 %309
    %v311 = vlaneseq
    %v312 = vshrl.u32 %v311, 7
    %v313 = vsub.s32 4, %v312
    %v314 = vrot.slane %v269, %v313
    %316 = vbcast.lane.b32.xlu0 %v314, 256
    %v317 = vpop.permute.xlu0 %316
    %v318 = vlaneseq
    %v319 = vshrl.u32 %v318, 7
    %v320 = vsub.s32 5, %v319
    %v321 = vrot.slane %v269, %v320
    %323 = vbcast.lane.b32.xlu0 %v321, 256
    %v324 = vpop.permute.xlu0 %323
    %v325 = vlaneseq
    %v326 = vshrl.u32 %v325, 7
    %v327 = vsub.s32 6, %v326
    %v328 = vrot.slane %v269, %v327
    %330 = vbcast.lane.b32.xlu0 %v328, 256
    %v331 = vpop.permute.xlu0 %330
    %v332 = vlaneseq
    %v333 = vshrl.u32 %v332, 7
    %v334 = vsub.s32 7, %v333
    %v335 = vrot.slane %v269, %v334
    %337 = vbcast.lane.b32.xlu0 %v335, 256
    %v338 = vpop.permute.xlu0 %337
    %v339 = vlaneseq
    %v340 = vshrl.u32 %v339, 7
    %v341 = vsub.s32 0, %v340
    %v342 = vrot.slane %v272, %v341
    %344 = vbcast.lane.b32.xlu0 %v342, 256
    %v345 = vpop.permute.xlu0 %344
    %v346 = vlaneseq
    %v347 = vshrl.u32 %v346, 7
    %v348 = vsub.s32 1, %v347
    %v349 = vrot.slane %v272, %v348
    %351 = vbcast.lane.b32.xlu0 %v349, 256
    %v352 = vpop.permute.xlu0 %351
    %v353 = vlaneseq
    %v354 = vshrl.u32 %v353, 7
    %v355 = vsub.s32 2, %v354
    %v356 = vrot.slane %v272, %v355
    %358 = vbcast.lane.b32.xlu0 %v356, 256
    %v359 = vpop.permute.xlu0 %358
    %v360 = vlaneseq
    %v361 = vshrl.u32 %v360, 7
    %v362 = vsub.s32 3, %v361
    %v363 = vrot.slane %v272, %v362
    %365 = vbcast.lane.b32.xlu0 %v363, 256
    %v366 = vpop.permute.xlu0 %365
    %v367 = vlaneseq
    %v368 = vshrl.u32 %v367, 7
    %v369 = vsub.s32 4, %v368
    %v370 = vrot.slane %v272, %v369
    %372 = vbcast.lane.b32.xlu0 %v370, 256
    %v373 = vpop.permute.xlu0 %372
    %v374 = vlaneseq
    %v375 = vshrl.u32 %v374, 7
    %v376 = vsub.s32 5, %v375
    %v377 = vrot.slane %v272, %v376
    %379 = vbcast.lane.b32.xlu0 %v377, 256
    %v380 = vpop.permute.xlu0 %379
    %v381 = vlaneseq
    %v382 = vshrl.u32 %v381, 7
    %v383 = vsub.s32 6, %v382
    %v384 = vrot.slane %v272, %v383
    %386 = vbcast.lane.b32.xlu0 %v384, 256
    %v387 = vpop.permute.xlu0 %386
    %v388 = vlaneseq
    %v389 = vshrl.u32 %v388, 7
    %v390 = vsub.s32 7, %v389
    %v391 = vrot.slane %v272, %v390
    %393 = vbcast.lane.b32.xlu0 %v391, 256
    %v394 = vpop.permute.xlu0 %393
    %v395 = vlaneseq
    %v396 = vshrl.u32 %v395, 7
    %v397 = vsub.s32 0, %v396
    %v398 = vrot.slane %v277, %v397
    %400 = vbcast.lane.b32.xlu0 %v398, 256
    %v401 = vpop.permute.xlu0 %400
    %v402 = vlaneseq
    %v403 = vshrl.u32 %v402, 7
    %v404 = vsub.s32 1, %v403
    %v405 = vrot.slane %v277, %v404
    %407 = vbcast.lane.b32.xlu0 %v405, 256
    %v408 = vpop.permute.xlu0 %407
    %v409 = vlaneseq
    %v410 = vshrl.u32 %v409, 7
    %v411 = vsub.s32 2, %v410
    %v412 = vrot.slane %v277, %v411
    %414 = vbcast.lane.b32.xlu0 %v412, 256
    %v415 = vpop.permute.xlu0 %414
    %v416 = vlaneseq
    %v417 = vshrl.u32 %v416, 7
    %v418 = vsub.s32 3, %v417
    %v419 = vrot.slane %v277, %v418
    %421 = vbcast.lane.b32.xlu0 %v419, 256
    %v422 = vpop.permute.xlu0 %421
    %v423 = vlaneseq
    %v424 = vshrl.u32 %v423, 7
    %v425 = vsub.s32 4, %v424
    %v426 = vrot.slane %v277, %v425
    %428 = vbcast.lane.b32.xlu0 %v426, 256
    %v429 = vpop.permute.xlu0 %428
    %v430 = vlaneseq
    %v431 = vshrl.u32 %v430, 7
    %v432 = vsub.s32 5, %v431
    %v433 = vrot.slane %v277, %v432
    %435 = vbcast.lane.b32.xlu0 %v433, 256
    %v436 = vpop.permute.xlu0 %435
    %v437 = vlaneseq
    %v438 = vshrl.u32 %v437, 7
    %v439 = vsub.s32 6, %v438
    %v440 = vrot.slane %v277, %v439
    %442 = vbcast.lane.b32.xlu0 %v440, 256
    %v443 = vpop.permute.xlu0 %442
    %v444 = vlaneseq
    %v445 = vshrl.u32 %v444, 7
    %v446 = vsub.s32 7, %v445
    %v447 = vrot.slane %v277, %v446
    %449 = vbcast.lane.b32.xlu0 %v447, 256
    %v450 = vpop.permute.xlu0 %449
    %v451 = vlaneseq
    %v452 = vshrl.u32 %v451, 7
    %v453 = vsub.s32 0, %v452
    %v454 = vrot.slane %v280, %v453
    %456 = vbcast.lane.b32.xlu0 %v454, 256
    %v457 = vpop.permute.xlu0 %456
    %v458 = vlaneseq
    %v459 = vshrl.u32 %v458, 7
    %v460 = vsub.s32 1, %v459
    %v461 = vrot.slane %v280, %v460
    %463 = vbcast.lane.b32.xlu0 %v461, 256
    %v464 = vpop.permute.xlu0 %463
    %v465 = vlaneseq
    %v466 = vshrl.u32 %v465, 7
    %v467 = vsub.s32 2, %v466
    %v468 = vrot.slane %v280, %v467
    %470 = vbcast.lane.b32.xlu0 %v468, 256
    %v471 = vpop.permute.xlu0 %470
    %v472 = vlaneseq
    %v473 = vshrl.u32 %v472, 7
    %v474 = vsub.s32 3, %v473
    %v475 = vrot.slane %v280, %v474
    %477 = vbcast.lane.b32.xlu0 %v475, 256
    %v478 = vpop.permute.xlu0 %477
    %v479 = vlaneseq
    %v480 = vshrl.u32 %v479, 7
    %v481 = vsub.s32 4, %v480
    %v482 = vrot.slane %v280, %v481
    %484 = vbcast.lane.b32.xlu0 %v482, 256
    %v485 = vpop.permute.xlu0 %484
    %v486 = vlaneseq
    %v487 = vshrl.u32 %v486, 7
    %v488 = vsub.s32 5, %v487
    %v489 = vrot.slane %v280, %v488
    %491 = vbcast.lane.b32.xlu0 %v489, 256
    %v492 = vpop.permute.xlu0 %491
    %v493 = vlaneseq
    %v494 = vshrl.u32 %v493, 7
    %v495 = vsub.s32 6, %v494
    %v496 = vrot.slane %v280, %v495
    %498 = vbcast.lane.b32.xlu0 %v496, 256
    %v499 = vpop.permute.xlu0 %498
    %v500 = vlaneseq
    %v501 = vshrl.u32 %v500, 7
    %v502 = vsub.s32 7, %v501
    %v503 = vrot.slane %v280, %v502
    %505 = vbcast.lane.b32.xlu0 %v503, 256
    %v506 = vpop.permute.xlu0 %505
    %v511 = vcombine.high %v222, %v222
    %v513 = vunpack.c.l.s4 1966171168
    %v514 = vunpack.c.0.s8 %v513
    %v515 = vlaneseq
    %v516 = vshrl.u32 %v515, 7
    %v517 = vsub.s32 %v514, %v516
    %v518 = vrot.slane %v222, %v517
    %v520 = vunpack.c.l.s4 1966171168
    %v521 = vunpack.c.0.s8 %v520
    %v522 = vlaneseq
    %v523 = vshrl.u32 %v522, 7
    %v524 = vsub.s32 %v521, %v523
    %v525 = vrot.slane %v511, %v524
    %v526 = vcombine.high %v518, %v518
    %v527 = vcombine.high %v525, %v525
    %v529 = vunpack.c.l.s4 1966171168
    %v530 = vunpack.c.0.s8 %v529
    %v531 = vlaneseq
    %v532 = vshrl.u32 %v531, 7
    %v533 = vsub.s32 %v530, %v532
    %v534 = vrot.slane %v518, %v533
    %v536 = vunpack.c.l.s4 1966171168
    %v537 = vunpack.c.0.s8 %v536
    %v538 = vlaneseq
    %v539 = vshrl.u32 %v538, 7
    %v540 = vsub.s32 %v537, %v539
    %v541 = vrot.slane %v525, %v540
    %v543 = vunpack.c.l.s4 1966171168
    %v544 = vunpack.c.0.s8 %v543
    %v545 = vlaneseq
    %v546 = vshrl.u32 %v545, 7
    %v547 = vsub.s32 %v544, %v546
    %v548 = vrot.slane %v526, %v547
    %v550 = vunpack.c.l.s4 1966171168
    %v551 = vunpack.c.0.s8 %v550
    %v552 = vlaneseq
    %v553 = vshrl.u32 %v552, 7
    %v554 = vsub.s32 %v551, %v553
    %v555 = vrot.slane %v527, %v554
    %v556 = vcombine.high %v534, %v534
    %v557 = vcombine.high %v541, %v541
    %v558 = vcombine.high %v548, %v548
    %v559 = vcombine.high %v555, %v555
    %v560 = vcombine.high %v223, %v223
    %v562 = vunpack.c.l.s4 1966171168
    %v563 = vunpack.c.0.s8 %v562
    %v564 = vlaneseq
    %v565 = vshrl.u32 %v564, 7
    %v566 = vsub.s32 %v563, %v565
    %v567 = vrot.slane %v223, %v566
    %v569 = vunpack.c.l.s4 1966171168
    %v570 = vunpack.c.0.s8 %v569
    %v571 = vlaneseq
    %v572 = vshrl.u32 %v571, 7
    %v573 = vsub.s32 %v570, %v572
    %v574 = vrot.slane %v560, %v573
    %v575 = vcombine.high %v567, %v567
    %v576 = vcombine.high %v574, %v574
    %v578 = vunpack.c.l.s4 1966171168
    %v579 = vunpack.c.0.s8 %v578
    %v580 = vlaneseq
    %v581 = vshrl.u32 %v580, 7
    %v582 = vsub.s32 %v579, %v581
    %v583 = vrot.slane %v567, %v582
    %v585 = vunpack.c.l.s4 1966171168
    %v586 = vunpack.c.0.s8 %v585
    %v587 = vlaneseq
    %v588 = vshrl.u32 %v587, 7
    %v589 = vsub.s32 %v586, %v588
    %v590 = vrot.slane %v574, %v589
    %v592 = vunpack.c.l.s4 1966171168
    %v593 = vunpack.c.0.s8 %v592
    %v594 = vlaneseq
    %v595 = vshrl.u32 %v594, 7
    %v596 = vsub.s32 %v593, %v595
    %v597 = vrot.slane %v575, %v596
    %v599 = vunpack.c.l.s4 1966171168
    %v600 = vunpack.c.0.s8 %v599
    %v601 = vlaneseq
    %v602 = vshrl.u32 %v601, 7
    %v603 = vsub.s32 %v600, %v602
    %v604 = vrot.slane %v576, %v603
    %v605 = vcombine.high %v583, %v583
    %v606 = vcombine.high %v590, %v590
    %v607 = vcombine.high %v597, %v597
    %v608 = vcombine.high %v604, %v604
    %v609 = vcombine.high %v224, %v224
    %v611 = vunpack.c.l.s4 1966171168
    %v612 = vunpack.c.0.s8 %v611
    %v613 = vlaneseq
    %v614 = vshrl.u32 %v613, 7
    %v615 = vsub.s32 %v612, %v614
    %v616 = vrot.slane %v224, %v615
    %v618 = vunpack.c.l.s4 1966171168
    %v619 = vunpack.c.0.s8 %v618
    %v620 = vlaneseq
    %v621 = vshrl.u32 %v620, 7
    %v622 = vsub.s32 %v619, %v621
    %v623 = vrot.slane %v609, %v622
    %v624 = vcombine.high %v616, %v616
    %v625 = vcombine.high %v623, %v623
    %v627 = vunpack.c.l.s4 1966171168
    %v628 = vunpack.c.0.s8 %v627
    %v629 = vlaneseq
    %v630 = vshrl.u32 %v629, 7
    %v631 = vsub.s32 %v628, %v630
    %v632 = vrot.slane %v616, %v631
    %v634 = vunpack.c.l.s4 1966171168
    %v635 = vunpack.c.0.s8 %v634
    %v636 = vlaneseq
    %v637 = vshrl.u32 %v636, 7
    %v638 = vsub.s32 %v635, %v637
    %v639 = vrot.slane %v623, %v638
    %v641 = vunpack.c.l.s4 1966171168
    %v642 = vunpack.c.0.s8 %v641
    %v643 = vlaneseq
    %v644 = vshrl.u32 %v643, 7
    %v645 = vsub.s32 %v642, %v644
    %v646 = vrot.slane %v624, %v645
    %v648 = vunpack.c.l.s4 1966171168
    %v649 = vunpack.c.0.s8 %v648
    %v650 = vlaneseq
    %v651 = vshrl.u32 %v650, 7
    %v652 = vsub.s32 %v649, %v651
    %v653 = vrot.slane %v625, %v652
    %v654 = vcombine.high %v632, %v632
    %v655 = vcombine.high %v639, %v639
    %v656 = vcombine.high %v646, %v646
    %v657 = vcombine.high %v653, %v653
    %v658 = vcombine.high %v225, %v225
    %v660 = vunpack.c.l.s4 1966171168
    %v661 = vunpack.c.0.s8 %v660
    %v662 = vlaneseq
    %v663 = vshrl.u32 %v662, 7
    %v664 = vsub.s32 %v661, %v663
    %v665 = vrot.slane %v225, %v664
    %v667 = vunpack.c.l.s4 1966171168
    %v668 = vunpack.c.0.s8 %v667
    %v669 = vlaneseq
    %v670 = vshrl.u32 %v669, 7
    %v671 = vsub.s32 %v668, %v670
    %v672 = vrot.slane %v658, %v671
    %v673 = vcombine.high %v665, %v665
    %v674 = vcombine.high %v672, %v672
    %v676 = vunpack.c.l.s4 1966171168
    %v677 = vunpack.c.0.s8 %v676
    %v678 = vlaneseq
    %v679 = vshrl.u32 %v678, 7
    %v680 = vsub.s32 %v677, %v679
    %v681 = vrot.slane %v665, %v680
    %v683 = vunpack.c.l.s4 1966171168
    %v684 = vunpack.c.0.s8 %v683
    %v685 = vlaneseq
    %v686 = vshrl.u32 %v685, 7
    %v687 = vsub.s32 %v684, %v686
    %v688 = vrot.slane %v672, %v687
    %v690 = vunpack.c.l.s4 1966171168
    %v691 = vunpack.c.0.s8 %v690
    %v692 = vlaneseq
    %v693 = vshrl.u32 %v692, 7
    %v694 = vsub.s32 %v691, %v693
    %v695 = vrot.slane %v673, %v694
    %v697 = vunpack.c.l.s4 1966171168
    %v698 = vunpack.c.0.s8 %v697
    %v699 = vlaneseq
    %v700 = vshrl.u32 %v699, 7
    %v701 = vsub.s32 %v698, %v700
    %v702 = vrot.slane %v674, %v701
    %v703 = vcombine.high %v681, %v681
    %v704 = vcombine.high %v688, %v688
    %v705 = vcombine.high %v695, %v695
    %v706 = vcombine.high %v702, %v702
    %v707 = vlaneseq
    %v708 = vshrl.u32 %v707, 7
    %v709 = vsub.s32 0, %v708
    %v710 = vrot.slane %v534, %v709
    %v711 = vlaneseq
    %v712 = vshrl.u32 %v711, 7
    %v713 = vsub.s32 0, %v712
    %v714 = vrot.slane %v548, %v713
    %v715 = vlaneseq
    %v716 = vshrl.u32 %v715, 7
    %v717 = vsub.s32 0, %v716
    %v718 = vrot.slane %v556, %v717
    %v719 = vlaneseq
    %v720 = vshrl.u32 %v719, 7
    %v721 = vsub.s32 0, %v720
    %v722 = vrot.slane %v558, %v721
    %v723 = vlaneseq
    %v724 = vshrl.u32 %v723, 7
    %v725 = vsub.s32 0, %v724
    %v726 = vrot.slane %v541, %v725
    %v727 = vlaneseq
    %v728 = vshrl.u32 %v727, 7
    %v729 = vsub.s32 0, %v728
    %v730 = vrot.slane %v555, %v729
    %v731 = vlaneseq
    %v732 = vshrl.u32 %v731, 7
    %v733 = vsub.s32 0, %v732
    %v734 = vrot.slane %v557, %v733
    %v735 = vlaneseq
    %v736 = vshrl.u32 %v735, 7
    %v737 = vsub.s32 0, %v736
    %v738 = vrot.slane %v559, %v737
    %v739 = vlaneseq
    %v740 = vshrl.u32 %v739, 7
    %v741 = vsub.s32 0, %v740
    %v742 = vrot.slane %v583, %v741
    %v743 = vlaneseq
    %v744 = vshrl.u32 %v743, 7
    %v745 = vsub.s32 0, %v744
    %v746 = vrot.slane %v597, %v745
    %v747 = vlaneseq
    %v748 = vshrl.u32 %v747, 7
    %v749 = vsub.s32 0, %v748
    %v750 = vrot.slane %v605, %v749
    %v751 = vlaneseq
    %v752 = vshrl.u32 %v751, 7
    %v753 = vsub.s32 0, %v752
    %v754 = vrot.slane %v607, %v753
    %v755 = vlaneseq
    %v756 = vshrl.u32 %v755, 7
    %v757 = vsub.s32 0, %v756
    %v758 = vrot.slane %v590, %v757
    %v759 = vlaneseq
    %v760 = vshrl.u32 %v759, 7
    %v761 = vsub.s32 0, %v760
    %v762 = vrot.slane %v604, %v761
    %v763 = vlaneseq
    %v764 = vshrl.u32 %v763, 7
    %v765 = vsub.s32 0, %v764
    %v766 = vrot.slane %v606, %v765
    %v767 = vlaneseq
    %v768 = vshrl.u32 %v767, 7
    %v769 = vsub.s32 0, %v768
    %v770 = vrot.slane %v608, %v769
    %v771 = vlaneseq
    %v772 = vshrl.u32 %v771, 7
    %v773 = vsub.s32 0, %v772
    %v774 = vrot.slane %v632, %v773
    %v775 = vlaneseq
    %v776 = vshrl.u32 %v775, 7
    %v777 = vsub.s32 0, %v776
    %v778 = vrot.slane %v646, %v777
    %v779 = vlaneseq
    %v780 = vshrl.u32 %v779, 7
    %v781 = vsub.s32 0, %v780
    %v782 = vrot.slane %v654, %v781
    %v783 = vlaneseq
    %v784 = vshrl.u32 %v783, 7
    %v785 = vsub.s32 0, %v784
    %v786 = vrot.slane %v656, %v785
    %v787 = vlaneseq
    %v788 = vshrl.u32 %v787, 7
    %v789 = vsub.s32 0, %v788
    %v790 = vrot.slane %v639, %v789
    %v791 = vlaneseq
    %v792 = vshrl.u32 %v791, 7
    %v793 = vsub.s32 0, %v792
    %v794 = vrot.slane %v653, %v793
    %v795 = vlaneseq
    %v796 = vshrl.u32 %v795, 7
    %v797 = vsub.s32 0, %v796
    %v798 = vrot.slane %v655, %v797
    %v799 = vlaneseq
    %v800 = vshrl.u32 %v799, 7
    %v801 = vsub.s32 0, %v800
    %v802 = vrot.slane %v657, %v801
    %v803 = vlaneseq
    %v804 = vshrl.u32 %v803, 7
    %v805 = vsub.s32 0, %v804
    %v806 = vrot.slane %v681, %v805
    %v807 = vlaneseq
    %v808 = vshrl.u32 %v807, 7
    %v809 = vsub.s32 0, %v808
    %v810 = vrot.slane %v695, %v809
    %v811 = vlaneseq
    %v812 = vshrl.u32 %v811, 7
    %v813 = vsub.s32 0, %v812
    %v814 = vrot.slane %v703, %v813
    %v815 = vlaneseq
    %v816 = vshrl.u32 %v815, 7
    %v817 = vsub.s32 0, %v816
    %v818 = vrot.slane %v705, %v817
    %v819 = vlaneseq
    %v820 = vshrl.u32 %v819, 7
    %v821 = vsub.s32 0, %v820
    %v822 = vrot.slane %v688, %v821
    %v823 = vlaneseq
    %v824 = vshrl.u32 %v823, 7
    %v825 = vsub.s32 0, %v824
    %v826 = vrot.slane %v702, %v825
    %v827 = vlaneseq
    %v828 = vshrl.u32 %v827, 7
    %v829 = vsub.s32 0, %v828
    %v830 = vrot.slane %v704, %v829
    %v831 = vlaneseq
    %v832 = vshrl.u32 %v831, 7
    %v833 = vsub.s32 0, %v832
    %v834 = vrot.slane %v706, %v833
    %v867 = vmul.f32 %v289, %v710
    %v868 = vmul.f32 %v296, %v714
    %v869 = vmul.f32 %v303, %v718
    %v870 = vmul.f32 %v310, %v722
    %v871 = vmul.f32 %v317, %v726
    %v872 = vmul.f32 %v324, %v730
    %v873 = vmul.f32 %v331, %v734
    %v874 = vmul.f32 %v338, %v738
    %v875 = vmul.f32 %v345, %v742
    %v876 = vmul.f32 %v352, %v746
    %v877 = vmul.f32 %v359, %v750
    %v878 = vmul.f32 %v366, %v754
    %v879 = vmul.f32 %v373, %v758
    %v880 = vmul.f32 %v380, %v762
    %v881 = vmul.f32 %v387, %v766
    %v882 = vmul.f32 %v394, %v770
    %v883 = vmul.f32 %v401, %v774
    %v884 = vmul.f32 %v408, %v778
    %v885 = vmul.f32 %v415, %v782
    %v886 = vmul.f32 %v422, %v786
    %v887 = vmul.f32 %v429, %v790
    %v888 = vmul.f32 %v436, %v794
    %v889 = vmul.f32 %v443, %v798
    %v890 = vmul.f32 %v450, %v802
    %v891 = vmul.f32 %v457, %v806
    %v892 = vmul.f32 %v464, %v810
    %v893 = vmul.f32 %v471, %v814
    %v894 = vmul.f32 %v478, %v818
    %v895 = vmul.f32 %v485, %v822
    %v896 = vmul.f32 %v492, %v826
    %v897 = vmul.f32 %v499, %v830
    %v898 = vmul.f32 %v506, %v834
    %v899 = vcombine.low %v867, %v869
    %v901 = vunpack.c.l.s4 1983009808
    %v902 = vunpack.c.0.s8 %v901
    %v903 = vlaneseq
    %v904 = vshrl.u32 %v903, 7
    %v905 = vsub.s32 %v902, %v904
    %v906 = vrot.slane %v899, %v905
    %v907 = vcombine.low %v868, %v870
    %v909 = vunpack.c.l.s4 1983009808
    %v910 = vunpack.c.0.s8 %v909
    %v911 = vlaneseq
    %v912 = vshrl.u32 %v911, 7
    %v913 = vsub.s32 %v910, %v912
    %v914 = vrot.slane %v907, %v913
    %v915 = vcombine.low %v871, %v873
    %v917 = vunpack.c.l.s4 1983009808
    %v918 = vunpack.c.0.s8 %v917
    %v919 = vlaneseq
    %v920 = vshrl.u32 %v919, 7
    %v921 = vsub.s32 %v918, %v920
    %v922 = vrot.slane %v915, %v921
    %v923 = vcombine.low %v872, %v874
    %v925 = vunpack.c.l.s4 1983009808
    %v926 = vunpack.c.0.s8 %v925
    %v927 = vlaneseq
    %v928 = vshrl.u32 %v927, 7
    %v929 = vsub.s32 %v926, %v928
    %v930 = vrot.slane %v923, %v929
    %v931 = vcombine.low %v906, %v914
    %v932 = vcombine.high %v906, %v914
    %v934 = vunpack.c.l.s4 1934713408
    %v935 = vunpack.c.0.s8 %v934
    %v936 = vlaneseq
    %v937 = vshrl.u32 %v936, 7
    %v938 = vsub.s32 %v935, %v937
    %v939 = vrot.slane %v931, %v938
    %v941 = vunpack.c.l.s4 1934713408
    %v942 = vunpack.c.0.s8 %v941
    %v943 = vlaneseq
    %v944 = vshrl.u32 %v943, 7
    %v945 = vsub.s32 %v942, %v944
    %v946 = vrot.slane %v932, %v945
    %v947 = vcombine.low %v922, %v930
    %v948 = vcombine.high %v922, %v930
    %v950 = vunpack.c.l.s4 1934713408
    %v951 = vunpack.c.0.s8 %v950
    %v952 = vlaneseq
    %v953 = vshrl.u32 %v952, 7
    %v954 = vsub.s32 %v951, %v953
    %v955 = vrot.slane %v947, %v954
    %v957 = vunpack.c.l.s4 1934713408
    %v958 = vunpack.c.0.s8 %v957
    %v959 = vlaneseq
    %v960 = vshrl.u32 %v959, 7
    %v961 = vsub.s32 %v958, %v960
    %v962 = vrot.slane %v948, %v961
    %v963 = vcombine.low %v939, %v955
    %v964 = vcombine.high %v939, %v955
    %v965 = vcombine.low %v946, %v962
    %v966 = vcombine.high %v946, %v962
    %v967 = vcombine.low %v875, %v877
    %v969 = vunpack.c.l.s4 1983009808
    %v970 = vunpack.c.0.s8 %v969
    %v971 = vlaneseq
    %v972 = vshrl.u32 %v971, 7
    %v973 = vsub.s32 %v970, %v972
    %v974 = vrot.slane %v967, %v973
    %v975 = vcombine.low %v876, %v878
    %v977 = vunpack.c.l.s4 1983009808
    %v978 = vunpack.c.0.s8 %v977
    %v979 = vlaneseq
    %v980 = vshrl.u32 %v979, 7
    %v981 = vsub.s32 %v978, %v980
    %v982 = vrot.slane %v975, %v981
    %v983 = vcombine.low %v879, %v881
    %v985 = vunpack.c.l.s4 1983009808
    %v986 = vunpack.c.0.s8 %v985
    %v987 = vlaneseq
    %v988 = vshrl.u32 %v987, 7
    %v989 = vsub.s32 %v986, %v988
    %v990 = vrot.slane %v983, %v989
    %v991 = vcombine.low %v880, %v882
    %v993 = vunpack.c.l.s4 1983009808
    %v994 = vunpack.c.0.s8 %v993
    %v995 = vlaneseq
    %v996 = vshrl.u32 %v995, 7
    %v997 = vsub.s32 %v994, %v996
    %v998 = vrot.slane %v991, %v997
    %v999 = vcombine.low %v974, %v982
    %v1000 = vcombine.high %v974, %v982
    %v1002 = vunpack.c.l.s4 1934713408
    %v1003 = vunpack.c.0.s8 %v1002
    %v1004 = vlaneseq
    %v1005 = vshrl.u32 %v1004, 7
    %v1006 = vsub.s32 %v1003, %v1005
    %v1007 = vrot.slane %v999, %v1006
    %v1009 = vunpack.c.l.s4 1934713408
    %v1010 = vunpack.c.0.s8 %v1009
    %v1011 = vlaneseq
    %v1012 = vshrl.u32 %v1011, 7
    %v1013 = vsub.s32 %v1010, %v1012
    %v1014 = vrot.slane %v1000, %v1013
    %v1015 = vcombine.low %v990, %v998
    %v1016 = vcombine.high %v990, %v998
    %v1018 = vunpack.c.l.s4 1934713408
    %v1019 = vunpack.c.0.s8 %v1018
    %v1020 = vlaneseq
    %v1021 = vshrl.u32 %v1020, 7
    %v1022 = vsub.s32 %v1019, %v1021
    %v1023 = vrot.slane %v1015, %v1022
    %v1025 = vunpack.c.l.s4 1934713408
    %v1026 = vunpack.c.0.s8 %v1025
    %v1027 = vlaneseq
    %v1028 = vshrl.u32 %v1027, 7
    %v1029 = vsub.s32 %v1026, %v1028
    %v1030 = vrot.slane %v1016, %v1029
    %v1031 = vcombine.low %v1007, %v1023
    %v1032 = vcombine.high %v1007, %v1023
    %v1033 = vcombine.low %v1014, %v1030
    %v1034 = vcombine.high %v1014, %v1030
    %v1035 = vcombine.low %v883, %v885
    %v1037 = vunpack.c.l.s4 1983009808
    %v1038 = vunpack.c.0.s8 %v1037
    %v1039 = vlaneseq
    %v1040 = vshrl.u32 %v1039, 7
    %v1041 = vsub.s32 %v1038, %v1040
    %v1042 = vrot.slane %v1035, %v1041
    %v1043 = vcombine.low %v884, %v886
    %v1045 = vunpack.c.l.s4 1983009808
    %v1046 = vunpack.c.0.s8 %v1045
    %v1047 = vlaneseq
    %v1048 = vshrl.u32 %v1047, 7
    %v1049 = vsub.s32 %v1046, %v1048
    %v1050 = vrot.slane %v1043, %v1049
    %v1051 = vcombine.low %v887, %v889
    %v1053 = vunpack.c.l.s4 1983009808
    %v1054 = vunpack.c.0.s8 %v1053
    %v1055 = vlaneseq
    %v1056 = vshrl.u32 %v1055, 7
    %v1057 = vsub.s32 %v1054, %v1056
    %v1058 = vrot.slane %v1051, %v1057
    %v1059 = vcombine.low %v888, %v890
    %v1061 = vunpack.c.l.s4 1983009808
    %v1062 = vunpack.c.0.s8 %v1061
    %v1063 = vlaneseq
    %v1064 = vshrl.u32 %v1063, 7
    %v1065 = vsub.s32 %v1062, %v1064
    %v1066 = vrot.slane %v1059, %v1065
    %v1067 = vcombine.low %v1042, %v1050
    %v1068 = vcombine.high %v1042, %v1050
    %v1070 = vunpack.c.l.s4 1934713408
    %v1071 = vunpack.c.0.s8 %v1070
    %v1072 = vlaneseq
    %v1073 = vshrl.u32 %v1072, 7
    %v1074 = vsub.s32 %v1071, %v1073
    %v1075 = vrot.slane %v1067, %v1074
    %v1077 = vunpack.c.l.s4 1934713408
    %v1078 = vunpack.c.0.s8 %v1077
    %v1079 = vlaneseq
    %v1080 = vshrl.u32 %v1079, 7
    %v1081 = vsub.s32 %v1078, %v1080
    %v1082 = vrot.slane %v1068, %v1081
    %v1083 = vcombine.low %v1058, %v1066
    %v1084 = vcombine.high %v1058, %v1066
    %v1086 = vunpack.c.l.s4 1934713408
    %v1087 = vunpack.c.0.s8 %v1086
    %v1088 = vlaneseq
    %v1089 = vshrl.u32 %v1088, 7
    %v1090 = vsub.s32 %v1087, %v1089
    %v1091 = vrot.slane %v1083, %v1090
    %v1093 = vunpack.c.l.s4 1934713408
    %v1094 = vunpack.c.0.s8 %v1093
    %v1095 = vlaneseq
    %v1096 = vshrl.u32 %v1095, 7
    %v1097 = vsub.s32 %v1094, %v1096
    %v1098 = vrot.slane %v1084, %v1097
    %v1099 = vcombine.low %v1075, %v1091
    %v1100 = vcombine.high %v1075, %v1091
    %v1101 = vcombine.low %v1082, %v1098
    %v1102 = vcombine.high %v1082, %v1098
    %v1103 = vcombine.low %v891, %v893
    %v1105 = vunpack.c.l.s4 1983009808
    %v1106 = vunpack.c.0.s8 %v1105
    %v1107 = vlaneseq
    %v1108 = vshrl.u32 %v1107, 7
    %v1109 = vsub.s32 %v1106, %v1108
    %v1110 = vrot.slane %v1103, %v1109
    %v1111 = vcombine.low %v892, %v894
    %v1113 = vunpack.c.l.s4 1983009808
    %v1114 = vunpack.c.0.s8 %v1113
    %v1115 = vlaneseq
    %v1116 = vshrl.u32 %v1115, 7
    %v1117 = vsub.s32 %v1114, %v1116
    %v1118 = vrot.slane %v1111, %v1117
    %v1119 = vcombine.low %v895, %v897
    %v1121 = vunpack.c.l.s4 1983009808
    %v1122 = vunpack.c.0.s8 %v1121
    %v1123 = vlaneseq
    %v1124 = vshrl.u32 %v1123, 7
    %v1125 = vsub.s32 %v1122, %v1124
    %v1126 = vrot.slane %v1119, %v1125
    %v1127 = vcombine.low %v896, %v898
    %v1129 = vunpack.c.l.s4 1983009808
    %v1130 = vunpack.c.0.s8 %v1129
    %v1131 = vlaneseq
    %v1132 = vshrl.u32 %v1131, 7
    %v1133 = vsub.s32 %v1130, %v1132
    %v1134 = vrot.slane %v1127, %v1133
    %v1135 = vcombine.low %v1110, %v1118
    %v1136 = vcombine.high %v1110, %v1118
    %v1138 = vunpack.c.l.s4 1934713408
    %v1139 = vunpack.c.0.s8 %v1138
    %v1140 = vlaneseq
    %v1141 = vshrl.u32 %v1140, 7
    %v1142 = vsub.s32 %v1139, %v1141
    %v1143 = vrot.slane %v1135, %v1142
    %v1145 = vunpack.c.l.s4 1934713408
    %v1146 = vunpack.c.0.s8 %v1145
    %v1147 = vlaneseq
    %v1148 = vshrl.u32 %v1147, 7
    %v1149 = vsub.s32 %v1146, %v1148
    %v1150 = vrot.slane %v1136, %v1149
    %v1151 = vcombine.low %v1126, %v1134
    %v1152 = vcombine.high %v1126, %v1134
    %v1154 = vunpack.c.l.s4 1934713408
    %v1155 = vunpack.c.0.s8 %v1154
    %v1156 = vlaneseq
    %v1157 = vshrl.u32 %v1156, 7
    %v1158 = vsub.s32 %v1155, %v1157
    %v1159 = vrot.slane %v1151, %v1158
    %v1161 = vunpack.c.l.s4 1934713408
    %v1162 = vunpack.c.0.s8 %v1161
    %v1163 = vlaneseq
    %v1164 = vshrl.u32 %v1163, 7
    %v1165 = vsub.s32 %v1162, %v1164
    %v1166 = vrot.slane %v1152, %v1165
    %v1167 = vcombine.low %v1143, %v1159
    %v1168 = vcombine.high %v1143, %v1159
    %v1169 = vcombine.low %v1150, %v1166
    %v1170 = vcombine.high %v1150, %v1166
    %1175 = vrot.lane.b32.xlu0 %v964, 16
    %v1176 = vpop.permute.xlu0 %1175
    %1177 = vrot.lane.b32.xlu0 %v1032, 16
    %v1178 = vpop.permute.xlu0 %1177
    %1179 = vrot.lane.b32.xlu0 %v1100, 16
    %v1180 = vpop.permute.xlu0 %1179
    %1181 = vrot.lane.b32.xlu0 %v1168, 16
    %v1182 = vpop.permute.xlu0 %1181
    %1191 = vrot.lane.b32.xlu0 %v965, 32
    %v1192 = vpop.permute.xlu0 %1191
    %1193 = vrot.lane.b32.xlu0 %v1033, 32
    %v1194 = vpop.permute.xlu0 %1193
    %1195 = vrot.lane.b32.xlu0 %v1101, 32
    %v1196 = vpop.permute.xlu0 %1195
    %1197 = vrot.lane.b32.xlu0 %v1169, 32
    %v1198 = vpop.permute.xlu0 %1197
    %1207 = vrot.lane.b32.xlu0 %v966, 48
    %v1208 = vpop.permute.xlu0 %1207
    %1209 = vrot.lane.b32.xlu0 %v1034, 48
    %v1210 = vpop.permute.xlu0 %1209
    %1211 = vrot.lane.b32.xlu0 %v1102, 48
    %v1212 = vpop.permute.xlu0 %1211
    %1213 = vrot.lane.b32.xlu0 %v1170, 48
    %v1214 = vpop.permute.xlu0 %1213
    %v1219 = vsel %vm227, %v963, %v1176
    %v1220 = vsel %vm227, %v1031, %v1178
    %v1221 = vsel %vm227, %v1099, %v1180
    %v1222 = vsel %vm227, %v1167, %v1182
    %vm1223 = vcmask 261120
    %v1224 = vsel %vm1223, %v1219, %v1192
    %v1225 = vsel %vm1223, %v1220, %v1194
    %v1226 = vsel %vm1223, %v1221, %v1196
    %v1227 = vsel %vm1223, %v1222, %v1198
    %vm1228 = vcmask 392192
    %v1229 = vsel %vm1228, %v1224, %v1208
    %v1230 = vsel %vm1228, %v1225, %v1210
    %v1231 = vsel %vm1228, %v1226, %v1212
    %v1232 = vsel %vm1228, %v1227, %v1214
    %v1233 = vpack.c.bf16 %v1230, %v1229
    %v1234 = vpack.c.bf16 %v1232, %v1231
    %v1235 = vld [vmem:[%s9] sm:$0xf]
    %v1236 = vld [vmem:[%s9 + $0x4] sm:$0xf]
    %v1237 = vld [vmem:[%s9 + $0x8] sm:$0xf]
    %v1238 = vld [vmem:[%s9 + $0xc] sm:$0xf]
    %v1239 = vld [vmem:[%s9 + $0x10] sm:$0xf]
    %v1240 = vld [vmem:[%s9 + $0x14] sm:$0xf]
    %v1241 = vld [vmem:[%s9 + $0x18] sm:$0xf]
    %v1242 = vld [vmem:[%s9 + $0x1c] sm:$0xf]
    %v1243 = vld [vmem:[%s10] sm:$0xf]
    %vm1244 = vcmask 31744
    %v1246 = vsel %vm1244, %v269, 0
    %v1249 = vsel %vm1244, %v272, 0
    %v1252 = vsel %vm1244, %v277, 0
    %v1255 = vsel %vm1244, %v280, 0
    %vm1257 = vcmask 1043456
    %v1259 = vsel %vm1257, %v1243, 0
    %1261 = vmatprep.subr.mxu0 0.0
    %1262 = vmatpush1.msra.mxu0 0.0
    %1263 = vmatprep.subr.mxu0 0.0
    %1264 = vmatpush1.msra.mxu0 0.0
    %1265 = vmatprep.subr.mxu0 0.0
    %1266 = vmatpush1.msra.mxu0 0.0
    %1267 = vmatprep.subr.mxu0 0.0
    %1268 = vmatpush1.msra.mxu0 0.0
    %1269 = vmatprep.subr.mxu0 0.0
    %1270 = vmatpush1.msra.mxu0 0.0
    %1271 = vmatprep.subr.mxu0 0.0
    %1272 = vmatpush1.msra.mxu0 0.0
    %1273 = vmatprep.subr.mxu0 0.0
    %1274 = vmatpush1.msra.mxu0 0.0
    %1275 = vmatprep.subr.mxu0 0.0
    %1276 = vmatpush1.msra.mxu0 0.0
    %1277 = vmatprep.subr.mxu0 0.0
    %1278 = vmatpush1.msra.mxu0 0.0
    %1279 = vmatprep.subr.mxu0 0.0
    %1280 = vmatpush1.msra.mxu0 0.0
    %1281 = vmatprep.subr.mxu0 0.0
    %1282 = vmatpush1.msra.mxu0 0.0
    %1283 = vmatprep.subr.mxu0 0.0
    %1284 = vmatpush1.msra.mxu0 0.0
    %1285 = vmatprep.subr.mxu0 0.0
    %1286 = vmatpush1.msra.mxu0 0.0
    %1287 = vmatprep.subr.mxu0 0.0
    %1288 = vmatpush1.msra.mxu0 0.0
    %1289 = vmatprep.subr.mxu0 0.0
    %1290 = vmatpush1.msra.mxu0 0.0
    %1291 = vmatprep.subr.mxu0 0.0
    %1292 = vmatpush1.msra.mxu0 %v1259
    %1293 = vmatprep.subr.mxu0 0.0
    %1294 = vmatpush2.msra.mxu0 0.0
    %1295 = vmatprep.subr.mxu0 0.0
    %1296 = vmatpush2.msra.mxu0 0.0
    %1297 = vmatprep.subr.mxu0 0.0
    %1298 = vmatpush2.msra.mxu0 0.0
    %1299 = vmatprep.subr.mxu0 0.0
    %1300 = vmatpush2.msra.mxu0 0.0
    %1301 = vmatprep.subr.mxu0 0.0
    %1302 = vmatpush2.msra.mxu0 0.0
    %1303 = vmatprep.subr.mxu0 0.0
    %1304 = vmatpush2.msra.mxu0 0.0
    %1305 = vmatprep.subr.mxu0 0.0
    %1306 = vmatpush2.msra.mxu0 0.0
    %1307 = vmatprep.subr.mxu0 0.0
    %1308 = vmatpush2.msra.mxu0 0.0
    %1309 = vmatprep.subr.mxu0 0.0
    %1310 = vmatpush2.msra.mxu0 0.0
    %1311 = vmatprep.subr.mxu0 0.0
    %1312 = vmatpush2.msra.mxu0 0.0
    %1313 = vmatprep.subr.mxu0 0.0
    %1314 = vmatpush2.msra.mxu0 0.0
    %1315 = vmatprep.subr.mxu0 0.0
    %1316 = vmatpush2.msra.mxu0 0.0
    %1317 = vmatprep.subr.mxu0 0.0
    %1318 = vmatpush2.msra.mxu0 0.0
    %1319 = vmatprep.subr.mxu0 0.0
    %1320 = vmatpush2.msra.mxu0 0.0
    %1321 = vmatprep.subr.mxu0 0.0
    %1322 = vmatpush2.msra.mxu0 0.0
    %1323 = vmatprep.subr.mxu0 0.0
    %1324 = vmatpush2.msra.mxu0 0.0
    %1325 = vmatprep.mubr.f32.mxu0 0.0
    %1326 = vmatmul.mubr.f32.gmra.mxu0 %v1246
    %v1327 = vpop.f32.mrf.mxu0
    %v1328 = vadd.f32 0.0, %v1327
    %v1329 = vpop.f32.mrf.mxu0
    %1330 = vmatprep.mubr.f32.mxu0 0.0
    %1331 = vmatmul.mubr.f32.gmra.mxu0 %v1249
    %v1332 = vpop.f32.mrf.mxu0
    %v1333 = vadd.f32 0.0, %v1332
    %v1334 = vpop.f32.mrf.mxu0
    %1335 = vmatprep.mubr.f32.mxu0 0.0
    %1336 = vmatmul.mubr.f32.gmra.mxu0 %v1252
    %v1337 = vpop.f32.mrf.mxu0
    %v1338 = vadd.f32 0.0, %v1337
    %v1339 = vpop.f32.mrf.mxu0
    %1340 = vmatprep.mubr.f32.mxu0 0.0
    %1341 = vmatmul.mubr.f32.gmra.mxu0 %v1255
    %v1342 = vpop.f32.mrf.mxu0
    %v1343 = vadd.f32 0.0, %v1342
    %v1344 = vpop.f32.mrf.mxu0
    %1345 = vdwg.mxu0
    %v1354 = vunpack.c.l.b16 %v1235
    %v1355 = vunpack.c.l.b16 %v1236
    %v1356 = vunpack.c.l.b16 %v1237
    %v1357 = vunpack.c.l.b16 %v1238
    %v1358 = vunpack.c.l.b16 %v1239
    %v1359 = vunpack.c.l.b16 %v1240
    %v1360 = vunpack.c.l.b16 %v1241
    %v1361 = vunpack.c.l.b16 %v1242
    %v1362 = vpack.c.b16 %v1355, %v1354
    %v1363 = vpack.c.b16 %v1357, %v1356
    %v1364 = vpack.c.b16 %v1359, %v1358
    %v1365 = vpack.c.b16 %v1361, %v1360
    %vm1370 = vcmask 523264
    %v1372 = vsel %vm1370, %v1233, 0
    %v1375 = vsel %vm1370, %v1234, 0
    %1377 = vmatprep.subr.bf16.mxu0 0
    %1378 = vmatpush1.bf16.msra.mxu0 0
    %1379 = vmatprep.subr.bf16.mxu0 0
    %1380 = vmatpush1.bf16.msra.mxu0 0
    %1381 = vmatprep.subr.bf16.mxu0 0
    %1382 = vmatpush1.bf16.msra.mxu0 0
    %1383 = vmatprep.subr.bf16.mxu0 0
    %1384 = vmatpush1.bf16.msra.mxu0 0
    %1385 = vmatprep.subr.bf16.mxu0 0
    %1386 = vmatpush1.bf16.msra.mxu0 %v1365
    %1387 = vmatprep.subr.bf16.mxu0 0
    %1388 = vmatpush1.bf16.msra.mxu0 %v1364
    %1389 = vmatprep.subr.bf16.mxu0 0
    %1390 = vmatpush1.bf16.msra.mxu0 %v1363
    %1391 = vmatprep.subr.bf16.mxu0 0
    %1392 = vmatpush1.bf16.msra.mxu0 %v1362
    %1393 = vmatprep.subr.bf16.mxu0 0
    %1394 = vmatpush2.bf16.msra.mxu0 0
    %1395 = vmatprep.subr.bf16.mxu0 0
    %1396 = vmatpush2.bf16.msra.mxu0 0
    %1397 = vmatprep.subr.bf16.mxu0 0
    %1398 = vmatpush2.bf16.msra.mxu0 0
    %1399 = vmatprep.subr.bf16.mxu0 0
    %1400 = vmatpush2.bf16.msra.mxu0 0
    %1401 = vmatprep.subr.bf16.mxu0 0
    %1402 = vmatpush2.bf16.msra.mxu0 0
    %1403 = vmatprep.subr.bf16.mxu0 0
    %1404 = vmatpush2.bf16.msra.mxu0 0
    %1405 = vmatprep.subr.bf16.mxu0 0
    %1406 = vmatpush2.bf16.msra.mxu0 0
    %1407 = vmatprep.subr.bf16.mxu0 0
    %1408 = vmatpush2.bf16.msra.mxu0 0
    %1409 = vmatprep.mubr.bf16.mxu0 0
    %1410 = vmatmul.mubr.bf16.gmra.mxu0 %v1372
    %v1411 = vpop.f32.mrf.mxu0
    %v1412 = vadd.f32 %v1328, %v1411
    %v1413 = vpop.f32.mrf.mxu0
    %v1414 = vpop.f32.mrf.mxu0
    %v1415 = vadd.f32 %v1333, %v1414
    %v1416 = vpop.f32.mrf.mxu0
    %1417 = vmatprep.mubr.bf16.mxu0 0
    %1418 = vmatmul.mubr.bf16.gmra.mxu0 %v1375
    %v1419 = vpop.f32.mrf.mxu0
    %v1420 = vadd.f32 %v1338, %v1419
    %v1421 = vpop.f32.mrf.mxu0
    %v1422 = vpop.f32.mrf.mxu0
    %v1423 = vadd.f32 %v1343, %v1422
    %v1424 = vpop.f32.mrf.mxu0
    %1425 = vdwg.mxu0
    %v1426 = vpack.c.bf16 %v1415, %v1412
    %v1427 = vpack.c.bf16 %v1423, %v1420
    %v1429 = vsel %vm1223, %v131, 0
    %1431 = vmatprep.subr.bf16.mxu0 0
    %1432 = vmatpush1.bf16.msra.mxu0 0
    %1433 = vmatprep.subr.bf16.mxu0 0
    %1434 = vmatpush1.bf16.msra.mxu0 0
    %1435 = vmatprep.subr.bf16.mxu0 0
    %1436 = vmatpush1.bf16.msra.mxu0 0
    %1437 = vmatprep.subr.bf16.mxu0 0
    %1438 = vmatpush1.bf16.msra.mxu0 0
    %1439 = vmatprep.subr.bf16.mxu0 0
    %1440 = vmatpush1.bf16.msra.mxu0 0
    %1441 = vmatprep.subr.bf16.mxu0 0
    %1442 = vmatpush1.bf16.msra.mxu0 0
    %1443 = vmatprep.subr.bf16.mxu0 0
    %1444 = vmatpush1.bf16.msra.mxu0 %v1427
    %1445 = vmatprep.subr.bf16.mxu0 0
    %1446 = vmatpush1.bf16.msra.mxu0 %v1426
    %1447 = vmatprep.subr.bf16.mxu0 0
    %1448 = vmatpush2.bf16.msra.mxu0 0
    %1449 = vmatprep.subr.bf16.mxu0 0
    %1450 = vmatpush2.bf16.msra.mxu0 0
    %1451 = vmatprep.subr.bf16.mxu0 0
    %1452 = vmatpush2.bf16.msra.mxu0 0
    %1453 = vmatprep.subr.bf16.mxu0 0
    %1454 = vmatpush2.bf16.msra.mxu0 0
    %1455 = vmatprep.subr.bf16.mxu0 0
    %1456 = vmatpush2.bf16.msra.mxu0 0
    %1457 = vmatprep.subr.bf16.mxu0 0
    %1458 = vmatpush2.bf16.msra.mxu0 0
    %1459 = vmatprep.subr.bf16.mxu0 0
    %1460 = vmatpush2.bf16.msra.mxu0 0
    %1461 = vmatprep.subr.bf16.mxu0 0
    %1462 = vmatpush2.bf16.msra.mxu0 0
    %1463 = vmatprep.mubr.bf16.mxu0 0
    %1464 = vmatmul.mubr.bf16.gmra.mxu0 %v1429
    %v1465 = vpop.f32.mrf.mxu0
    %v1466 = vadd.f32 0.0, %v1465
    %v1467 = vpop.f32.mrf.mxu0
    %v1468 = vpop.f32.mrf.mxu0
    %v1469 = vadd.f32 0.0, %v1468
    %v1470 = vpop.f32.mrf.mxu0
    %1471 = vdwg.mxu0
    %1473 = vset.pattern.permute.xlu0 0
    %1474 = vperm.xlu0 %1473, %v142
    %v1475 = vpop.permute.xlu0 %1474
    %1478 = vset.pattern.permute.xlu0 0
    %1479 = vperm.xlu0 %1478, %v143
    %v1480 = vpop.permute.xlu0 %1479
    %v1482 = vmul.f32 %v1466, %v1475
    %v1483 = vmul.f32 %v1469, %v1480
    %v1484 = vld [vmem:[%s11] sm:$0x3]
    %v1486 = vsel %vm1244, %v226, 0
    %vm1488 = vcmask 1041408
    %v1490 = vsel %vm1488, %v1484, 0
    %1492 = vmatprep.subr.bf16.mxu0 0
    %1493 = vmatpush1.bf16.msra.mxu0 0
    %1494 = vmatprep.subr.bf16.mxu0 0
    %1495 = vmatpush1.bf16.msra.mxu0 0
    %1496 = vmatprep.subr.bf16.mxu0 0
    %1497 = vmatpush1.bf16.msra.mxu0 0
    %1498 = vmatprep.subr.bf16.mxu0 0
    %1499 = vmatpush1.bf16.msra.mxu0 0
    %1500 = vmatprep.subr.bf16.mxu0 0
    %1501 = vmatpush1.bf16.msra.mxu0 0
    %1502 = vmatprep.subr.bf16.mxu0 0
    %1503 = vmatpush1.bf16.msra.mxu0 0
    %1504 = vmatprep.subr.bf16.mxu0 0
    %1505 = vmatpush1.bf16.msra.mxu0 0
    %1506 = vmatprep.subr.bf16.mxu0 0
    %1507 = vmatpush1.bf16.msra.mxu0 %v1490
    %1508 = vmatprep.subr.bf16.mxu0 0
    %1509 = vmatpush2.bf16.msra.mxu0 0
    %1510 = vmatprep.subr.bf16.mxu0 0
    %1511 = vmatpush2.bf16.msra.mxu0 0
    %1512 = vmatprep.subr.bf16.mxu0 0
    %1513 = vmatpush2.bf16.msra.mxu0 0
    %1514 = vmatprep.subr.bf16.mxu0 0
    %1515 = vmatpush2.bf16.msra.mxu0 0
    %1516 = vmatprep.subr.bf16.mxu0 0
    %1517 = vmatpush2.bf16.msra.mxu0 0
    %1518 = vmatprep.subr.bf16.mxu0 0
    %1519 = vmatpush2.bf16.msra.mxu0 0
    %1520 = vmatprep.subr.bf16.mxu0 0
    %1521 = vmatpush2.bf16.msra.mxu0 0
    %1522 = vmatprep.subr.bf16.mxu0 0
    %1523 = vmatpush2.bf16.msra.mxu0 0
    %1524 = vmatprep.mubr.bf16.mxu0 0
    %1525 = vmatmul.mubr.bf16.gmra.mxu0 %v1486
    %v1526 = vpop.f32.mrf.mxu0
    %v1527 = vadd.f32 0.0, %v1526
    %v1528 = vpop.f32.mrf.mxu0
    %v1529 = vpop.f32.mrf.mxu0
    %v1530 = vadd.f32 0.0, %v1529
    %v1531 = vpop.f32.mrf.mxu0
    %1532 = vdwg.mxu0
    %v1533 = vadd.f32 %v1482, %v1527
    %v1534 = vadd.f32 %v1483, %v1530
    %v1535 = vld [vmem:[%s12] sm:$0x1]
    %v1537 = vlaneseq
    %v1538 = vshrl.u32 %v1537, 7
    %v1539 = vsub.s32 0, %v1538
    %v1540 = vrot.slane %v1535, %v1539
    %v1542 = vadd.f32 %v1533, %v1540
    %v1543 = vadd.f32 %v1534, %v1540
    %v1544 = vld [vmem:[%s13] sm:$0x1]
    %v1546 = vlaneseq
    %v1547 = vshrl.u32 %v1546, 7
    %v1548 = vsub.s32 0, %v1547
    %v1549 = vrot.slane %v1544, %v1548
    %v1551 = vmul.f32 %v1542, %v1549
    %v1552 = vmul.f32 %v1543, %v1549
    %v1553 = vld [vmem:[%s14] sm:$0x1]
    %v1555 = vlaneseq
    %v1556 = vshrl.u32 %v1555, 7
    %v1557 = vsub.s32 0, %v1556
    %v1558 = vrot.slane %v1553, %v1557
    %v1560 = vadd.f32 %v1551, %v1558
    %v1561 = vadd.f32 %v1552, %v1558
    %v1562 = vmax.f32 %v1560, 0.0
    %v1563 = vmax.f32 %v1561, 0.0
    %v1564 = vld [vmem:[%s15] sm:$0x7]
    %v1565 = vld [vmem:[%s16] sm:$0x1]
    %v1567 = vlaneseq
    %v1568 = vshrl.u32 %v1567, 7
    %v1569 = vsub.s32 0, %v1568
    %v1570 = vrot.slane %v1565, %v1569
    %v1573 = vsel %vm169, %v1564, 0
    %1575 = vmatprep.subr.bf16.mxu0 0
    %1576 = vmatpush1.bf16.msra.mxu0 0
    %1577 = vmatprep.subr.bf16.mxu0 0
    %1578 = vmatpush1.bf16.msra.mxu0 0
    %1579 = vmatprep.subr.bf16.mxu0 0
    %1580 = vmatpush1.bf16.msra.mxu0 0
    %1581 = vmatprep.subr.bf16.mxu0 0
    %1582 = vmatpush1.bf16.msra.mxu0 0
    %1583 = vmatprep.subr.bf16.mxu0 0
    %1584 = vmatpush1.bf16.msra.mxu0 0
    %1585 = vmatprep.subr.bf16.mxu0 0
    %1586 = vmatpush1.bf16.msra.mxu0 0
    %1587 = vmatprep.subr.bf16.mxu0 0
    %1588 = vmatpush1.bf16.msra.mxu0 0
    %1589 = vmatprep.subr.bf16.mxu0 0
    %1590 = vmatpush1.bf16.msra.mxu0 %v1573
    %1591 = vmatprep.subr.bf16.mxu0 0
    %1592 = vmatpush2.bf16.msra.mxu0 0
    %1593 = vmatprep.subr.bf16.mxu0 0
    %1594 = vmatpush2.bf16.msra.mxu0 0
    %1595 = vmatprep.subr.bf16.mxu0 0
    %1596 = vmatpush2.bf16.msra.mxu0 0
    %1597 = vmatprep.subr.bf16.mxu0 0
    %1598 = vmatpush2.bf16.msra.mxu0 0
    %1599 = vmatprep.subr.bf16.mxu0 0
    %1600 = vmatpush2.bf16.msra.mxu0 0
    %1601 = vmatprep.subr.bf16.mxu0 0
    %1602 = vmatpush2.bf16.msra.mxu0 0
    %1603 = vmatprep.subr.bf16.mxu0 0
    %1604 = vmatpush2.bf16.msra.mxu0 0
    %1605 = vmatprep.subr.bf16.mxu0 0
    %1606 = vmatpush2.bf16.msra.mxu0 0
    %1607 = vmatprep.mubr.bf16.mxu0 0
    %1608 = vmatmul.mubr.bf16.gmra.mxu0 %v164
    %v1609 = vpop.f32.mrf.mxu0
    %v1610 = vadd.f32 %v1570, %v1609
    %v1611 = vpop.f32.mrf.mxu0
    %v1612 = vpop.f32.mrf.mxu0
    %v1613 = vadd.f32 %v1570, %v1612
    %v1614 = vpop.f32.mrf.mxu0
    %1615 = vmatprep.mubr.bf16.mxu0 0
    %1616 = vmatmul.mubr.bf16.gmra.mxu0 %v167
    %v1617 = vpop.f32.mrf.mxu0
    %v1618 = vadd.f32 %v1570, %v1617
    %v1619 = vpop.f32.mrf.mxu0
    %v1620 = vpop.f32.mrf.mxu0
    %v1621 = vadd.f32 %v1570, %v1620
    %v1622 = vpop.f32.mrf.mxu0
    %1623 = vdwg.mxu0
    %v1624 = vmax.f32 %v1610, 0.0
    %v1625 = vmax.f32 %v1613, 0.0
    %v1626 = vmax.f32 %v1618, 0.0
    %v1627 = vmax.f32 %v1621, 0.0
    %v1628 = vpack.c.bf16 %v1563, %v1562
    %1629 = vmatprep.subr.bf16.mxu0 0
    %1630 = vmatpush1.bf16.msra.mxu0 0
    %1631 = vmatprep.subr.bf16.mxu0 0
    %1632 = vmatpush1.bf16.msra.mxu0 0
    %1633 = vmatprep.subr.bf16.mxu0 0
    %1634 = vmatpush1.bf16.msra.mxu0 0
    %1635 = vmatprep.subr.bf16.mxu0 0
    %1636 = vmatpush1.bf16.msra.mxu0 0
    %1637 = vmatprep.subr.bf16.mxu0 0
    %1638 = vmatpush1.bf16.msra.mxu0 0
    %1639 = vmatprep.subr.bf16.mxu0 0
    %1640 = vmatpush1.bf16.msra.mxu0 0
    %1641 = vmatprep.subr.bf16.mxu0 0
    %1642 = vmatpush1.bf16.msra.mxu0 0
    %1643 = vmatprep.subr.bf16.mxu0 0
    %1644 = vmatpush1.bf16.msra.mxu0 %v1628
    %1645 = vmatprep.subr.bf16.mxu0 0
    %1646 = vmatpush2.bf16.msra.mxu0 0
    %1647 = vmatprep.subr.bf16.mxu0 0
    %1648 = vmatpush2.bf16.msra.mxu0 0
    %1649 = vmatprep.subr.bf16.mxu0 0
    %1650 = vmatpush2.bf16.msra.mxu0 0
    %1651 = vmatprep.subr.bf16.mxu0 0
    %1652 = vmatpush2.bf16.msra.mxu0 0
    %1653 = vmatprep.subr.bf16.mxu0 0
    %1654 = vmatpush2.bf16.msra.mxu0 0
    %1655 = vmatprep.subr.bf16.mxu0 0
    %1656 = vmatpush2.bf16.msra.mxu0 0
    %1657 = vmatprep.subr.bf16.mxu0 0
    %1658 = vmatpush2.bf16.msra.mxu0 0
    %1659 = vmatprep.subr.bf16.mxu0 0
    %1660 = vmatpush2.bf16.msra.mxu0 0
    %1661 = vmatprep.mubr.bf16.mxu0 0
    %1662 = vmatmul.mubr.bf16.gmra.mxu0 %v229
    %v1663 = vpop.f32.mrf.mxu0
    %v1664 = vadd.f32 0.0, %v1663
    %v1665 = vpop.f32.mrf.mxu0
    %v1666 = vpop.f32.mrf.mxu0
    %v1667 = vadd.f32 0.0, %v1666
    %v1668 = vpop.f32.mrf.mxu0
    %1669 = vmatprep.mubr.bf16.mxu0 0
    %1670 = vmatmul.mubr.bf16.gmra.mxu0 %v232
    %v1671 = vpop.f32.mrf.mxu0
    %v1672 = vadd.f32 0.0, %v1671
    %v1673 = vpop.f32.mrf.mxu0
    %v1674 = vpop.f32.mrf.mxu0
    %v1675 = vadd.f32 0.0, %v1674
    %v1676 = vpop.f32.mrf.mxu0
    %1677 = vdwg.mxu0
    %v1678 = vlaneseq
    %v1679 = vshrl.u32 %v1678, 7
    %v1680 = vsub.s32 0, %v1679
    %v1681 = vrot.slane %v1664, %v1680
    %1683 = vbcast.lane.b32.xlu0 %v1681, 256
    %v1684 = vpop.permute.xlu0 %1683
    %v1685 = vlaneseq
    %v1686 = vshrl.u32 %v1685, 7
    %v1687 = vsub.s32 1, %v1686
    %v1688 = vrot.slane %v1664, %v1687
    %1690 = vbcast.lane.b32.xlu0 %v1688, 256
    %v1691 = vpop.permute.xlu0 %1690
    %v1692 = vlaneseq
    %v1693 = vshrl.u32 %v1692, 7
    %v1694 = vsub.s32 2, %v1693
    %v1695 = vrot.slane %v1664, %v1694
    %1697 = vbcast.lane.b32.xlu0 %v1695, 256
    %v1698 = vpop.permute.xlu0 %1697
    %v1699 = vlaneseq
    %v1700 = vshrl.u32 %v1699, 7
    %v1701 = vsub.s32 3, %v1700
    %v1702 = vrot.slane %v1664, %v1701
    %1704 = vbcast.lane.b32.xlu0 %v1702, 256
    %v1705 = vpop.permute.xlu0 %1704
    %v1706 = vlaneseq
    %v1707 = vshrl.u32 %v1706, 7
    %v1708 = vsub.s32 4, %v1707
    %v1709 = vrot.slane %v1664, %v1708
    %1711 = vbcast.lane.b32.xlu0 %v1709, 256
    %v1712 = vpop.permute.xlu0 %1711
    %v1713 = vlaneseq
    %v1714 = vshrl.u32 %v1713, 7
    %v1715 = vsub.s32 5, %v1714
    %v1716 = vrot.slane %v1664, %v1715
    %1718 = vbcast.lane.b32.xlu0 %v1716, 256
    %v1719 = vpop.permute.xlu0 %1718
    %v1720 = vlaneseq
    %v1721 = vshrl.u32 %v1720, 7
    %v1722 = vsub.s32 6, %v1721
    %v1723 = vrot.slane %v1664, %v1722
    %1725 = vbcast.lane.b32.xlu0 %v1723, 256
    %v1726 = vpop.permute.xlu0 %1725
    %v1727 = vlaneseq
    %v1728 = vshrl.u32 %v1727, 7
    %v1729 = vsub.s32 7, %v1728
    %v1730 = vrot.slane %v1664, %v1729
    %1732 = vbcast.lane.b32.xlu0 %v1730, 256
    %v1733 = vpop.permute.xlu0 %1732
    %v1734 = vlaneseq
    %v1735 = vshrl.u32 %v1734, 7
    %v1736 = vsub.s32 0, %v1735
    %v1737 = vrot.slane %v1667, %v1736
    %1739 = vbcast.lane.b32.xlu0 %v1737, 256
    %v1740 = vpop.permute.xlu0 %1739
    %v1741 = vlaneseq
    %v1742 = vshrl.u32 %v1741, 7
    %v1743 = vsub.s32 1, %v1742
    %v1744 = vrot.slane %v1667, %v1743
    %1746 = vbcast.lane.b32.xlu0 %v1744, 256
    %v1747 = vpop.permute.xlu0 %1746
    %v1748 = vlaneseq
    %v1749 = vshrl.u32 %v1748, 7
    %v1750 = vsub.s32 2, %v1749
    %v1751 = vrot.slane %v1667, %v1750
    %1753 = vbcast.lane.b32.xlu0 %v1751, 256
    %v1754 = vpop.permute.xlu0 %1753
    %v1755 = vlaneseq
    %v1756 = vshrl.u32 %v1755, 7
    %v1757 = vsub.s32 3, %v1756
    %v1758 = vrot.slane %v1667, %v1757
    %1760 = vbcast.lane.b32.xlu0 %v1758, 256
    %v1761 = vpop.permute.xlu0 %1760
    %v1762 = vlaneseq
    %v1763 = vshrl.u32 %v1762, 7
    %v1764 = vsub.s32 4, %v1763
    %v1765 = vrot.slane %v1667, %v1764
    %1767 = vbcast.lane.b32.xlu0 %v1765, 256
    %v1768 = vpop.permute.xlu0 %1767
    %v1769 = vlaneseq
    %v1770 = vshrl.u32 %v1769, 7
    %v1771 = vsub.s32 5, %v1770
    %v1772 = vrot.slane %v1667, %v1771
    %1774 = vbcast.lane.b32.xlu0 %v1772, 256
    %v1775 = vpop.permute.xlu0 %1774
    %v1776 = vlaneseq
    %v1777 = vshrl.u32 %v1776, 7
    %v1778 = vsub.s32 6, %v1777
    %v1779 = vrot.slane %v1667, %v1778
    %1781 = vbcast.lane.b32.xlu0 %v1779, 256
    %v1782 = vpop.permute.xlu0 %1781
    %v1783 = vlaneseq
    %v1784 = vshrl.u32 %v1783, 7
    %v1785 = vsub.s32 7, %v1784
    %v1786 = vrot.slane %v1667, %v1785
    %1788 = vbcast.lane.b32.xlu0 %v1786, 256
    %v1789 = vpop.permute.xlu0 %1788
    %v1790 = vlaneseq
    %v1791 = vshrl.u32 %v1790, 7
    %v1792 = vsub.s32 0, %v1791
    %v1793 = vrot.slane %v1672, %v1792
    %1795 = vbcast.lane.b32.xlu0 %v1793, 256
    %v1796 = vpop.permute.xlu0 %1795
    %v1797 = vlaneseq
    %v1798 = vshrl.u32 %v1797, 7
    %v1799 = vsub.s32 1, %v1798
    %v1800 = vrot.slane %v1672, %v1799
    %1802 = vbcast.lane.b32.xlu0 %v1800, 256
    %v1803 = vpop.permute.xlu0 %1802
    %v1804 = vlaneseq
    %v1805 = vshrl.u32 %v1804, 7
    %v1806 = vsub.s32 2, %v1805
    %v1807 = vrot.slane %v1672, %v1806
    %1809 = vbcast.lane.b32.xlu0 %v1807, 256
    %v1810 = vpop.permute.xlu0 %1809
    %v1811 = vlaneseq
    %v1812 = vshrl.u32 %v1811, 7
    %v1813 = vsub.s32 3, %v1812
    %v1814 = vrot.slane %v1672, %v1813
    %1816 = vbcast.lane.b32.xlu0 %v1814, 256
    %v1817 = vpop.permute.xlu0 %1816
    %v1818 = vlaneseq
    %v1819 = vshrl.u32 %v1818, 7
    %v1820 = vsub.s32 4, %v1819
    %v1821 = vrot.slane %v1672, %v1820
    %1823 = vbcast.lane.b32.xlu0 %v1821, 256
    %v1824 = vpop.permute.xlu0 %1823
    %v1825 = vlaneseq
    %v1826 = vshrl.u32 %v1825, 7
    %v1827 = vsub.s32 5, %v1826
    %v1828 = vrot.slane %v1672, %v1827
    %1830 = vbcast.lane.b32.xlu0 %v1828, 256
    %v1831 = vpop.permute.xlu0 %1830
    %v1832 = vlaneseq
    %v1833 = vshrl.u32 %v1832, 7
    %v1834 = vsub.s32 6, %v1833
    %v1835 = vrot.slane %v1672, %v1834
    %1837 = vbcast.lane.b32.xlu0 %v1835, 256
    %v1838 = vpop.permute.xlu0 %1837
    %v1839 = vlaneseq
    %v1840 = vshrl.u32 %v1839, 7
    %v1841 = vsub.s32 7, %v1840
    %v1842 = vrot.slane %v1672, %v1841
    %1844 = vbcast.lane.b32.xlu0 %v1842, 256
    %v1845 = vpop.permute.xlu0 %1844
    %v1846 = vlaneseq
    %v1847 = vshrl.u32 %v1846, 7
    %v1848 = vsub.s32 0, %v1847
    %v1849 = vrot.slane %v1675, %v1848
    %1851 = vbcast.lane.b32.xlu0 %v1849, 256
    %v1852 = vpop.permute.xlu0 %1851
    %v1853 = vlaneseq
    %v1854 = vshrl.u32 %v1853, 7
    %v1855 = vsub.s32 1, %v1854
    %v1856 = vrot.slane %v1675, %v1855
    %1858 = vbcast.lane.b32.xlu0 %v1856, 256
    %v1859 = vpop.permute.xlu0 %1858
    %v1860 = vlaneseq
    %v1861 = vshrl.u32 %v1860, 7
    %v1862 = vsub.s32 2, %v1861
    %v1863 = vrot.slane %v1675, %v1862
    %1865 = vbcast.lane.b32.xlu0 %v1863, 256
    %v1866 = vpop.permute.xlu0 %1865
    %v1867 = vlaneseq
    %v1868 = vshrl.u32 %v1867, 7
    %v1869 = vsub.s32 3, %v1868
    %v1870 = vrot.slane %v1675, %v1869
    %1872 = vbcast.lane.b32.xlu0 %v1870, 256
    %v1873 = vpop.permute.xlu0 %1872
    %v1874 = vlaneseq
    %v1875 = vshrl.u32 %v1874, 7
    %v1876 = vsub.s32 4, %v1875
    %v1877 = vrot.slane %v1675, %v1876
    %1879 = vbcast.lane.b32.xlu0 %v1877, 256
    %v1880 = vpop.permute.xlu0 %1879
    %v1881 = vlaneseq
    %v1882 = vshrl.u32 %v1881, 7
    %v1883 = vsub.s32 5, %v1882
    %v1884 = vrot.slane %v1675, %v1883
    %1886 = vbcast.lane.b32.xlu0 %v1884, 256
    %v1887 = vpop.permute.xlu0 %1886
    %v1888 = vlaneseq
    %v1889 = vshrl.u32 %v1888, 7
    %v1890 = vsub.s32 6, %v1889
    %v1891 = vrot.slane %v1675, %v1890
    %1893 = vbcast.lane.b32.xlu0 %v1891, 256
    %v1894 = vpop.permute.xlu0 %1893
    %v1895 = vlaneseq
    %v1896 = vshrl.u32 %v1895, 7
    %v1897 = vsub.s32 7, %v1896
    %v1898 = vrot.slane %v1675, %v1897
    %1900 = vbcast.lane.b32.xlu0 %v1898, 256
    %v1901 = vpop.permute.xlu0 %1900
    %v1906 = vcombine.high %v1624, %v1624
    %v1908 = vunpack.c.l.s4 1966171168
    %v1909 = vunpack.c.0.s8 %v1908
    %v1910 = vlaneseq
    %v1911 = vshrl.u32 %v1910, 7
    %v1912 = vsub.s32 %v1909, %v1911
    %v1913 = vrot.slane %v1624, %v1912
    %v1915 = vunpack.c.l.s4 1966171168
    %v1916 = vunpack.c.0.s8 %v1915
    %v1917 = vlaneseq
    %v1918 = vshrl.u32 %v1917, 7
    %v1919 = vsub.s32 %v1916, %v1918
    %v1920 = vrot.slane %v1906, %v1919
    %v1921 = vcombine.high %v1913, %v1913
    %v1922 = vcombine.high %v1920, %v1920
    %v1924 = vunpack.c.l.s4 1966171168
    %v1925 = vunpack.c.0.s8 %v1924
    %v1926 = vlaneseq
    %v1927 = vshrl.u32 %v1926, 7
    %v1928 = vsub.s32 %v1925, %v1927
    %v1929 = vrot.slane %v1913, %v1928
    %v1931 = vunpack.c.l.s4 1966171168
    %v1932 = vunpack.c.0.s8 %v1931
    %v1933 = vlaneseq
    %v1934 = vshrl.u32 %v1933, 7
    %v1935 = vsub.s32 %v1932, %v1934
    %v1936 = vrot.slane %v1920, %v1935
    %v1938 = vunpack.c.l.s4 1966171168
    %v1939 = vunpack.c.0.s8 %v1938
    %v1940 = vlaneseq
    %v1941 = vshrl.u32 %v1940, 7
    %v1942 = vsub.s32 %v1939, %v1941
    %v1943 = vrot.slane %v1921, %v1942
    %v1945 = vunpack.c.l.s4 1966171168
    %v1946 = vunpack.c.0.s8 %v1945
    %v1947 = vlaneseq
    %v1948 = vshrl.u32 %v1947, 7
    %v1949 = vsub.s32 %v1946, %v1948
    %v1950 = vrot.slane %v1922, %v1949
    %v1951 = vcombine.high %v1929, %v1929
    %v1952 = vcombine.high %v1936, %v1936
    %v1953 = vcombine.high %v1943, %v1943
    %v1954 = vcombine.high %v1950, %v1950
    %v1955 = vcombine.high %v1625, %v1625
    %v1957 = vunpack.c.l.s4 1966171168
    %v1958 = vunpack.c.0.s8 %v1957
    %v1959 = vlaneseq
    %v1960 = vshrl.u32 %v1959, 7
    %v1961 = vsub.s32 %v1958, %v1960
    %v1962 = vrot.slane %v1625, %v1961
    %v1964 = vunpack.c.l.s4 1966171168
    %v1965 = vunpack.c.0.s8 %v1964
    %v1966 = vlaneseq
    %v1967 = vshrl.u32 %v1966, 7
    %v1968 = vsub.s32 %v1965, %v1967
    %v1969 = vrot.slane %v1955, %v1968
    %v1970 = vcombine.high %v1962, %v1962
    %v1971 = vcombine.high %v1969, %v1969
    %v1973 = vunpack.c.l.s4 1966171168
    %v1974 = vunpack.c.0.s8 %v1973
    %v1975 = vlaneseq
    %v1976 = vshrl.u32 %v1975, 7
    %v1977 = vsub.s32 %v1974, %v1976
    %v1978 = vrot.slane %v1962, %v1977
    %v1980 = vunpack.c.l.s4 1966171168
    %v1981 = vunpack.c.0.s8 %v1980
    %v1982 = vlaneseq
    %v1983 = vshrl.u32 %v1982, 7
    %v1984 = vsub.s32 %v1981, %v1983
    %v1985 = vrot.slane %v1969, %v1984
    %v1987 = vunpack.c.l.s4 1966171168
    %v1988 = vunpack.c.0.s8 %v1987
    %v1989 = vlaneseq
    %v1990 = vshrl.u32 %v1989, 7
    %v1991 = vsub.s32 %v1988, %v1990
    %v1992 = vrot.slane %v1970, %v1991
    %v1994 = vunpack.c.l.s4 1966171168
    %v1995 = vunpack.c.0.s8 %v1994
    %v1996 = vlaneseq
    %v1997 = vshrl.u32 %v1996, 7
    %v1998 = vsub.s32 %v1995, %v1997
    %v1999 = vrot.slane %v1971, %v1998
    %v2000 = vcombine.high %v1978, %v1978
    %v2001 = vcombine.high %v1985, %v1985
    %v2002 = vcombine.high %v1992, %v1992
    %v2003 = vcombine.high %v1999, %v1999
    %v2004 = vcombine.high %v1626, %v1626
    %v2006 = vunpack.c.l.s4 1966171168
    %v2007 = vunpack.c.0.s8 %v2006
    %v2008 = vlaneseq
    %v2009 = vshrl.u32 %v2008, 7
    %v2010 = vsub.s32 %v2007, %v2009
    %v2011 = vrot.slane %v1626, %v2010
    %v2013 = vunpack.c.l.s4 1966171168
    %v2014 = vunpack.c.0.s8 %v2013
    %v2015 = vlaneseq
    %v2016 = vshrl.u32 %v2015, 7
    %v2017 = vsub.s32 %v2014, %v2016
    %v2018 = vrot.slane %v2004, %v2017
    %v2019 = vcombine.high %v2011, %v2011
    %v2020 = vcombine.high %v2018, %v2018
    %v2022 = vunpack.c.l.s4 1966171168
    %v2023 = vunpack.c.0.s8 %v2022
    %v2024 = vlaneseq
    %v2025 = vshrl.u32 %v2024, 7
    %v2026 = vsub.s32 %v2023, %v2025
    %v2027 = vrot.slane %v2011, %v2026
    %v2029 = vunpack.c.l.s4 1966171168
    %v2030 = vunpack.c.0.s8 %v2029
    %v2031 = vlaneseq
    %v2032 = vshrl.u32 %v2031, 7
    %v2033 = vsub.s32 %v2030, %v2032
    %v2034 = vrot.slane %v2018, %v2033
    %v2036 = vunpack.c.l.s4 1966171168
    %v2037 = vunpack.c.0.s8 %v2036
    %v2038 = vlaneseq
    %v2039 = vshrl.u32 %v2038, 7
    %v2040 = vsub.s32 %v2037, %v2039
    %v2041 = vrot.slane %v2019, %v2040
    %v2043 = vunpack.c.l.s4 1966171168
    %v2044 = vunpack.c.0.s8 %v2043
    %v2045 = vlaneseq
    %v2046 = vshrl.u32 %v2045, 7
    %v2047 = vsub.s32 %v2044, %v2046
    %v2048 = vrot.slane %v2020, %v2047
    %v2049 = vcombine.high %v2027, %v2027
    %v2050 = vcombine.high %v2034, %v2034
    %v2051 = vcombine.high %v2041, %v2041
    %v2052 = vcombine.high %v2048, %v2048
    %v2053 = vcombine.high %v1627, %v1627
    %v2055 = vunpack.c.l.s4 1966171168
    %v2056 = vunpack.c.0.s8 %v2055
    %v2057 = vlaneseq
    %v2058 = vshrl.u32 %v2057, 7
    %v2059 = vsub.s32 %v2056, %v2058
    %v2060 = vrot.slane %v1627, %v2059
    %v2062 = vunpack.c.l.s4 1966171168
    %v2063 = vunpack.c.0.s8 %v2062
    %v2064 = vlaneseq
    %v2065 = vshrl.u32 %v2064, 7
    %v2066 = vsub.s32 %v2063, %v2065
    %v2067 = vrot.slane %v2053, %v2066
    %v2068 = vcombine.high %v2060, %v2060
    %v2069 = vcombine.high %v2067, %v2067
    %v2071 = vunpack.c.l.s4 1966171168
    %v2072 = vunpack.c.0.s8 %v2071
    %v2073 = vlaneseq
    %v2074 = vshrl.u32 %v2073, 7
    %v2075 = vsub.s32 %v2072, %v2074
    %v2076 = vrot.slane %v2060, %v2075
    %v2078 = vunpack.c.l.s4 1966171168
    %v2079 = vunpack.c.0.s8 %v2078
    %v2080 = vlaneseq
    %v2081 = vshrl.u32 %v2080, 7
    %v2082 = vsub.s32 %v2079, %v2081
    %v2083 = vrot.slane %v2067, %v2082
    %v2085 = vunpack.c.l.s4 1966171168
    %v2086 = vunpack.c.0.s8 %v2085
    %v2087 = vlaneseq
    %v2088 = vshrl.u32 %v2087, 7
    %v2089 = vsub.s32 %v2086, %v2088
    %v2090 = vrot.slane %v2068, %v2089
    %v2092 = vunpack.c.l.s4 1966171168
    %v2093 = vunpack.c.0.s8 %v2092
    %v2094 = vlaneseq
    %v2095 = vshrl.u32 %v2094, 7
    %v2096 = vsub.s32 %v2093, %v2095
    %v2097 = vrot.slane %v2069, %v2096
    %v2098 = vcombine.high %v2076, %v2076
    %v2099 = vcombine.high %v2083, %v2083
    %v2100 = vcombine.high %v2090, %v2090
    %v2101 = vcombine.high %v2097, %v2097
    %v2102 = vlaneseq
    %v2103 = vshrl.u32 %v2102, 7
    %v2104 = vsub.s32 0, %v2103
    %v2105 = vrot.slane %v1929, %v2104
    %v2106 = vlaneseq
    %v2107 = vshrl.u32 %v2106, 7
    %v2108 = vsub.s32 0, %v2107
    %v2109 = vrot.slane %v1943, %v2108
    %v2110 = vlaneseq
    %v2111 = vshrl.u32 %v2110, 7
    %v2112 = vsub.s32 0, %v2111
    %v2113 = vrot.slane %v1951, %v2112
    %v2114 = vlaneseq
    %v2115 = vshrl.u32 %v2114, 7
    %v2116 = vsub.s32 0, %v2115
    %v2117 = vrot.slane %v1953, %v2116
    %v2118 = vlaneseq
    %v2119 = vshrl.u32 %v2118, 7
    %v2120 = vsub.s32 0, %v2119
    %v2121 = vrot.slane %v1936, %v2120
    %v2122 = vlaneseq
    %v2123 = vshrl.u32 %v2122, 7
    %v2124 = vsub.s32 0, %v2123
    %v2125 = vrot.slane %v1950, %v2124
    %v2126 = vlaneseq
    %v2127 = vshrl.u32 %v2126, 7
    %v2128 = vsub.s32 0, %v2127
    %v2129 = vrot.slane %v1952, %v2128
    %v2130 = vlaneseq
    %v2131 = vshrl.u32 %v2130, 7
    %v2132 = vsub.s32 0, %v2131
    %v2133 = vrot.slane %v1954, %v2132
    %v2134 = vlaneseq
    %v2135 = vshrl.u32 %v2134, 7
    %v2136 = vsub.s32 0, %v2135
    %v2137 = vrot.slane %v1978, %v2136
    %v2138 = vlaneseq
    %v2139 = vshrl.u32 %v2138, 7
    %v2140 = vsub.s32 0, %v2139
    %v2141 = vrot.slane %v1992, %v2140
    %v2142 = vlaneseq
    %v2143 = vshrl.u32 %v2142, 7
    %v2144 = vsub.s32 0, %v2143
    %v2145 = vrot.slane %v2000, %v2144
    %v2146 = vlaneseq
    %v2147 = vshrl.u32 %v2146, 7
    %v2148 = vsub.s32 0, %v2147
    %v2149 = vrot.slane %v2002, %v2148
    %v2150 = vlaneseq
    %v2151 = vshrl.u32 %v2150, 7
    %v2152 = vsub.s32 0, %v2151
    %v2153 = vrot.slane %v1985, %v2152
    %v2154 = vlaneseq
    %v2155 = vshrl.u32 %v2154, 7
    %v2156 = vsub.s32 0, %v2155
    %v2157 = vrot.slane %v1999, %v2156
    %v2158 = vlaneseq
    %v2159 = vshrl.u32 %v2158, 7
    %v2160 = vsub.s32 0, %v2159
    %v2161 = vrot.slane %v2001, %v2160
    %v2162 = vlaneseq
    %v2163 = vshrl.u32 %v2162, 7
    %v2164 = vsub.s32 0, %v2163
    %v2165 = vrot.slane %v2003, %v2164
    %v2166 = vlaneseq
    %v2167 = vshrl.u32 %v2166, 7
    %v2168 = vsub.s32 0, %v2167
    %v2169 = vrot.slane %v2027, %v2168
    %v2170 = vlaneseq
    %v2171 = vshrl.u32 %v2170, 7
    %v2172 = vsub.s32 0, %v2171
    %v2173 = vrot.slane %v2041, %v2172
    %v2174 = vlaneseq
    %v2175 = vshrl.u32 %v2174, 7
    %v2176 = vsub.s32 0, %v2175
    %v2177 = vrot.slane %v2049, %v2176
    %v2178 = vlaneseq
    %v2179 = vshrl.u32 %v2178, 7
    %v2180 = vsub.s32 0, %v2179
    %v2181 = vrot.slane %v2051, %v2180
    %v2182 = vlaneseq
    %v2183 = vshrl.u32 %v2182, 7
    %v2184 = vsub.s32 0, %v2183
    %v2185 = vrot.slane %v2034, %v2184
    %v2186 = vlaneseq
    %v2187 = vshrl.u32 %v2186, 7
    %v2188 = vsub.s32 0, %v2187
    %v2189 = vrot.slane %v2048, %v2188
    %v2190 = vlaneseq
    %v2191 = vshrl.u32 %v2190, 7
    %v2192 = vsub.s32 0, %v2191
    %v2193 = vrot.slane %v2050, %v2192
    %v2194 = vlaneseq
    %v2195 = vshrl.u32 %v2194, 7
    %v2196 = vsub.s32 0, %v2195
    %v2197 = vrot.slane %v2052, %v2196
    %v2198 = vlaneseq
    %v2199 = vshrl.u32 %v2198, 7
    %v2200 = vsub.s32 0, %v2199
    %v2201 = vrot.slane %v2076, %v2200
    %v2202 = vlaneseq
    %v2203 = vshrl.u32 %v2202, 7
    %v2204 = vsub.s32 0, %v2203
    %v2205 = vrot.slane %v2090, %v2204
    %v2206 = vlaneseq
    %v2207 = vshrl.u32 %v2206, 7
    %v2208 = vsub.s32 0, %v2207
    %v2209 = vrot.slane %v2098, %v2208
    %v2210 = vlaneseq
    %v2211 = vshrl.u32 %v2210, 7
    %v2212 = vsub.s32 0, %v2211
    %v2213 = vrot.slane %v2100, %v2212
    %v2214 = vlaneseq
    %v2215 = vshrl.u32 %v2214, 7
    %v2216 = vsub.s32 0, %v2215
    %v2217 = vrot.slane %v2083, %v2216
    %v2218 = vlaneseq
    %v2219 = vshrl.u32 %v2218, 7
    %v2220 = vsub.s32 0, %v2219
    %v2221 = vrot.slane %v2097, %v2220
    %v2222 = vlaneseq
    %v2223 = vshrl.u32 %v2222, 7
    %v2224 = vsub.s32 0, %v2223
    %v2225 = vrot.slane %v2099, %v2224
    %v2226 = vlaneseq
    %v2227 = vshrl.u32 %v2226, 7
    %v2228 = vsub.s32 0, %v2227
    %v2229 = vrot.slane %v2101, %v2228
    %v2262 = vmul.f32 %v1684, %v2105
    %v2263 = vmul.f32 %v1691, %v2109
    %v2264 = vmul.f32 %v1698, %v2113
    %v2265 = vmul.f32 %v1705, %v2117
    %v2266 = vmul.f32 %v1712, %v2121
    %v2267 = vmul.f32 %v1719, %v2125
    %v2268 = vmul.f32 %v1726, %v2129
    %v2269 = vmul.f32 %v1733, %v2133
    %v2270 = vmul.f32 %v1740, %v2137
    %v2271 = vmul.f32 %v1747, %v2141
    %v2272 = vmul.f32 %v1754, %v2145
    %v2273 = vmul.f32 %v1761, %v2149
    %v2274 = vmul.f32 %v1768, %v2153
    %v2275 = vmul.f32 %v1775, %v2157
    %v2276 = vmul.f32 %v1782, %v2161
    %v2277 = vmul.f32 %v1789, %v2165
    %v2278 = vmul.f32 %v1796, %v2169
    %v2279 = vmul.f32 %v1803, %v2173
    %v2280 = vmul.f32 %v1810, %v2177
    %v2281 = vmul.f32 %v1817, %v2181
    %v2282 = vmul.f32 %v1824, %v2185
    %v2283 = vmul.f32 %v1831, %v2189
    %v2284 = vmul.f32 %v1838, %v2193
    %v2285 = vmul.f32 %v1845, %v2197
    %v2286 = vmul.f32 %v1852, %v2201
    %v2287 = vmul.f32 %v1859, %v2205
    %v2288 = vmul.f32 %v1866, %v2209
    %v2289 = vmul.f32 %v1873, %v2213
    %v2290 = vmul.f32 %v1880, %v2217
    %v2291 = vmul.f32 %v1887, %v2221
    %v2292 = vmul.f32 %v1894, %v2225
    %v2293 = vmul.f32 %v1901, %v2229
    %v2294 = vcombine.low %v2262, %v2264
    %v2295 = vcombine.high %v2262, %v2264
    %v2297 = vunpack.c.l.s4 1983009808
    %v2298 = vunpack.c.0.s8 %v2297
    %v2299 = vlaneseq
    %v2300 = vshrl.u32 %v2299, 7
    %v2301 = vsub.s32 %v2298, %v2300
    %v2302 = vrot.slane %v2294, %v2301
    %v2304 = vunpack.c.l.s4 1983009808
    %v2305 = vunpack.c.0.s8 %v2304
    %v2306 = vlaneseq
    %v2307 = vshrl.u32 %v2306, 7
    %v2308 = vsub.s32 %v2305, %v2307
    %v2309 = vrot.slane %v2295, %v2308
    %v2310 = vcombine.low %v2263, %v2265
    %v2311 = vcombine.high %v2263, %v2265
    %v2313 = vunpack.c.l.s4 1983009808
    %v2314 = vunpack.c.0.s8 %v2313
    %v2315 = vlaneseq
    %v2316 = vshrl.u32 %v2315, 7
    %v2317 = vsub.s32 %v2314, %v2316
    %v2318 = vrot.slane %v2310, %v2317
    %v2320 = vunpack.c.l.s4 1983009808
    %v2321 = vunpack.c.0.s8 %v2320
    %v2322 = vlaneseq
    %v2323 = vshrl.u32 %v2322, 7
    %v2324 = vsub.s32 %v2321, %v2323
    %v2325 = vrot.slane %v2311, %v2324
    %v2326 = vcombine.low %v2266, %v2268
    %v2327 = vcombine.high %v2266, %v2268
    %v2329 = vunpack.c.l.s4 1983009808
    %v2330 = vunpack.c.0.s8 %v2329
    %v2331 = vlaneseq
    %v2332 = vshrl.u32 %v2331, 7
    %v2333 = vsub.s32 %v2330, %v2332
    %v2334 = vrot.slane %v2326, %v2333
    %v2336 = vunpack.c.l.s4 1983009808
    %v2337 = vunpack.c.0.s8 %v2336
    %v2338 = vlaneseq
    %v2339 = vshrl.u32 %v2338, 7
    %v2340 = vsub.s32 %v2337, %v2339
    %v2341 = vrot.slane %v2327, %v2340
    %v2342 = vcombine.low %v2267, %v2269
    %v2343 = vcombine.high %v2267, %v2269
    %v2345 = vunpack.c.l.s4 1983009808
    %v2346 = vunpack.c.0.s8 %v2345
    %v2347 = vlaneseq
    %v2348 = vshrl.u32 %v2347, 7
    %v2349 = vsub.s32 %v2346, %v2348
    %v2350 = vrot.slane %v2342, %v2349
    %v2352 = vunpack.c.l.s4 1983009808
    %v2353 = vunpack.c.0.s8 %v2352
    %v2354 = vlaneseq
    %v2355 = vshrl.u32 %v2354, 7
    %v2356 = vsub.s32 %v2353, %v2355
    %v2357 = vrot.slane %v2343, %v2356
    %v2358 = vcombine.low %v2302, %v2318
    %v2359 = vcombine.high %v2302, %v2318
    %v2361 = vunpack.c.l.s4 1934713408
    %v2362 = vunpack.c.0.s8 %v2361
    %v2363 = vlaneseq
    %v2364 = vshrl.u32 %v2363, 7
    %v2365 = vsub.s32 %v2362, %v2364
    %v2366 = vrot.slane %v2358, %v2365
    %v2368 = vunpack.c.l.s4 1934713408
    %v2369 = vunpack.c.0.s8 %v2368
    %v2370 = vlaneseq
    %v2371 = vshrl.u32 %v2370, 7
    %v2372 = vsub.s32 %v2369, %v2371
    %v2373 = vrot.slane %v2359, %v2372
    %v2374 = vcombine.low %v2309, %v2325
    %v2375 = vcombine.high %v2309, %v2325
    %v2377 = vunpack.c.l.s4 1934713408
    %v2378 = vunpack.c.0.s8 %v2377
    %v2379 = vlaneseq
    %v2380 = vshrl.u32 %v2379, 7
    %v2381 = vsub.s32 %v2378, %v2380
    %v2382 = vrot.slane %v2374, %v2381
    %v2384 = vunpack.c.l.s4 1934713408
    %v2385 = vunpack.c.0.s8 %v2384
    %v2386 = vlaneseq
    %v2387 = vshrl.u32 %v2386, 7
    %v2388 = vsub.s32 %v2385, %v2387
    %v2389 = vrot.slane %v2375, %v2388
    %v2390 = vcombine.low %v2334, %v2350
    %v2391 = vcombine.high %v2334, %v2350
    %v2393 = vunpack.c.l.s4 1934713408
    %v2394 = vunpack.c.0.s8 %v2393
    %v2395 = vlaneseq
    %v2396 = vshrl.u32 %v2395, 7
    %v2397 = vsub.s32 %v2394, %v2396
    %v2398 = vrot.slane %v2390, %v2397
    %v2400 = vunpack.c.l.s4 1934713408
    %v2401 = vunpack.c.0.s8 %v2400
    %v2402 = vlaneseq
    %v2403 = vshrl.u32 %v2402, 7
    %v2404 = vsub.s32 %v2401, %v2403
    %v2405 = vrot.slane %v2391, %v2404
    %v2406 = vcombine.low %v2341, %v2357
    %v2407 = vcombine.high %v2341, %v2357
    %v2409 = vunpack.c.l.s4 1934713408
    %v2410 = vunpack.c.0.s8 %v2409
    %v2411 = vlaneseq
    %v2412 = vshrl.u32 %v2411, 7
    %v2413 = vsub.s32 %v2410, %v2412
    %v2414 = vrot.slane %v2406, %v2413
    %v2416 = vunpack.c.l.s4 1934713408
    %v2417 = vunpack.c.0.s8 %v2416
    %v2418 = vlaneseq
    %v2419 = vshrl.u32 %v2418, 7
    %v2420 = vsub.s32 %v2417, %v2419
    %v2421 = vrot.slane %v2407, %v2420
    %v2422 = vcombine.low %v2366, %v2398
    %v2423 = vcombine.high %v2366, %v2398
    %v2424 = vcombine.low %v2373, %v2405
    %v2425 = vcombine.high %v2373, %v2405
    %v2426 = vcombine.low %v2382, %v2414
    %v2427 = vcombine.high %v2382, %v2414
    %v2428 = vcombine.low %v2389, %v2421
    %v2429 = vcombine.high %v2389, %v2421
    %v2430 = vcombine.low %v2270, %v2272
    %v2431 = vcombine.high %v2270, %v2272
    %v2433 = vunpack.c.l.s4 1983009808
    %v2434 = vunpack.c.0.s8 %v2433
    %v2435 = vlaneseq
    %v2436 = vshrl.u32 %v2435, 7
    %v2437 = vsub.s32 %v2434, %v2436
    %v2438 = vrot.slane %v2430, %v2437
    %v2440 = vunpack.c.l.s4 1983009808
    %v2441 = vunpack.c.0.s8 %v2440
    %v2442 = vlaneseq
    %v2443 = vshrl.u32 %v2442, 7
    %v2444 = vsub.s32 %v2441, %v2443
    %v2445 = vrot.slane %v2431, %v2444
    %v2446 = vcombine.low %v2271, %v2273
    %v2447 = vcombine.high %v2271, %v2273
    %v2449 = vunpack.c.l.s4 1983009808
    %v2450 = vunpack.c.0.s8 %v2449
    %v2451 = vlaneseq
    %v2452 = vshrl.u32 %v2451, 7
    %v2453 = vsub.s32 %v2450, %v2452
    %v2454 = vrot.slane %v2446, %v2453
    %v2456 = vunpack.c.l.s4 1983009808
    %v2457 = vunpack.c.0.s8 %v2456
    %v2458 = vlaneseq
    %v2459 = vshrl.u32 %v2458, 7
    %v2460 = vsub.s32 %v2457, %v2459
    %v2461 = vrot.slane %v2447, %v2460
    %v2462 = vcombine.low %v2274, %v2276
    %v2463 = vcombine.high %v2274, %v2276
    %v2465 = vunpack.c.l.s4 1983009808
    %v2466 = vunpack.c.0.s8 %v2465
    %v2467 = vlaneseq
    %v2468 = vshrl.u32 %v2467, 7
    %v2469 = vsub.s32 %v2466, %v2468
    %v2470 = vrot.slane %v2462, %v2469
    %v2472 = vunpack.c.l.s4 1983009808
    %v2473 = vunpack.c.0.s8 %v2472
    %v2474 = vlaneseq
    %v2475 = vshrl.u32 %v2474, 7
    %v2476 = vsub.s32 %v2473, %v2475
    %v2477 = vrot.slane %v2463, %v2476
    %v2478 = vcombine.low %v2275, %v2277
    %v2479 = vcombine.high %v2275, %v2277
    %v2481 = vunpack.c.l.s4 1983009808
    %v2482 = vunpack.c.0.s8 %v2481
    %v2483 = vlaneseq
    %v2484 = vshrl.u32 %v2483, 7
    %v2485 = vsub.s32 %v2482, %v2484
    %v2486 = vrot.slane %v2478, %v2485
    %v2488 = vunpack.c.l.s4 1983009808
    %v2489 = vunpack.c.0.s8 %v2488
    %v2490 = vlaneseq
    %v2491 = vshrl.u32 %v2490, 7
    %v2492 = vsub.s32 %v2489, %v2491
    %v2493 = vrot.slane %v2479, %v2492
    %v2494 = vcombine.low %v2438, %v2454
    %v2495 = vcombine.high %v2438, %v2454
    %v2497 = vunpack.c.l.s4 1934713408
    %v2498 = vunpack.c.0.s8 %v2497
    %v2499 = vlaneseq
    %v2500 = vshrl.u32 %v2499, 7
    %v2501 = vsub.s32 %v2498, %v2500
    %v2502 = vrot.slane %v2494, %v2501
    %v2504 = vunpack.c.l.s4 1934713408
    %v2505 = vunpack.c.0.s8 %v2504
    %v2506 = vlaneseq
    %v2507 = vshrl.u32 %v2506, 7
    %v2508 = vsub.s32 %v2505, %v2507
    %v2509 = vrot.slane %v2495, %v2508
    %v2510 = vcombine.low %v2445, %v2461
    %v2511 = vcombine.high %v2445, %v2461
    %v2513 = vunpack.c.l.s4 1934713408
    %v2514 = vunpack.c.0.s8 %v2513
    %v2515 = vlaneseq
    %v2516 = vshrl.u32 %v2515, 7
    %v2517 = vsub.s32 %v2514, %v2516
    %v2518 = vrot.slane %v2510, %v2517
    %v2520 = vunpack.c.l.s4 1934713408
    %v2521 = vunpack.c.0.s8 %v2520
    %v2522 = vlaneseq
    %v2523 = vshrl.u32 %v2522, 7
    %v2524 = vsub.s32 %v2521, %v2523
    %v2525 = vrot.slane %v2511, %v2524
    %v2526 = vcombine.low %v2470, %v2486
    %v2527 = vcombine.high %v2470, %v2486
    %v2529 = vunpack.c.l.s4 1934713408
    %v2530 = vunpack.c.0.s8 %v2529
    %v2531 = vlaneseq
    %v2532 = vshrl.u32 %v2531, 7
    %v2533 = vsub.s32 %v2530, %v2532
    %v2534 = vrot.slane %v2526, %v2533
    %v2536 = vunpack.c.l.s4 1934713408
    %v2537 = vunpack.c.0.s8 %v2536
    %v2538 = vlaneseq
    %v2539 = vshrl.u32 %v2538, 7
    %v2540 = vsub.s32 %v2537, %v2539
    %v2541 = vrot.slane %v2527, %v2540
    %v2542 = vcombine.low %v2477, %v2493
    %v2543 = vcombine.high %v2477, %v2493
    %v2545 = vunpack.c.l.s4 1934713408
    %v2546 = vunpack.c.0.s8 %v2545
    %v2547 = vlaneseq
    %v2548 = vshrl.u32 %v2547, 7
    %v2549 = vsub.s32 %v2546, %v2548
    %v2550 = vrot.slane %v2542, %v2549
    %v2552 = vunpack.c.l.s4 1934713408
    %v2553 = vunpack.c.0.s8 %v2552
    %v2554 = vlaneseq
    %v2555 = vshrl.u32 %v2554, 7
    %v2556 = vsub.s32 %v2553, %v2555
    %v2557 = vrot.slane %v2543, %v2556
    %v2558 = vcombine.low %v2502, %v2534
    %v2559 = vcombine.high %v2502, %v2534
    %v2560 = vcombine.low %v2509, %v2541
    %v2561 = vcombine.high %v2509, %v2541
    %v2562 = vcombine.low %v2518, %v2550
    %v2563 = vcombine.high %v2518, %v2550
    %v2564 = vcombine.low %v2525, %v2557
    %v2565 = vcombine.high %v2525, %v2557
    %v2566 = vcombine.low %v2278, %v2280
    %v2567 = vcombine.high %v2278, %v2280
    %v2569 = vunpack.c.l.s4 1983009808
    %v2570 = vunpack.c.0.s8 %v2569
    %v2571 = vlaneseq
    %v2572 = vshrl.u32 %v2571, 7
    %v2573 = vsub.s32 %v2570, %v2572
    %v2574 = vrot.slane %v2566, %v2573
    %v2576 = vunpack.c.l.s4 1983009808
    %v2577 = vunpack.c.0.s8 %v2576
    %v2578 = vlaneseq
    %v2579 = vshrl.u32 %v2578, 7
    %v2580 = vsub.s32 %v2577, %v2579
    %v2581 = vrot.slane %v2567, %v2580
    %v2582 = vcombine.low %v2279, %v2281
    %v2583 = vcombine.high %v2279, %v2281
    %v2585 = vunpack.c.l.s4 1983009808
    %v2586 = vunpack.c.0.s8 %v2585
    %v2587 = vlaneseq
    %v2588 = vshrl.u32 %v2587, 7
    %v2589 = vsub.s32 %v2586, %v2588
    %v2590 = vrot.slane %v2582, %v2589
    %v2592 = vunpack.c.l.s4 1983009808
    %v2593 = vunpack.c.0.s8 %v2592
    %v2594 = vlaneseq
    %v2595 = vshrl.u32 %v2594, 7
    %v2596 = vsub.s32 %v2593, %v2595
    %v2597 = vrot.slane %v2583, %v2596
    %v2598 = vcombine.low %v2282, %v2284
    %v2599 = vcombine.high %v2282, %v2284
    %v2601 = vunpack.c.l.s4 1983009808
    %v2602 = vunpack.c.0.s8 %v2601
    %v2603 = vlaneseq
    %v2604 = vshrl.u32 %v2603, 7
    %v2605 = vsub.s32 %v2602, %v2604
    %v2606 = vrot.slane %v2598, %v2605
    %v2608 = vunpack.c.l.s4 1983009808
    %v2609 = vunpack.c.0.s8 %v2608
    %v2610 = vlaneseq
    %v2611 = vshrl.u32 %v2610, 7
    %v2612 = vsub.s32 %v2609, %v2611
    %v2613 = vrot.slane %v2599, %v2612
    %v2614 = vcombine.low %v2283, %v2285
    %v2615 = vcombine.high %v2283, %v2285
    %v2617 = vunpack.c.l.s4 1983009808
    %v2618 = vunpack.c.0.s8 %v2617
    %v2619 = vlaneseq
    %v2620 = vshrl.u32 %v2619, 7
    %v2621 = vsub.s32 %v2618, %v2620
    %v2622 = vrot.slane %v2614, %v2621
    %v2624 = vunpack.c.l.s4 1983009808
    %v2625 = vunpack.c.0.s8 %v2624
    %v2626 = vlaneseq
    %v2627 = vshrl.u32 %v2626, 7
    %v2628 = vsub.s32 %v2625, %v2627
    %v2629 = vrot.slane %v2615, %v2628
    %v2630 = vcombine.low %v2574, %v2590
    %v2631 = vcombine.high %v2574, %v2590
    %v2633 = vunpack.c.l.s4 1934713408
    %v2634 = vunpack.c.0.s8 %v2633
    %v2635 = vlaneseq
    %v2636 = vshrl.u32 %v2635, 7
    %v2637 = vsub.s32 %v2634, %v2636
    %v2638 = vrot.slane %v2630, %v2637
    %v2640 = vunpack.c.l.s4 1934713408
    %v2641 = vunpack.c.0.s8 %v2640
    %v2642 = vlaneseq
    %v2643 = vshrl.u32 %v2642, 7
    %v2644 = vsub.s32 %v2641, %v2643
    %v2645 = vrot.slane %v2631, %v2644
    %v2646 = vcombine.low %v2581, %v2597
    %v2647 = vcombine.high %v2581, %v2597
    %v2649 = vunpack.c.l.s4 1934713408
    %v2650 = vunpack.c.0.s8 %v2649
    %v2651 = vlaneseq
    %v2652 = vshrl.u32 %v2651, 7
    %v2653 = vsub.s32 %v2650, %v2652
    %v2654 = vrot.slane %v2646, %v2653
    %v2656 = vunpack.c.l.s4 1934713408
    %v2657 = vunpack.c.0.s8 %v2656
    %v2658 = vlaneseq
    %v2659 = vshrl.u32 %v2658, 7
    %v2660 = vsub.s32 %v2657, %v2659
    %v2661 = vrot.slane %v2647, %v2660
    %v2662 = vcombine.low %v2606, %v2622
    %v2663 = vcombine.high %v2606, %v2622
    %v2665 = vunpack.c.l.s4 1934713408
    %v2666 = vunpack.c.0.s8 %v2665
    %v2667 = vlaneseq
    %v2668 = vshrl.u32 %v2667, 7
    %v2669 = vsub.s32 %v2666, %v2668
    %v2670 = vrot.slane %v2662, %v2669
    %v2672 = vunpack.c.l.s4 1934713408
    %v2673 = vunpack.c.0.s8 %v2672
    %v2674 = vlaneseq
    %v2675 = vshrl.u32 %v2674, 7
    %v2676 = vsub.s32 %v2673, %v2675
    %v2677 = vrot.slane %v2663, %v2676
    %v2678 = vcombine.low %v2613, %v2629
    %v2679 = vcombine.high %v2613, %v2629
    %v2681 = vunpack.c.l.s4 1934713408
    %v2682 = vunpack.c.0.s8 %v2681
    %v2683 = vlaneseq
    %v2684 = vshrl.u32 %v2683, 7
    %v2685 = vsub.s32 %v2682, %v2684
    %v2686 = vrot.slane %v2678, %v2685
    %v2688 = vunpack.c.l.s4 1934713408
    %v2689 = vunpack.c.0.s8 %v2688
    %v2690 = vlaneseq
    %v2691 = vshrl.u32 %v2690, 7
    %v2692 = vsub.s32 %v2689, %v2691
    %v2693 = vrot.slane %v2679, %v2692
    %v2694 = vcombine.low %v2638, %v2670
    %v2695 = vcombine.high %v2638, %v2670
    %v2696 = vcombine.low %v2645, %v2677
    %v2697 = vcombine.high %v2645, %v2677
    %v2698 = vcombine.low %v2654, %v2686
    %v2699 = vcombine.high %v2654, %v2686
    %v2700 = vcombine.low %v2661, %v2693
    %v2701 = vcombine.high %v2661, %v2693
    %v2702 = vcombine.low %v2286, %v2288
    %v2703 = vcombine.high %v2286, %v2288
    %v2705 = vunpack.c.l.s4 1983009808
    %v2706 = vunpack.c.0.s8 %v2705
    %v2707 = vlaneseq
    %v2708 = vshrl.u32 %v2707, 7
    %v2709 = vsub.s32 %v2706, %v2708
    %v2710 = vrot.slane %v2702, %v2709
    %v2712 = vunpack.c.l.s4 1983009808
    %v2713 = vunpack.c.0.s8 %v2712
    %v2714 = vlaneseq
    %v2715 = vshrl.u32 %v2714, 7
    %v2716 = vsub.s32 %v2713, %v2715
    %v2717 = vrot.slane %v2703, %v2716
    %v2718 = vcombine.low %v2287, %v2289
    %v2719 = vcombine.high %v2287, %v2289
    %v2721 = vunpack.c.l.s4 1983009808
    %v2722 = vunpack.c.0.s8 %v2721
    %v2723 = vlaneseq
    %v2724 = vshrl.u32 %v2723, 7
    %v2725 = vsub.s32 %v2722, %v2724
    %v2726 = vrot.slane %v2718, %v2725
    %v2728 = vunpack.c.l.s4 1983009808
    %v2729 = vunpack.c.0.s8 %v2728
    %v2730 = vlaneseq
    %v2731 = vshrl.u32 %v2730, 7
    %v2732 = vsub.s32 %v2729, %v2731
    %v2733 = vrot.slane %v2719, %v2732
    %v2734 = vcombine.low %v2290, %v2292
    %v2735 = vcombine.high %v2290, %v2292
    %v2737 = vunpack.c.l.s4 1983009808
    %v2738 = vunpack.c.0.s8 %v2737
    %v2739 = vlaneseq
    %v2740 = vshrl.u32 %v2739, 7
    %v2741 = vsub.s32 %v2738, %v2740
    %v2742 = vrot.slane %v2734, %v2741
    %v2744 = vunpack.c.l.s4 1983009808
    %v2745 = vunpack.c.0.s8 %v2744
    %v2746 = vlaneseq
    %v2747 = vshrl.u32 %v2746, 7
    %v2748 = vsub.s32 %v2745, %v2747
    %v2749 = vrot.slane %v2735, %v2748
    %v2750 = vcombine.low %v2291, %v2293
    %v2751 = vcombine.high %v2291, %v2293
    %v2753 = vunpack.c.l.s4 1983009808
    %v2754 = vunpack.c.0.s8 %v2753
    %v2755 = vlaneseq
    %v2756 = vshrl.u32 %v2755, 7
    %v2757 = vsub.s32 %v2754, %v2756
    %v2758 = vrot.slane %v2750, %v2757
    %v2760 = vunpack.c.l.s4 1983009808
    %v2761 = vunpack.c.0.s8 %v2760
    %v2762 = vlaneseq
    %v2763 = vshrl.u32 %v2762, 7
    %v2764 = vsub.s32 %v2761, %v2763
    %v2765 = vrot.slane %v2751, %v2764
    %v2766 = vcombine.low %v2710, %v2726
    %v2767 = vcombine.high %v2710, %v2726
    %v2769 = vunpack.c.l.s4 1934713408
    %v2770 = vunpack.c.0.s8 %v2769
    %v2771 = vlaneseq
    %v2772 = vshrl.u32 %v2771, 7
    %v2773 = vsub.s32 %v2770, %v2772
    %v2774 = vrot.slane %v2766, %v2773
    %v2776 = vunpack.c.l.s4 1934713408
    %v2777 = vunpack.c.0.s8 %v2776
    %v2778 = vlaneseq
    %v2779 = vshrl.u32 %v2778, 7
    %v2780 = vsub.s32 %v2777, %v2779
    %v2781 = vrot.slane %v2767, %v2780
    %v2782 = vcombine.low %v2717, %v2733
    %v2783 = vcombine.high %v2717, %v2733
    %v2785 = vunpack.c.l.s4 1934713408
    %v2786 = vunpack.c.0.s8 %v2785
    %v2787 = vlaneseq
    %v2788 = vshrl.u32 %v2787, 7
    %v2789 = vsub.s32 %v2786, %v2788
    %v2790 = vrot.slane %v2782, %v2789
    %v2792 = vunpack.c.l.s4 1934713408
    %v2793 = vunpack.c.0.s8 %v2792
    %v2794 = vlaneseq
    %v2795 = vshrl.u32 %v2794, 7
    %v2796 = vsub.s32 %v2793, %v2795
    %v2797 = vrot.slane %v2783, %v2796
    %v2798 = vcombine.low %v2742, %v2758
    %v2799 = vcombine.high %v2742, %v2758
    %v2801 = vunpack.c.l.s4 1934713408
    %v2802 = vunpack.c.0.s8 %v2801
    %v2803 = vlaneseq
    %v2804 = vshrl.u32 %v2803, 7
    %v2805 = vsub.s32 %v2802, %v2804
    %v2806 = vrot.slane %v2798, %v2805
    %v2808 = vunpack.c.l.s4 1934713408
    %v2809 = vunpack.c.0.s8 %v2808
    %v2810 = vlaneseq
    %v2811 = vshrl.u32 %v2810, 7
    %v2812 = vsub.s32 %v2809, %v2811
    %v2813 = vrot.slane %v2799, %v2812
    %v2814 = vcombine.low %v2749, %v2765
    %v2815 = vcombine.high %v2749, %v2765
    %v2817 = vunpack.c.l.s4 1934713408
    %v2818 = vunpack.c.0.s8 %v2817
    %v2819 = vlaneseq
    %v2820 = vshrl.u32 %v2819, 7
    %v2821 = vsub.s32 %v2818, %v2820
    %v2822 = vrot.slane %v2814, %v2821
    %v2824 = vunpack.c.l.s4 1934713408
    %v2825 = vunpack.c.0.s8 %v2824
    %v2826 = vlaneseq
    %v2827 = vshrl.u32 %v2826, 7
    %v2828 = vsub.s32 %v2825, %v2827
    %v2829 = vrot.slane %v2815, %v2828
    %v2830 = vcombine.low %v2774, %v2806
    %v2831 = vcombine.high %v2774, %v2806
    %v2832 = vcombine.low %v2781, %v2813
    %v2833 = vcombine.high %v2781, %v2813
    %v2834 = vcombine.low %v2790, %v2822
    %v2835 = vcombine.high %v2790, %v2822
    %v2836 = vcombine.low %v2797, %v2829
    %v2837 = vcombine.high %v2797, %v2829
    %2842 = vrot.lane.b32.xlu0 %v2423, 16
    %v2843 = vpop.permute.xlu0 %2842
    %2844 = vrot.lane.b32.xlu0 %v2559, 16
    %v2845 = vpop.permute.xlu0 %2844
    %2846 = vrot.lane.b32.xlu0 %v2695, 16
    %v2847 = vpop.permute.xlu0 %2846
    %2848 = vrot.lane.b32.xlu0 %v2831, 16
    %v2849 = vpop.permute.xlu0 %2848
    %2858 = vrot.lane.b32.xlu0 %v2424, 32
    %v2859 = vpop.permute.xlu0 %2858
    %2860 = vrot.lane.b32.xlu0 %v2560, 32
    %v2861 = vpop.permute.xlu0 %2860
    %2862 = vrot.lane.b32.xlu0 %v2696, 32
    %v2863 = vpop.permute.xlu0 %2862
    %2864 = vrot.lane.b32.xlu0 %v2832, 32
    %v2865 = vpop.permute.xlu0 %2864
    %2874 = vrot.lane.b32.xlu0 %v2425, 48
    %v2875 = vpop.permute.xlu0 %2874
    %2876 = vrot.lane.b32.xlu0 %v2561, 48
    %v2877 = vpop.permute.xlu0 %2876
    %2878 = vrot.lane.b32.xlu0 %v2697, 48
    %v2879 = vpop.permute.xlu0 %2878
    %2880 = vrot.lane.b32.xlu0 %v2833, 48
    %v2881 = vpop.permute.xlu0 %2880
    %2890 = vrot.lane.b32.xlu0 %v2426, 64
    %v2891 = vpop.permute.xlu0 %2890
    %2892 = vrot.lane.b32.xlu0 %v2562, 64
    %v2893 = vpop.permute.xlu0 %2892
    %2894 = vrot.lane.b32.xlu0 %v2698, 64
    %v2895 = vpop.permute.xlu0 %2894
    %2896 = vrot.lane.b32.xlu0 %v2834, 64
    %v2897 = vpop.permute.xlu0 %2896
    %2906 = vrot.lane.b32.xlu0 %v2427, 80
    %v2907 = vpop.permute.xlu0 %2906
    %2908 = vrot.lane.b32.xlu0 %v2563, 80
    %v2909 = vpop.permute.xlu0 %2908
    %2910 = vrot.lane.b32.xlu0 %v2699, 80
    %v2911 = vpop.permute.xlu0 %2910
    %2912 = vrot.lane.b32.xlu0 %v2835, 80
    %v2913 = vpop.permute.xlu0 %2912
    %2922 = vrot.lane.b32.xlu0 %v2428, 96
    %v2923 = vpop.permute.xlu0 %2922
    %2924 = vrot.lane.b32.xlu0 %v2564, 96
    %v2925 = vpop.permute.xlu0 %2924
    %2926 = vrot.lane.b32.xlu0 %v2700, 96
    %v2927 = vpop.permute.xlu0 %2926
    %2928 = vrot.lane.b32.xlu0 %v2836, 96
    %v2929 = vpop.permute.xlu0 %2928
    %2938 = vrot.lane.b32.xlu0 %v2429, 112
    %v2939 = vpop.permute.xlu0 %2938
    %2940 = vrot.lane.b32.xlu0 %v2565, 112
    %v2941 = vpop.permute.xlu0 %2940
    %2942 = vrot.lane.b32.xlu0 %v2701, 112
    %v2943 = vpop.permute.xlu0 %2942
    %2944 = vrot.lane.b32.xlu0 %v2837, 112
    %v2945 = vpop.permute.xlu0 %2944
    %v2950 = vsel %vm227, %v2422, %v2843
    %v2951 = vsel %vm227, %v2558, %v2845
    %v2952 = vsel %vm227, %v2694, %v2847
    %v2953 = vsel %vm227, %v2830, %v2849
    %v2954 = vsel %vm1223, %v2950, %v2859
    %v2955 = vsel %vm1223, %v2951, %v2861
    %v2956 = vsel %vm1223, %v2952, %v2863
    %v2957 = vsel %vm1223, %v2953, %v2865
    %v2958 = vsel %vm1228, %v2954, %v2875
    %v2959 = vsel %vm1228, %v2955, %v2877
    %v2960 = vsel %vm1228, %v2956, %v2879
    %v2961 = vsel %vm1228, %v2957, %v2881
    %v2962 = vsel %vm1370, %v2958, %v2891
    %v2963 = vsel %vm1370, %v2959, %v2893
    %v2964 = vsel %vm1370, %v2960, %v2895
    %v2965 = vsel %vm1370, %v2961, %v2897
    %vm2966 = vcmask 654336
    %v2967 = vsel %vm2966, %v2962, %v2907
    %v2968 = vsel %vm2966, %v2963, %v2909
    %v2969 = vsel %vm2966, %v2964, %v2911
    %v2970 = vsel %vm2966, %v2965, %v2913
    %vm2971 = vcmask 785408
    %v2972 = vsel %vm2971, %v2967, %v2923
    %v2973 = vsel %vm2971, %v2968, %v2925
    %v2974 = vsel %vm2971, %v2969, %v2927
    %v2975 = vsel %vm2971, %v2970, %v2929
    %vm2976 = vcmask 916480
    %v2977 = vsel %vm2976, %v2972, %v2939
    %v2978 = vsel %vm2976, %v2973, %v2941
    %v2979 = vsel %vm2976, %v2974, %v2943
    %v2980 = vsel %vm2976, %v2975, %v2945
    %v2981 = vpack.c.bf16 %v2978, %v2977
    %v2982 = vpack.c.bf16 %v2980, %v2979
    %v2983 = vld [vmem:[%s17] sm:$0xf]
    %v2984 = vld [vmem:[%s17 + $0x4] sm:$0xf]
    %v2985 = vld [vmem:[%s17 + $0x8] sm:$0xf]
    %v2986 = vld [vmem:[%s17 + $0xc] sm:$0xf]
    %v2987 = vld [vmem:[%s17 + $0x10] sm:$0xf]
    %v2988 = vld [vmem:[%s17 + $0x14] sm:$0xf]
    %v2989 = vld [vmem:[%s17 + $0x18] sm:$0xf]
    %v2990 = vld [vmem:[%s17 + $0x1c] sm:$0xf]
    %v2991 = vld [vmem:[%s17 + $0x20] sm:$0xf]
    %v2992 = vld [vmem:[%s17 + $0x24] sm:$0xf]
    %v2993 = vld [vmem:[%s17 + $0x28] sm:$0xf]
    %v2994 = vld [vmem:[%s17 + $0x2c] sm:$0xf]
    %v2995 = vld [vmem:[%s17 + $0x30] sm:$0xf]
    %v2996 = vld [vmem:[%s17 + $0x34] sm:$0xf]
    %v2997 = vld [vmem:[%s17 + $0x38] sm:$0xf]
    %v2998 = vld [vmem:[%s17 + $0x3c] sm:$0xf]
    %v2999 = vld [vmem:[%s18] sm:$0xff]
    %vm3000 = vcmask 64512
    %v3002 = vsel %vm3000, %v1664, 0
    %v3005 = vsel %vm3000, %v1667, 0
    %v3008 = vsel %vm3000, %v1672, 0
    %v3011 = vsel %vm3000, %v1675, 0
    %3013 = vmatprep.subr.mxu0 0.0
    %3014 = vmatpush1.msra.mxu0 0.0
    %3015 = vmatprep.subr.mxu0 0.0
    %3016 = vmatpush1.msra.mxu0 0.0
    %3017 = vmatprep.subr.mxu0 0.0
    %3018 = vmatpush1.msra.mxu0 0.0
    %3019 = vmatprep.subr.mxu0 0.0
    %3020 = vmatpush1.msra.mxu0 0.0
    %3021 = vmatprep.subr.mxu0 0.0
    %3022 = vmatpush1.msra.mxu0 0.0
    %3023 = vmatprep.subr.mxu0 0.0
    %3024 = vmatpush1.msra.mxu0 0.0
    %3025 = vmatprep.subr.mxu0 0.0
    %3026 = vmatpush1.msra.mxu0 0.0
    %3027 = vmatprep.subr.mxu0 0.0
    %3028 = vmatpush1.msra.mxu0 0.0
    %3029 = vmatprep.subr.mxu0 0.0
    %3030 = vmatpush1.msra.mxu0 0.0
    %3031 = vmatprep.subr.mxu0 0.0
    %3032 = vmatpush1.msra.mxu0 0.0
    %3033 = vmatprep.subr.mxu0 0.0
    %3034 = vmatpush1.msra.mxu0 0.0
    %3035 = vmatprep.subr.mxu0 0.0
    %3036 = vmatpush1.msra.mxu0 0.0
    %3037 = vmatprep.subr.mxu0 0.0
    %3038 = vmatpush1.msra.mxu0 0.0
    %3039 = vmatprep.subr.mxu0 0.0
    %3040 = vmatpush1.msra.mxu0 0.0
    %3041 = vmatprep.subr.mxu0 0.0
    %3042 = vmatpush1.msra.mxu0 0.0
    %3043 = vmatprep.subr.mxu0 0.0
    %3044 = vmatpush1.msra.mxu0 %v2999
    %3045 = vmatprep.subr.mxu0 0.0
    %3046 = vmatpush2.msra.mxu0 0.0
    %3047 = vmatprep.subr.mxu0 0.0
    %3048 = vmatpush2.msra.mxu0 0.0
    %3049 = vmatprep.subr.mxu0 0.0
    %3050 = vmatpush2.msra.mxu0 0.0
    %3051 = vmatprep.subr.mxu0 0.0
    %3052 = vmatpush2.msra.mxu0 0.0
    %3053 = vmatprep.subr.mxu0 0.0
    %3054 = vmatpush2.msra.mxu0 0.0
    %3055 = vmatprep.subr.mxu0 0.0
    %3056 = vmatpush2.msra.mxu0 0.0
    %3057 = vmatprep.subr.mxu0 0.0
    %3058 = vmatpush2.msra.mxu0 0.0
    %3059 = vmatprep.subr.mxu0 0.0
    %3060 = vmatpush2.msra.mxu0 0.0
    %3061 = vmatprep.subr.mxu0 0.0
    %3062 = vmatpush2.msra.mxu0 0.0
    %3063 = vmatprep.subr.mxu0 0.0
    %3064 = vmatpush2.msra.mxu0 0.0
    %3065 = vmatprep.subr.mxu0 0.0
    %3066 = vmatpush2.msra.mxu0 0.0
    %3067 = vmatprep.subr.mxu0 0.0
    %3068 = vmatpush2.msra.mxu0 0.0
    %3069 = vmatprep.subr.mxu0 0.0
    %3070 = vmatpush2.msra.mxu0 0.0
    %3071 = vmatprep.subr.mxu0 0.0
    %3072 = vmatpush2.msra.mxu0 0.0
    %3073 = vmatprep.subr.mxu0 0.0
    %3074 = vmatpush2.msra.mxu0 0.0
    %3075 = vmatprep.subr.mxu0 0.0
    %3076 = vmatpush2.msra.mxu0 0.0
    %3077 = vmatprep.mubr.f32.mxu0 0.0
    %3078 = vmatmul.mubr.f32.gmra.mxu0 %v3002
    %v3079 = vpop.f32.mrf.mxu0
    %v3080 = vadd.f32 0.0, %v3079
    %v3081 = vpop.f32.mrf.mxu0
    %3082 = vmatprep.mubr.f32.mxu0 0.0
    %3083 = vmatmul.mubr.f32.gmra.mxu0 %v3005
    %v3084 = vpop.f32.mrf.mxu0
    %v3085 = vadd.f32 0.0, %v3084
    %v3086 = vpop.f32.mrf.mxu0
    %3087 = vmatprep.mubr.f32.mxu0 0.0
    %3088 = vmatmul.mubr.f32.gmra.mxu0 %v3008
    %v3089 = vpop.f32.mrf.mxu0
    %v3090 = vadd.f32 0.0, %v3089
    %v3091 = vpop.f32.mrf.mxu0
    %3092 = vmatprep.mubr.f32.mxu0 0.0
    %3093 = vmatmul.mubr.f32.gmra.mxu0 %v3011
    %v3094 = vpop.f32.mrf.mxu0
    %v3095 = vadd.f32 0.0, %v3094
    %v3096 = vpop.f32.mrf.mxu0
    %3097 = vdwg.mxu0
    %v3114 = vunpack.c.l.b16 %v2983
    %v3115 = vunpack.c.l.b16 %v2984
    %v3116 = vunpack.c.l.b16 %v2985
    %v3117 = vunpack.c.l.b16 %v2986
    %v3118 = vunpack.c.l.b16 %v2987
    %v3119 = vunpack.c.l.b16 %v2988
    %v3120 = vunpack.c.l.b16 %v2989
    %v3121 = vunpack.c.l.b16 %v2990
    %v3122 = vunpack.c.l.b16 %v2991
    %v3123 = vunpack.c.l.b16 %v2992
    %v3124 = vunpack.c.l.b16 %v2993
    %v3125 = vunpack.c.l.b16 %v2994
    %v3126 = vunpack.c.l.b16 %v2995
    %v3127 = vunpack.c.l.b16 %v2996
    %v3128 = vunpack.c.l.b16 %v2997
    %v3129 = vunpack.c.l.b16 %v2998
    %v3130 = vpack.c.b16 %v3115, %v3114
    %v3131 = vpack.c.b16 %v3117, %v3116
    %v3132 = vpack.c.b16 %v3119, %v3118
    %v3133 = vpack.c.b16 %v3121, %v3120
    %v3134 = vpack.c.b16 %v3123, %v3122
    %v3135 = vpack.c.b16 %v3125, %v3124
    %v3136 = vpack.c.b16 %v3127, %v3126
    %v3137 = vpack.c.b16 %v3129, %v3128
    %3146 = vmatprep.subr.bf16.mxu0 0
    %3147 = vmatpush1.bf16.msra.mxu0 %v3137
    %3148 = vmatprep.subr.bf16.mxu0 0
    %3149 = vmatpush1.bf16.msra.mxu0 %v3136
    %3150 = vmatprep.subr.bf16.mxu0 0
    %3151 = vmatpush1.bf16.msra.mxu0 %v3135
    %3152 = vmatprep.subr.bf16.mxu0 0
    %3153 = vmatpush1.bf16.msra.mxu0 %v3134
    %3154 = vmatprep.subr.bf16.mxu0 0
    %3155 = vmatpush1.bf16.msra.mxu0 %v3133
    %3156 = vmatprep.subr.bf16.mxu0 0
    %3157 = vmatpush1.bf16.msra.mxu0 %v3132
    %3158 = vmatprep.subr.bf16.mxu0 0
    %3159 = vmatpush1.bf16.msra.mxu0 %v3131
    %3160 = vmatprep.subr.bf16.mxu0 0
    %3161 = vmatpush1.bf16.msra.mxu0 %v3130
    %3162 = vmatprep.subr.bf16.mxu0 0
    %3163 = vmatpush2.bf16.msra.mxu0 0
    %3164 = vmatprep.subr.bf16.mxu0 0
    %3165 = vmatpush2.bf16.msra.mxu0 0
    %3166 = vmatprep.subr.bf16.mxu0 0
    %3167 = vmatpush2.bf16.msra.mxu0 0
    %3168 = vmatprep.subr.bf16.mxu0 0
    %3169 = vmatpush2.bf16.msra.mxu0 0
    %3170 = vmatprep.subr.bf16.mxu0 0
    %3171 = vmatpush2.bf16.msra.mxu0 0
    %3172 = vmatprep.subr.bf16.mxu0 0
    %3173 = vmatpush2.bf16.msra.mxu0 0
    %3174 = vmatprep.subr.bf16.mxu0 0
    %3175 = vmatpush2.bf16.msra.mxu0 0
    %3176 = vmatprep.subr.bf16.mxu0 0
    %3177 = vmatpush2.bf16.msra.mxu0 0
    %3178 = vmatprep.mubr.bf16.mxu0 0
    %3179 = vmatmul.mubr.bf16.gmra.mxu0 %v2981
    %v3180 = vpop.f32.mrf.mxu0
    %v3181 = vadd.f32 %v3080, %v3180
    %v3182 = vpop.f32.mrf.mxu0
    %v3183 = vpop.f32.mrf.mxu0
    %v3184 = vadd.f32 %v3085, %v3183
    %v3185 = vpop.f32.mrf.mxu0
    %3186 = vmatprep.mubr.bf16.mxu0 0
    %3187 = vmatmul.mubr.bf16.gmra.mxu0 %v2982
    %v3188 = vpop.f32.mrf.mxu0
    %v3189 = vadd.f32 %v3090, %v3188
    %v3190 = vpop.f32.mrf.mxu0
    %v3191 = vpop.f32.mrf.mxu0
    %v3192 = vadd.f32 %v3095, %v3191
    %v3193 = vpop.f32.mrf.mxu0
    %3194 = vdwg.mxu0
    %v3195 = vpack.c.bf16 %v3184, %v3181
    %v3196 = vpack.c.bf16 %v3192, %v3189
    %3197 = vmatprep.subr.bf16.mxu0 0
    %3198 = vmatpush1.bf16.msra.mxu0 0
    %3199 = vmatprep.subr.bf16.mxu0 0
    %3200 = vmatpush1.bf16.msra.mxu0 0
    %3201 = vmatprep.subr.bf16.mxu0 0
    %3202 = vmatpush1.bf16.msra.mxu0 0
    %3203 = vmatprep.subr.bf16.mxu0 0
    %3204 = vmatpush1.bf16.msra.mxu0 0
    %3205 = vmatprep.subr.bf16.mxu0 0
    %3206 = vmatpush1.bf16.msra.mxu0 0
    %3207 = vmatprep.subr.bf16.mxu0 0
    %3208 = vmatpush1.bf16.msra.mxu0 0
    %3209 = vmatprep.subr.bf16.mxu0 0
    %3210 = vmatpush1.bf16.msra.mxu0 %v3196
    %3211 = vmatprep.subr.bf16.mxu0 0
    %3212 = vmatpush1.bf16.msra.mxu0 %v3195
    %3213 = vmatprep.subr.bf16.mxu0 0
    %3214 = vmatpush2.bf16.msra.mxu0 0
    %3215 = vmatprep.subr.bf16.mxu0 0
    %3216 = vmatpush2.bf16.msra.mxu0 0
    %3217 = vmatprep.subr.bf16.mxu0 0
    %3218 = vmatpush2.bf16.msra.mxu0 0
    %3219 = vmatprep.subr.bf16.mxu0 0
    %3220 = vmatpush2.bf16.msra.mxu0 0
    %3221 = vmatprep.subr.bf16.mxu0 0
    %3222 = vmatpush2.bf16.msra.mxu0 0
    %3223 = vmatprep.subr.bf16.mxu0 0
    %3224 = vmatpush2.bf16.msra.mxu0 0
    %3225 = vmatprep.subr.bf16.mxu0 0
    %3226 = vmatpush2.bf16.msra.mxu0 0
    %3227 = vmatprep.subr.bf16.mxu0 0
    %3228 = vmatpush2.bf16.msra.mxu0 0
    %3229 = vmatprep.mubr.bf16.mxu0 0
    %3230 = vmatmul.mubr.bf16.gmra.mxu0 %v1429
    %v3231 = vpop.f32.mrf.mxu0
    %v3232 = vadd.f32 0.0, %v3231
    %v3233 = vpop.f32.mrf.mxu0
    %v3234 = vpop.f32.mrf.mxu0
    %v3235 = vadd.f32 0.0, %v3234
    %v3236 = vpop.f32.mrf.mxu0
    %3237 = vdwg.mxu0
    %v3238 = vmul.f32 %v3232, %v1475
    %v3239 = vmul.f32 %v3235, %v1480
    %v3240 = vld [vmem:[%s19] sm:$0xf]
    %v3242 = vsel %vm3000, %v1628, 0
    %v3245 = vsel %vm1257, %v3240, 0
    %3247 = vmatprep.subr.bf16.mxu0 0
    %3248 = vmatpush1.bf16.msra.mxu0 0
    %3249 = vmatprep.subr.bf16.mxu0 0
    %3250 = vmatpush1.bf16.msra.mxu0 0
    %3251 = vmatprep.subr.bf16.mxu0 0
    %3252 = vmatpush1.bf16.msra.mxu0 0
    %3253 = vmatprep.subr.bf16.mxu0 0
    %3254 = vmatpush1.bf16.msra.mxu0 0
    %3255 = vmatprep.subr.bf16.mxu0 0
    %3256 = vmatpush1.bf16.msra.mxu0 0
    %3257 = vmatprep.subr.bf16.mxu0 0
    %3258 = vmatpush1.bf16.msra.mxu0 0
    %3259 = vmatprep.subr.bf16.mxu0 0
    %3260 = vmatpush1.bf16.msra.mxu0 0
    %3261 = vmatprep.subr.bf16.mxu0 0
    %3262 = vmatpush1.bf16.msra.mxu0 %v3245
    %3263 = vmatprep.subr.bf16.mxu0 0
    %3264 = vmatpush2.bf16.msra.mxu0 0
    %3265 = vmatprep.subr.bf16.mxu0 0
    %3266 = vmatpush2.bf16.msra.mxu0 0
    %3267 = vmatprep.subr.bf16.mxu0 0
    %3268 = vmatpush2.bf16.msra.mxu0 0
    %3269 = vmatprep.subr.bf16.mxu0 0
    %3270 = vmatpush2.bf16.msra.mxu0 0
    %3271 = vmatprep.subr.bf16.mxu0 0
    %3272 = vmatpush2.bf16.msra.mxu0 0
    %3273 = vmatprep.subr.bf16.mxu0 0
    %3274 = vmatpush2.bf16.msra.mxu0 0
    %3275 = vmatprep.subr.bf16.mxu0 0
    %3276 = vmatpush2.bf16.msra.mxu0 0
    %3277 = vmatprep.subr.bf16.mxu0 0
    %3278 = vmatpush2.bf16.msra.mxu0 0
    %3279 = vmatprep.mubr.bf16.mxu0 0
    %3280 = vmatmul.mubr.bf16.gmra.mxu0 %v3242
    %v3281 = vpop.f32.mrf.mxu0
    %v3282 = vadd.f32 0.0, %v3281
    %v3283 = vpop.f32.mrf.mxu0
    %v3284 = vpop.f32.mrf.mxu0
    %v3285 = vadd.f32 0.0, %v3284
    %v3286 = vpop.f32.mrf.mxu0
    %3287 = vdwg.mxu0
    %v3288 = vadd.f32 %v3238, %v3282
    %v3289 = vadd.f32 %v3239, %v3285
    %v3290 = vld [vmem:[%s20] sm:$0x1]
    %v3292 = vlaneseq
    %v3293 = vshrl.u32 %v3292, 7
    %v3294 = vsub.s32 0, %v3293
    %v3295 = vrot.slane %v3290, %v3294
    %v3297 = vadd.f32 %v3288, %v3295
    %v3298 = vadd.f32 %v3289, %v3295
    %v3299 = vld [vmem:[%s21] sm:$0x1]
    %v3301 = vlaneseq
    %v3302 = vshrl.u32 %v3301, 7
    %v3303 = vsub.s32 0, %v3302
    %v3304 = vrot.slane %v3299, %v3303
    %v3306 = vmul.f32 %v3297, %v3304
    %v3307 = vmul.f32 %v3298, %v3304
    %v3308 = vld [vmem:[%s22] sm:$0x1]
    %v3310 = vlaneseq
    %v3311 = vshrl.u32 %v3310, 7
    %v3312 = vsub.s32 0, %v3311
    %v3313 = vrot.slane %v3308, %v3312
    %v3315 = vadd.f32 %v3306, %v3313
    %v3316 = vadd.f32 %v3307, %v3313
    %v3317 = vmax.f32 %v3315, 0.0
    %v3318 = vmax.f32 %v3316, 0.0
    %v3319 = vpack.c.bf16 %v3318, %v3317
    %v3321 = vsel %vm227, %v139, 0
    %3323 = vmatprep.subr.bf16.mxu0 0
    %3324 = vmatpush1.bf16.msra.mxu0 0
    %3325 = vmatprep.subr.bf16.mxu0 0
    %3326 = vmatpush1.bf16.msra.mxu0 0
    %3327 = vmatprep.subr.bf16.mxu0 0
    %3328 = vmatpush1.bf16.msra.mxu0 0
    %3329 = vmatprep.subr.bf16.mxu0 0
    %3330 = vmatpush1.bf16.msra.mxu0 0
    %3331 = vmatprep.subr.bf16.mxu0 0
    %3332 = vmatpush1.bf16.msra.mxu0 0
    %3333 = vmatprep.subr.bf16.mxu0 0
    %3334 = vmatpush1.bf16.msra.mxu0 0
    %3335 = vmatprep.subr.bf16.mxu0 0
    %3336 = vmatpush1.bf16.msra.mxu0 0
    %3337 = vmatprep.subr.bf16.mxu0 0
    %3338 = vmatpush1.bf16.msra.mxu0 %v3319
    %3339 = vmatprep.subr.bf16.mxu0 0
    %3340 = vmatpush2.bf16.msra.mxu0 0
    %3341 = vmatprep.subr.bf16.mxu0 0
    %3342 = vmatpush2.bf16.msra.mxu0 0
    %3343 = vmatprep.subr.bf16.mxu0 0
    %3344 = vmatpush2.bf16.msra.mxu0 0
    %3345 = vmatprep.subr.bf16.mxu0 0
    %3346 = vmatpush2.bf16.msra.mxu0 0
    %3347 = vmatprep.subr.bf16.mxu0 0
    %3348 = vmatpush2.bf16.msra.mxu0 0
    %3349 = vmatprep.subr.bf16.mxu0 0
    %3350 = vmatpush2.bf16.msra.mxu0 0
    %3351 = vmatprep.subr.bf16.mxu0 0
    %3352 = vmatpush2.bf16.msra.mxu0 0
    %3353 = vmatprep.subr.bf16.mxu0 0
    %3354 = vmatpush2.bf16.msra.mxu0 0
    %3355 = vmatprep.mubr.bf16.mxu0 0
    %3356 = vmatmul.mubr.bf16.gmra.mxu0 %v3321
    %v3357 = vpop.f32.mrf.mxu0
    %v3358 = vadd.f32 0.0, %v3357
    %v3359 = vpop.f32.mrf.mxu0
    %v3360 = vpop.f32.mrf.mxu0
    %v3361 = vpop.f32.mrf.mxu0
    %3362 = vdwg.mxu0
    %3364 = vset.pattern.permute.xlu0 0
    %3365 = vperm.xlu0 %3364, %v145
    %v3366 = vpop.permute.xlu0 %3365
    %v3368 = vmul.f32 %v3358, %v3366
    %vm3369 = vcmask 58368
    %3370 = vst.msk [vmem:[#allocation4] sm:$0x3] %vm3369, %v3368
    %v3371 = vpack.c.bf16 %v3368, %v3368
    %v3372 = vld [vmem:[%s23] sm:$0xf]
    %v3373 = vld [vmem:[%s24] sm:$0x1]
    %v3375 = vlaneseq
    %v3376 = vshrl.u32 %v3375, 7
    %v3377 = vsub.s32 0, %v3376
    %v3378 = vrot.slane %v3373, %v3377
    %v3381 = vsel %vm3000, %v3371, 0
    %v3384 = vsel %vm1257, %v3372, 0
    %3386 = vmatprep.subr.bf16.mxu0 0
    %3387 = vmatpush1.bf16.msra.mxu0 0
    %3388 = vmatprep.subr.bf16.mxu0 0
    %3389 = vmatpush1.bf16.msra.mxu0 0
    %3390 = vmatprep.subr.bf16.mxu0 0
    %3391 = vmatpush1.bf16.msra.mxu0 0
    %3392 = vmatprep.subr.bf16.mxu0 0
    %3393 = vmatpush1.bf16.msra.mxu0 0
    %3394 = vmatprep.subr.bf16.mxu0 0
    %3395 = vmatpush1.bf16.msra.mxu0 0
    %3396 = vmatprep.subr.bf16.mxu0 0
    %3397 = vmatpush1.bf16.msra.mxu0 0
    %3398 = vmatprep.subr.bf16.mxu0 0
    %3399 = vmatpush1.bf16.msra.mxu0 0
    %3400 = vmatprep.subr.bf16.mxu0 0
    %3401 = vmatpush1.bf16.msra.mxu0 %v3384
    %3402 = vmatprep.subr.bf16.mxu0 0
    %3403 = vmatpush2.bf16.msra.mxu0 0
    %3404 = vmatprep.subr.bf16.mxu0 0
    %3405 = vmatpush2.bf16.msra.mxu0 0
    %3406 = vmatprep.subr.bf16.mxu0 0
    %3407 = vmatpush2.bf16.msra.mxu0 0
    %3408 = vmatprep.subr.bf16.mxu0 0
    %3409 = vmatpush2.bf16.msra.mxu0 0
    %3410 = vmatprep.subr.bf16.mxu0 0
    %3411 = vmatpush2.bf16.msra.mxu0 0
    %3412 = vmatprep.subr.bf16.mxu0 0
    %3413 = vmatpush2.bf16.msra.mxu0 0
    %3414 = vmatprep.subr.bf16.mxu0 0
    %3415 = vmatpush2.bf16.msra.mxu0 0
    %3416 = vmatprep.subr.bf16.mxu0 0
    %3417 = vmatpush2.bf16.msra.mxu0 0
    %3418 = vmatprep.mubr.bf16.mxu0 0
    %3419 = vmatmul.mubr.bf16.gmra.mxu0 %v3381
    %v3420 = vpop.f32.mrf.mxu0
    %v3421 = vadd.f32 %v3378, %v3420
    %v3422 = vpop.f32.mrf.mxu0
    %v3423 = vpop.f32.mrf.mxu0
    %v3424 = vpop.f32.mrf.mxu0
    %3425 = vdwg.mxu0
    %v3426 = vmax.f32 %v3421, 0.0
    %v3427 = vpack.c.bf16 %v3426, %v3426
    %v3428 = vld [vmem:[%s25] sm:$0xf]
    %v3429 = vld [vmem:[%s25 + $0x4] sm:$0xf]
    %v3430 = vld [vmem:[%s26] sm:$0x1]
    %v3432 = vlaneseq
    %v3433 = vshrl.u32 %v3432, 7
    %v3434 = vsub.s32 0, %v3433
    %v3435 = vrot.slane %v3430, %v3434
    %v3439 = vunpack.c.l.b16 %v3428
    %v3440 = vunpack.c.l.b16 %v3429
    %v3441 = vpack.c.b16 %v3440, %v3439
    %v3444 = vsel %vm227, %v3427, 0
    %3446 = vmatprep.subr.bf16.mxu0 0
    %3447 = vmatpush1.bf16.msra.mxu0 0
    %3448 = vmatprep.subr.bf16.mxu0 0
    %3449 = vmatpush1.bf16.msra.mxu0 0
    %3450 = vmatprep.subr.bf16.mxu0 0
    %3451 = vmatpush1.bf16.msra.mxu0 0
    %3452 = vmatprep.subr.bf16.mxu0 0
    %3453 = vmatpush1.bf16.msra.mxu0 0
    %3454 = vmatprep.subr.bf16.mxu0 0
    %3455 = vmatpush1.bf16.msra.mxu0 0
    %3456 = vmatprep.subr.bf16.mxu0 0
    %3457 = vmatpush1.bf16.msra.mxu0 0
    %3458 = vmatprep.subr.bf16.mxu0 0
    %3459 = vmatpush1.bf16.msra.mxu0 0
    %3460 = vmatprep.subr.bf16.mxu0 0
    %3461 = vmatpush1.bf16.msra.mxu0 %v3441
    %3462 = vmatprep.subr.bf16.mxu0 0
    %3463 = vmatpush2.bf16.msra.mxu0 0
    %3464 = vmatprep.subr.bf16.mxu0 0
    %3465 = vmatpush2.bf16.msra.mxu0 0
    %3466 = vmatprep.subr.bf16.mxu0 0
    %3467 = vmatpush2.bf16.msra.mxu0 0
    %3468 = vmatprep.subr.bf16.mxu0 0
    %3469 = vmatpush2.bf16.msra.mxu0 0
    %3470 = vmatprep.subr.bf16.mxu0 0
    %3471 = vmatpush2.bf16.msra.mxu0 0
    %3472 = vmatprep.subr.bf16.mxu0 0
    %3473 = vmatpush2.bf16.msra.mxu0 0
    %3474 = vmatprep.subr.bf16.mxu0 0
    %3475 = vmatpush2.bf16.msra.mxu0 0
    %3476 = vmatprep.subr.bf16.mxu0 0
    %3477 = vmatpush2.bf16.msra.mxu0 0
    %3478 = vmatprep.mubr.bf16.mxu0 0
    %3479 = vmatmul.mubr.bf16.gmra.mxu0 %v3444
    %v3480 = vpop.f32.mrf.mxu0
    %v3481 = vadd.f32 %v3435, %v3480
    %v3482 = vpop.f32.mrf.mxu0
    %v3483 = vpop.f32.mrf.mxu0
    %v3484 = vpop.f32.mrf.mxu0
    %3485 = vdwg.mxu0
    %vm3486 = vcmask 17408
    %3487 = vst.msk [vmem:[#allocation2] sm:$0x3] %vm3486, %v3481
    // Predicated region
    $region110: #{nnconvnet_forward.1} parent=1 // pred_check
      _
    $region111: #{nnconvnet_forward.1} parent=1 // pred_check_branch
      %3489 = sbr.rel (0) target = $region113
    $region112: #{nnconvnet_forward.1} parent=1 // pred_region
      %s3491 = ssub.s32 32, 32
      %3492 = vsyncadd [#allocation3], %s3491
      %s3494 = sshll.u32 [#allocation2], 4
      %s3495 = int_to_ptr.vmem [resolvable:$true] %s3494
      %3497 = dma.vmem_to_hbm [thread:$0]  %s3495, 32, %s27, [#allocation3]
    $region113: #{nnconvnet_forward.1} parent=1 // pred_fallthru
      _
    // Predicated region
    $region114: #{nnconvnet_forward.1} parent=1 // pred_check
      _
    $region115: #{nnconvnet_forward.1} parent=1 // pred_check_branch
      %3499 = sbr.rel (0) target = $region117
    $region116: #{nnconvnet_forward.1} parent=1 // pred_region
      %s3501 = ssub.s32 32, 32
      %3502 = vsyncadd [#allocation5], %s3501
      %s3504 = sshll.u32 [#allocation4], 4
      %s3505 = int_to_ptr.vmem [resolvable:$true] %s3504
      %3507 = dma.vmem_to_hbm [thread:$0]  %s3505, 32, %s28, [#allocation5]
    $region117: #{nnconvnet_forward.1} parent=1 // pred_fallthru
      _
    // Predicated region
    $region118: #{nnconvnet_forward.1} parent=1 // pred_check
      _
    $region119: #{nnconvnet_forward.1} parent=1 // pred_check_branch
      %3509 = sbr.rel (0) target = $region121
    $region120: #{nnconvnet_forward.1} parent=1 // pred_region
      %3510 = dma.done [#allocation3], 32
    $region121: #{nnconvnet_forward.1} parent=1 // pred_fallthru
      _
    // Predicated region
    $region122: #{nnconvnet_forward.1} parent=1 // pred_check
      _
    $region123: #{nnconvnet_forward.1} parent=1 // pred_check_branch
      %3512 = sbr.rel (0) target = $region125
    $region124: #{nnconvnet_forward.1} parent=1 // pred_region
      %3513 = dma.done [#allocation5], 32
    $region125: #{nnconvnet_forward.1} parent=1 // pred_fallthru
      _
    %3514 = vsyncpa [#allocation3], 1
    %3515 = vsyncpa [#allocation5], 1

</llo_original>
